<compile_context>
chip_gen: v6e
topology: v6e:2x2x1
jax: 0.10.0
libtpu: 0.0.40
codegen_flags: <defaults>
</compile_context>

<pallas_src>
import functools

import jax
import jax.numpy as jnp
from jax.experimental import pallas as pl
from jax.experimental.pallas import tpu as pltpu

# Layer widths from the PyTorch module, and their lane-dense padded counterparts.
LAYER_DIMS = [3, 1024, 512, 512, 256, 256, 128, 128, 64, 64, 202]
PADDED_DIMS = [3, 1024, 512, 512, 256, 256, 128, 128, 128, 128, 256]
NUM_LAYERS = len(LAYER_DIMS) - 1  # 10

MAX_BATCH_TILE = 512  # rows per grid step; safe for v5e/v6e/v7x VMEM budgets


def _round_up(x, m):
    return ((x + m - 1) // m) * m


def _mlp_kernel(x_ref, *refs):
    """Fused 10-layer MLP forward on one batch tile.

    Args:
      x_ref: (TB, 3) fp32 input tile in VMEM.
      refs:  w1, b1, ..., w10, b10, o_ref
             wi: (in_p, out_p) bf16 (padded, VMEM-resident across grid steps),
             bi: (1, out_p) fp32,
             o_ref: (TB, 256) fp32 output tile.
    """
    o_ref = refs[-1]
    param_refs = refs[:-1]

    h = x_ref[...]  # fp32 activations
    for i in range(NUM_LAYERS):
        w = param_refs[2 * i][...]       # bf16 weights
        b = param_refs[2 * i + 1][...]   # fp32 bias (1, out_p)
        # bf16 MXU inputs, fp32 accumulate; bias add / ReLU stay fp32 on the VPU.
        h = jnp.dot(h.astype(jnp.bfloat16), w,
                    preferred_element_type=jnp.float32) + b
        if i < NUM_LAYERS - 1:  # ReLU after every layer except fc10
            h = jnp.maximum(h, 0.0)
    o_ref[...] = h.astype(o_ref.dtype)


@functools.partial(jax.jit, static_argnames=("block_b",))
def deep_custom_nn_forward(x, params, *, block_b=MAX_BATCH_TILE):
    """x: (B, 3) fp32.  params: flat list [W1, b1, ..., W10, b10] (Wi bf16, bi fp32, padded)."""
    batch = x.shape[0]
    out_padded = PADDED_DIMS[-1]

    # Batch tile: whole (rounded-up) batch if small, else MAX_BATCH_TILE rows per step.
    tb = min(block_b, _round_up(batch, 8))
    batch_padded = _round_up(batch, tb)
    if batch_padded != batch:
        x = jnp.pad(x, ((0, batch_padded - batch), (0, 0)))
    grid = (batch_padded // tb,)

    in_specs = [pl.BlockSpec((tb, x.shape[1]), lambda i: (i, 0))]
    for p in params:
        # Full-shape block, constant index -> fetched once, resident across grid steps.
        in_specs.append(pl.BlockSpec(p.shape, lambda i: (0, 0)))
    out_specs = pl.BlockSpec((tb, out_padded), lambda i: (i, 0))

    flops = 2 * batch_padded * sum(
        PADDED_DIMS[i] * PADDED_DIMS[i + 1] for i in range(NUM_LAYERS))
    weight_bytes = sum(int(p.size) * p.dtype.itemsize for p in params)
    bytes_accessed = weight_bytes + batch_padded * (x.shape[1] + out_padded) * 4

    out = pl.pallas_call(
        _mlp_kernel,
        out_shape=jax.ShapeDtypeStruct((batch_padded, out_padded), jnp.float32),
        grid=grid,
        in_specs=in_specs,
        out_specs=out_specs,
        compiler_params=pltpu.CompilerParams(dimension_semantics=("parallel",)),
        cost_estimate=pl.CostEstimate(
            flops=int(flops), transcendentals=0, bytes_accessed=int(bytes_accessed)),
    )(x, *params)

    # Strip batch padding and the lane padding of the final 202-wide layer.
    return out[:batch, :LAYER_DIMS[-1]]


def init_params(key):
    """PyTorch nn.Linear-style init (uniform +-1/sqrt(fan_in)), then lane-pad + bf16 cast.

    Returns flat list [W1, b1, ..., W10, b10] with Wi (in_p, out_p) bf16 and
    bi (1, out_p) fp32.  Padding entries are exact zeros, so the padded network
    computes the same function as the unpadded one on the original 202 outputs.
    """
    params = []
    for i in range(NUM_LAYERS):
        fan_in, fan_out = LAYER_DIMS[i], LAYER_DIMS[i + 1]
        in_p, out_p = PADDED_DIMS[i], PADDED_DIMS[i + 1]
        key, kw, kb = jax.random.split(key, 3)
        bound = 1.0 / jnp.sqrt(jnp.float32(fan_in))
        w = jax.random.uniform(kw, (fan_in, fan_out), jnp.float32, -bound, bound)
        b = jax.random.uniform(kb, (1, fan_out), jnp.float32, -bound, bound)
        w = jnp.pad(w, ((0, in_p - fan_in), (0, out_p - fan_out)))
        b = jnp.pad(b, ((0, 0), (0, out_p - fan_out)))
        params.extend([w.astype(jnp.bfloat16), b])
    return params


def reference_forward(x, params):
    """Pure-JAX reference using the same bf16-weight / fp32-accumulate math."""
    h = x
    for i in range(NUM_LAYERS):
        w, b = params[2 * i], params[2 * i + 1]
        h = jnp.dot(h.astype(jnp.bfloat16), w,
                    preferred_element_type=jnp.float32) + b
        if i < NUM_LAYERS - 1:
            h = jnp.maximum(h, 0.0)
    return h[:, :LAYER_DIMS[-1]]


if __name__ == "__main__":
    key = jax.random.PRNGKey(0)
    kx, kp = jax.random.split(key)

    batch = 8  # small serving-style batch; wrapper handles arbitrary B via the grid
    x = jax.random.normal(kx, (batch, 3), dtype=jnp.float32)
    params = init_params(kp)

    out = deep_custom_nn_forward(x, params)
    out = jax.block_until_ready(out)

    ref = reference_forward(x, params)
    assert out.shape == (batch, LAYER_DIMS[-1]), out.shape
    assert jnp.allclose(out, ref, atol=1e-3, rtol=1e-3), "mismatch vs reference"

    print("KERNEL_OK")
</pallas_src>

<mosaic_0001>
module attributes {stable_mosaic.version = 11 : i64} {
  func.func @_mlp_kernel(%arg0: i32, %arg1: memref<8x3xf32, #tpu.memory_space<vmem>>, %arg2: memref<3x1024xbf16, #tpu.memory_space<vmem>>, %arg3: memref<1x1024xf32, #tpu.memory_space<vmem>>, %arg4: memref<1024x512xbf16, #tpu.memory_space<vmem>>, %arg5: memref<1x512xf32, #tpu.memory_space<vmem>>, %arg6: memref<512x512xbf16, #tpu.memory_space<vmem>>, %arg7: memref<1x512xf32, #tpu.memory_space<vmem>>, %arg8: memref<512x256xbf16, #tpu.memory_space<vmem>>, %arg9: memref<1x256xf32, #tpu.memory_space<vmem>>, %arg10: memref<256x256xbf16, #tpu.memory_space<vmem>>, %arg11: memref<1x256xf32, #tpu.memory_space<vmem>>, %arg12: memref<256x128xbf16, #tpu.memory_space<vmem>>, %arg13: memref<1x128xf32, #tpu.memory_space<vmem>>, %arg14: memref<128x128xbf16, #tpu.memory_space<vmem>>, %arg15: memref<1x128xf32, #tpu.memory_space<vmem>>, %arg16: memref<128x128xbf16, #tpu.memory_space<vmem>>, %arg17: memref<1x128xf32, #tpu.memory_space<vmem>>, %arg18: memref<128x128xbf16, #tpu.memory_space<vmem>>, %arg19: memref<1x128xf32, #tpu.memory_space<vmem>>, %arg20: memref<128x256xbf16, #tpu.memory_space<vmem>>, %arg21: memref<1x256xf32, #tpu.memory_space<vmem>>, %arg22: memref<8x256xf32, #tpu.memory_space<vmem>>) attributes {dimension_semantics = [#tpu.dimension_semantics<parallel>], iteration_bounds = array<i64: 1>, scalar_prefetch = 0 : i64, scratch_operands = 0 : i64, tpu.core_type = #tpu.core_type<tc>, window_params = [{transform_indices = @transform_0, window_bounds = array<i64: 8, 3>}, {pipeline_mode = #tpu.pipeline_mode<synchronous>, transform_indices = @transform_1, window_bounds = array<i64: 3, 1024>}, {pipeline_mode = #tpu.pipeline_mode<synchronous>, transform_indices = @transform_2, window_bounds = array<i64: 1, 1024>}, {pipeline_mode = #tpu.pipeline_mode<synchronous>, transform_indices = @transform_3, window_bounds = array<i64: 1024, 512>}, {pipeline_mode = #tpu.pipeline_mode<synchronous>, transform_indices = @transform_4, window_bounds = array<i64: 1, 512>}, {pipeline_mode = #tpu.pipeline_mode<synchronous>, transform_indices = @transform_5, window_bounds = array<i64: 512, 512>}, {pipeline_mode = #tpu.pipeline_mode<synchronous>, transform_indices = @transform_6, window_bounds = array<i64: 1, 512>}, {pipeline_mode = #tpu.pipeline_mode<synchronous>, transform_indices = @transform_7, window_bounds = array<i64: 512, 256>}, {pipeline_mode = #tpu.pipeline_mode<synchronous>, transform_indices = @transform_8, window_bounds = array<i64: 1, 256>}, {pipeline_mode = #tpu.pipeline_mode<synchronous>, transform_indices = @transform_9, window_bounds = array<i64: 256, 256>}, {pipeline_mode = #tpu.pipeline_mode<synchronous>, transform_indices = @transform_10, window_bounds = array<i64: 1, 256>}, {pipeline_mode = #tpu.pipeline_mode<synchronous>, transform_indices = @transform_11, window_bounds = array<i64: 256, 128>}, {pipeline_mode = #tpu.pipeline_mode<synchronous>, transform_indices = @transform_12, window_bounds = array<i64: 1, 128>}, {pipeline_mode = #tpu.pipeline_mode<synchronous>, transform_indices = @transform_13, window_bounds = array<i64: 128, 128>}, {pipeline_mode = #tpu.pipeline_mode<synchronous>, transform_indices = @transform_14, window_bounds = array<i64: 1, 128>}, {pipeline_mode = #tpu.pipeline_mode<synchronous>, transform_indices = @transform_15, window_bounds = array<i64: 128, 128>}, {pipeline_mode = #tpu.pipeline_mode<synchronous>, transform_indices = @transform_16, window_bounds = array<i64: 1, 128>}, {pipeline_mode = #tpu.pipeline_mode<synchronous>, transform_indices = @transform_17, window_bounds = array<i64: 128, 128>}, {pipeline_mode = #tpu.pipeline_mode<synchronous>, transform_indices = @transform_18, window_bounds = array<i64: 1, 128>}, {pipeline_mode = #tpu.pipeline_mode<synchronous>, transform_indices = @transform_19, window_bounds = array<i64: 128, 256>}, {pipeline_mode = #tpu.pipeline_mode<synchronous>, transform_indices = @transform_20, window_bounds = array<i64: 1, 256>}, {transform_indices = @transform_21, window_bounds = array<i64: 8, 256>}]} {
    %c0 = arith.constant 0 : index
    %c0_0 = arith.constant 0 : index
    %0 = vector.load %arg1[%c0, %c0_0] : memref<8x3xf32, #tpu.memory_space<vmem>>, vector<8x3xf32>
    %c0_1 = arith.constant 0 : index
    %c0_2 = arith.constant 0 : index
    %1 = vector.load %arg2[%c0_1, %c0_2] : memref<3x1024xbf16, #tpu.memory_space<vmem>>, vector<3x1024xbf16>
    %c0_3 = arith.constant 0 : index
    %c0_4 = arith.constant 0 : index
    %2 = vector.load %arg3[%c0_3, %c0_4] : memref<1x1024xf32, #tpu.memory_space<vmem>>, vector<1x1024xf32>
    %3 = arith.truncf %0 : vector<8x3xf32> to vector<8x3xbf16>
    %cst = arith.constant dense<0.000000e+00> : vector<8x1024xf32>
    %4 = tpu.matmul %3, %1, %cst {dimension_numbers = #tpu.dot_dimension_numbers<[1], [0], [0], [1], [0, 0, 1, 1], [], []>} : vector<8x3xbf16>, vector<3x1024xbf16>, vector<8x1024xf32> -> vector<8x1024xf32>
    %5 = vector.broadcast %2 : vector<1x1024xf32> to vector<8x1024xf32>
    %6 = arith.addf %4, %5 : vector<8x1024xf32>
    %cst_5 = arith.constant 0.000000e+00 : f32
    %7 = vector.broadcast %cst_5 : f32 to vector<8x1024xf32>
    %8 = arith.maximumf %6, %7 : vector<8x1024xf32>
    %c0_6 = arith.constant 0 : index
    %c0_7 = arith.constant 0 : index
    %9 = vector.load %arg4[%c0_6, %c0_7] : memref<1024x512xbf16, #tpu.memory_space<vmem>>, vector<1024x512xbf16>
    %c0_8 = arith.constant 0 : index
    %c0_9 = arith.constant 0 : index
    %10 = vector.load %arg5[%c0_8, %c0_9] : memref<1x512xf32, #tpu.memory_space<vmem>>, vector<1x512xf32>
    %11 = arith.truncf %8 : vector<8x1024xf32> to vector<8x1024xbf16>
    %cst_10 = arith.constant dense<0.000000e+00> : vector<8x512xf32>
    %12 = tpu.matmul %11, %9, %cst_10 {dimension_numbers = #tpu.dot_dimension_numbers<[1], [0], [0], [1], [0, 0, 1, 1], [], []>} : vector<8x1024xbf16>, vector<1024x512xbf16>, vector<8x512xf32> -> vector<8x512xf32>
    %13 = vector.broadcast %10 : vector<1x512xf32> to vector<8x512xf32>
    %14 = arith.addf %12, %13 : vector<8x512xf32>
    %cst_11 = arith.constant 0.000000e+00 : f32
    %15 = vector.broadcast %cst_11 : f32 to vector<8x512xf32>
    %16 = arith.maximumf %14, %15 : vector<8x512xf32>
    %c0_12 = arith.constant 0 : index
    %c0_13 = arith.constant 0 : index
    %17 = vector.load %arg6[%c0_12, %c0_13] : memref<512x512xbf16, #tpu.memory_space<vmem>>, vector<512x512xbf16>
    %c0_14 = arith.constant 0 : index
    %c0_15 = arith.constant 0 : index
    %18 = vector.load %arg7[%c0_14, %c0_15] : memref<1x512xf32, #tpu.memory_space<vmem>>, vector<1x512xf32>
    %19 = arith.truncf %16 : vector<8x512xf32> to vector<8x512xbf16>
    %cst_16 = arith.constant dense<0.000000e+00> : vector<8x512xf32>
    %20 = tpu.matmul %19, %17, %cst_16 {dimension_numbers = #tpu.dot_dimension_numbers<[1], [0], [0], [1], [0, 0, 1, 1], [], []>} : vector<8x512xbf16>, vector<512x512xbf16>, vector<8x512xf32> -> vector<8x512xf32>
    %21 = vector.broadcast %18 : vector<1x512xf32> to vector<8x512xf32>
    %22 = arith.addf %20, %21 : vector<8x512xf32>
    %cst_17 = arith.constant 0.000000e+00 : f32
    %23 = vector.broadcast %cst_17 : f32 to vector<8x512xf32>
    %24 = arith.maximumf %22, %23 : vector<8x512xf32>
    %c0_18 = arith.constant 0 : index
    %c0_19 = arith.constant 0 : index
    %25 = vector.load %arg8[%c0_18, %c0_19] : memref<512x256xbf16, #tpu.memory_space<vmem>>, vector<512x256xbf16>
    %c0_20 = arith.constant 0 : index
    %c0_21 = arith.constant 0 : index
    %26 = vector.load %arg9[%c0_20, %c0_21] : memref<1x256xf32, #tpu.memory_space<vmem>>, vector<1x256xf32>
    %27 = arith.truncf %24 : vector<8x512xf32> to vector<8x512xbf16>
    %cst_22 = arith.constant dense<0.000000e+00> : vector<8x256xf32>
    %28 = tpu.matmul %27, %25, %cst_22 {dimension_numbers = #tpu.dot_dimension_numbers<[1], [0], [0], [1], [0, 0, 1, 1], [], []>} : vector<8x512xbf16>, vector<512x256xbf16>, vector<8x256xf32> -> vector<8x256xf32>
    %29 = vector.broadcast %26 : vector<1x256xf32> to vector<8x256xf32>
    %30 = arith.addf %28, %29 : vector<8x256xf32>
    %cst_23 = arith.constant 0.000000e+00 : f32
    %31 = vector.broadcast %cst_23 : f32 to vector<8x256xf32>
    %32 = arith.maximumf %30, %31 : vector<8x256xf32>
    %c0_24 = arith.constant 0 : index
    %c0_25 = arith.constant 0 : index
    %33 = vector.load %arg10[%c0_24, %c0_25] : memref<256x256xbf16, #tpu.memory_space<vmem>>, vector<256x256xbf16>
    %c0_26 = arith.constant 0 : index
    %c0_27 = arith.constant 0 : index
    %34 = vector.load %arg11[%c0_26, %c0_27] : memref<1x256xf32, #tpu.memory_space<vmem>>, vector<1x256xf32>
    %35 = arith.truncf %32 : vector<8x256xf32> to vector<8x256xbf16>
    %cst_28 = arith.constant dense<0.000000e+00> : vector<8x256xf32>
    %36 = tpu.matmul %35, %33, %cst_28 {dimension_numbers = #tpu.dot_dimension_numbers<[1], [0], [0], [1], [0, 0, 1, 1], [], []>} : vector<8x256xbf16>, vector<256x256xbf16>, vector<8x256xf32> -> vector<8x256xf32>
    %37 = vector.broadcast %34 : vector<1x256xf32> to vector<8x256xf32>
    %38 = arith.addf %36, %37 : vector<8x256xf32>
    %cst_29 = arith.constant 0.000000e+00 : f32
    %39 = vector.broadcast %cst_29 : f32 to vector<8x256xf32>
    %40 = arith.maximumf %38, %39 : vector<8x256xf32>
    %c0_30 = arith.constant 0 : index
    %c0_31 = arith.constant 0 : index
    %41 = vector.load %arg12[%c0_30, %c0_31] : memref<256x128xbf16, #tpu.memory_space<vmem>>, vector<256x128xbf16>
    %c0_32 = arith.constant 0 : index
    %c0_33 = arith.constant 0 : index
    %42 = vector.load %arg13[%c0_32, %c0_33] : memref<1x128xf32, #tpu.memory_space<vmem>>, vector<1x128xf32>
    %43 = arith.truncf %40 : vector<8x256xf32> to vector<8x256xbf16>
    %cst_34 = arith.constant dense<0.000000e+00> : vector<8x128xf32>
    %44 = tpu.matmul %43, %41, %cst_34 {dimension_numbers = #tpu.dot_dimension_numbers<[1], [0], [0], [1], [0, 0, 1, 1], [], []>} : vector<8x256xbf16>, vector<256x128xbf16>, vector<8x128xf32> -> vector<8x128xf32>
    %45 = vector.broadcast %42 : vector<1x128xf32> to vector<8x128xf32>
    %46 = arith.addf %44, %45 : vector<8x128xf32>
    %cst_35 = arith.constant 0.000000e+00 : f32
    %47 = vector.broadcast %cst_35 : f32 to vector<8x128xf32>
    %48 = arith.maximumf %46, %47 : vector<8x128xf32>
    %c0_36 = arith.constant 0 : index
    %c0_37 = arith.constant 0 : index
    %49 = vector.load %arg14[%c0_36, %c0_37] : memref<128x128xbf16, #tpu.memory_space<vmem>>, vector<128x128xbf16>
    %c0_38 = arith.constant 0 : index
    %c0_39 = arith.constant 0 : index
    %50 = vector.load %arg15[%c0_38, %c0_39] : memref<1x128xf32, #tpu.memory_space<vmem>>, vector<1x128xf32>
    %51 = arith.truncf %48 : vector<8x128xf32> to vector<8x128xbf16>
    %cst_40 = arith.constant dense<0.000000e+00> : vector<8x128xf32>
    %52 = tpu.matmul %51, %49, %cst_40 {dimension_numbers = #tpu.dot_dimension_numbers<[1], [0], [0], [1], [0, 0, 1, 1], [], []>} : vector<8x128xbf16>, vector<128x128xbf16>, vector<8x128xf32> -> vector<8x128xf32>
    %53 = vector.broadcast %50 : vector<1x128xf32> to vector<8x128xf32>
    %54 = arith.addf %52, %53 : vector<8x128xf32>
    %cst_41 = arith.constant 0.000000e+00 : f32
    %55 = vector.broadcast %cst_41 : f32 to vector<8x128xf32>
    %56 = arith.maximumf %54, %55 : vector<8x128xf32>
    %c0_42 = arith.constant 0 : index
    %c0_43 = arith.constant 0 : index
    %57 = vector.load %arg16[%c0_42, %c0_43] : memref<128x128xbf16, #tpu.memory_space<vmem>>, vector<128x128xbf16>
    %c0_44 = arith.constant 0 : index
    %c0_45 = arith.constant 0 : index
    %58 = vector.load %arg17[%c0_44, %c0_45] : memref<1x128xf32, #tpu.memory_space<vmem>>, vector<1x128xf32>
    %59 = arith.truncf %56 : vector<8x128xf32> to vector<8x128xbf16>
    %cst_46 = arith.constant dense<0.000000e+00> : vector<8x128xf32>
    %60 = tpu.matmul %59, %57, %cst_46 {dimension_numbers = #tpu.dot_dimension_numbers<[1], [0], [0], [1], [0, 0, 1, 1], [], []>} : vector<8x128xbf16>, vector<128x128xbf16>, vector<8x128xf32> -> vector<8x128xf32>
    %61 = vector.broadcast %58 : vector<1x128xf32> to vector<8x128xf32>
    %62 = arith.addf %60, %61 : vector<8x128xf32>
    %cst_47 = arith.constant 0.000000e+00 : f32
    %63 = vector.broadcast %cst_47 : f32 to vector<8x128xf32>
    %64 = arith.maximumf %62, %63 : vector<8x128xf32>
    %c0_48 = arith.constant 0 : index
    %c0_49 = arith.constant 0 : index
    %65 = vector.load %arg18[%c0_48, %c0_49] : memref<128x128xbf16, #tpu.memory_space<vmem>>, vector<128x128xbf16>
    %c0_50 = arith.constant 0 : index
    %c0_51 = arith.constant 0 : index
    %66 = vector.load %arg19[%c0_50, %c0_51] : memref<1x128xf32, #tpu.memory_space<vmem>>, vector<1x128xf32>
    %67 = arith.truncf %64 : vector<8x128xf32> to vector<8x128xbf16>
    %cst_52 = arith.constant dense<0.000000e+00> : vector<8x128xf32>
    %68 = tpu.matmul %67, %65, %cst_52 {dimension_numbers = #tpu.dot_dimension_numbers<[1], [0], [0], [1], [0, 0, 1, 1], [], []>} : vector<8x128xbf16>, vector<128x128xbf16>, vector<8x128xf32> -> vector<8x128xf32>
    %69 = vector.broadcast %66 : vector<1x128xf32> to vector<8x128xf32>
    %70 = arith.addf %68, %69 : vector<8x128xf32>
    %cst_53 = arith.constant 0.000000e+00 : f32
    %71 = vector.broadcast %cst_53 : f32 to vector<8x128xf32>
    %72 = arith.maximumf %70, %71 : vector<8x128xf32>
    %c0_54 = arith.constant 0 : index
    %c0_55 = arith.constant 0 : index
    %73 = vector.load %arg20[%c0_54, %c0_55] : memref<128x256xbf16, #tpu.memory_space<vmem>>, vector<128x256xbf16>
    %c0_56 = arith.constant 0 : index
    %c0_57 = arith.constant 0 : index
    %74 = vector.load %arg21[%c0_56, %c0_57] : memref<1x256xf32, #tpu.memory_space<vmem>>, vector<1x256xf32>
    %75 = arith.truncf %72 : vector<8x128xf32> to vector<8x128xbf16>
    %cst_58 = arith.constant dense<0.000000e+00> : vector<8x256xf32>
    %76 = tpu.matmul %75, %73, %cst_58 {dimension_numbers = #tpu.dot_dimension_numbers<[1], [0], [0], [1], [0, 0, 1, 1], [], []>} : vector<8x128xbf16>, vector<128x256xbf16>, vector<8x256xf32> -> vector<8x256xf32>
    %77 = vector.broadcast %74 : vector<1x256xf32> to vector<8x256xf32>
    %78 = arith.addf %76, %77 : vector<8x256xf32>
    %c0_59 = arith.constant 0 : index
    %c0_60 = arith.constant 0 : index
    %79 = vector.load %arg22[%c0_59, %c0_60] : memref<8x256xf32, #tpu.memory_space<vmem>>, vector<8x256xf32>
    tpu.vector_store %arg22[%c0_59, %c0_60], %78 {strides = array<i32>} : memref<8x256xf32, #tpu.memory_space<vmem>>, vector<8x256xf32>,
    return
  }
  func.func @transform_0(%arg0: i32) -> (i32, i32) {
    %c0_i32 = arith.constant 0 : i32
    %c0_i32_0 = arith.constant 0 : i32
    return %arg0, %c0_i32 : i32, i32
  }
  func.func @transform_1(%arg0: i32) -> (i32, i32) {
    %c0_i32 = arith.constant 0 : i32
    %c0_i32_0 = arith.constant 0 : i32
    %c0_i32_1 = arith.constant 0 : i32
    return %c0_i32, %c0_i32_0 : i32, i32
  }
  func.func @transform_2(%arg0: i32) -> (i32, i32) {
    %c0_i32 = arith.constant 0 : i32
    %c0_i32_0 = arith.constant 0 : i32
    %c0_i32_1 = arith.constant 0 : i32
    return %c0_i32, %c0_i32_0 : i32, i32
  }
  func.func @transform_3(%arg0: i32) -> (i32, i32) {
    %c0_i32 = arith.constant 0 : i32
    %c0_i32_0 = arith.constant 0 : i32
    %c0_i32_1 = arith.constant 0 : i32
    return %c0_i32, %c0_i32_0 : i32, i32
  }
  func.func @transform_4(%arg0: i32) -> (i32, i32) {
    %c0_i32 = arith.constant 0 : i32
    %c0_i32_0 = arith.constant 0 : i32
    %c0_i32_1 = arith.constant 0 : i32
    return %c0_i32, %c0_i32_0 : i32, i32
  }
  func.func @transform_5(%arg0: i32) -> (i32, i32) {
    %c0_i32 = arith.constant 0 : i32
    %c0_i32_0 = arith.constant 0 : i32
    %c0_i32_1 = arith.constant 0 : i32
    return %c0_i32, %c0_i32_0 : i32, i32
  }
  func.func @transform_6(%arg0: i32) -> (i32, i32) {
    %c0_i32 = arith.constant 0 : i32
    %c0_i32_0 = arith.constant 0 : i32
    %c0_i32_1 = arith.constant 0 : i32
    return %c0_i32, %c0_i32_0 : i32, i32
  }
  func.func @transform_7(%arg0: i32) -> (i32, i32) {
    %c0_i32 = arith.constant 0 : i32
    %c0_i32_0 = arith.constant 0 : i32
    %c0_i32_1 = arith.constant 0 : i32
    return %c0_i32, %c0_i32_0 : i32, i32
  }
  func.func @transform_8(%arg0: i32) -> (i32, i32) {
    %c0_i32 = arith.constant 0 : i32
    %c0_i32_0 = arith.constant 0 : i32
    %c0_i32_1 = arith.constant 0 : i32
    return %c0_i32, %c0_i32_0 : i32, i32
  }
  func.func @transform_9(%arg0: i32) -> (i32, i32) {
    %c0_i32 = arith.constant 0 : i32
    %c0_i32_0 = arith.constant 0 : i32
    %c0_i32_1 = arith.constant 0 : i32
    return %c0_i32, %c0_i32_0 : i32, i32
  }
  func.func @transform_10(%arg0: i32) -> (i32, i32) {
    %c0_i32 = arith.constant 0 : i32
    %c0_i32_0 = arith.constant 0 : i32
    %c0_i32_1 = arith.constant 0 : i32
    return %c0_i32, %c0_i32_0 : i32, i32
  }
  func.func @transform_11(%arg0: i32) -> (i32, i32) {
    %c0_i32 = arith.constant 0 : i32
    %c0_i32_0 = arith.constant 0 : i32
    %c0_i32_1 = arith.constant 0 : i32
    return %c0_i32, %c0_i32_0 : i32, i32
  }
  func.func @transform_12(%arg0: i32) -> (i32, i32) {
    %c0_i32 = arith.constant 0 : i32
    %c0_i32_0 = arith.constant 0 : i32
    %c0_i32_1 = arith.constant 0 : i32
    return %c0_i32, %c0_i32_0 : i32, i32
  }
  func.func @transform_13(%arg0: i32) -> (i32, i32) {
    %c0_i32 = arith.constant 0 : i32
    %c0_i32_0 = arith.constant 0 : i32
    %c0_i32_1 = arith.constant 0 : i32
    return %c0_i32, %c0_i32_0 : i32, i32
  }
  func.func @transform_14(%arg0: i32) -> (i32, i32) {
    %c0_i32 = arith.constant 0 : i32
    %c0_i32_0 = arith.constant 0 : i32
    %c0_i32_1 = arith.constant 0 : i32
    return %c0_i32, %c0_i32_0 : i32, i32
  }
  func.func @transform_15(%arg0: i32) -> (i32, i32) {
    %c0_i32 = arith.constant 0 : i32
    %c0_i32_0 = arith.constant 0 : i32
    %c0_i32_1 = arith.constant 0 : i32
    return %c0_i32, %c0_i32_0 : i32, i32
  }
  func.func @transform_16(%arg0: i32) -> (i32, i32) {
    %c0_i32 = arith.constant 0 : i32
    %c0_i32_0 = arith.constant 0 : i32
    %c0_i32_1 = arith.constant 0 : i32
    return %c0_i32, %c0_i32_0 : i32, i32
  }
  func.func @transform_17(%arg0: i32) -> (i32, i32) {
    %c0_i32 = arith.constant 0 : i32
    %c0_i32_0 = arith.constant 0 : i32
    %c0_i32_1 = arith.constant 0 : i32
    return %c0_i32, %c0_i32_0 : i32, i32
  }
  func.func @transform_18(%arg0: i32) -> (i32, i32) {
    %c0_i32 = arith.constant 0 : i32
    %c0_i32_0 = arith.constant 0 : i32
    %c0_i32_1 = arith.constant 0 : i32
    return %c0_i32, %c0_i32_0 : i32, i32
  }
  func.func @transform_19(%arg0: i32) -> (i32, i32) {
    %c0_i32 = arith.constant 0 : i32
    %c0_i32_0 = arith.constant 0 : i32
    %c0_i32_1 = arith.constant 0 : i32
    return %c0_i32, %c0_i32_0 : i32, i32
  }
  func.func @transform_20(%arg0: i32) -> (i32, i32) {
    %c0_i32 = arith.constant 0 : i32
    %c0_i32_0 = arith.constant 0 : i32
    %c0_i32_1 = arith.constant 0 : i32
    return %c0_i32, %c0_i32_0 : i32, i32
  }
  func.func @transform_21(%arg0: i32) -> (i32, i32) {
    %c0_i32 = arith.constant 0 : i32
    %c0_i32_0 = arith.constant 0 : i32
    return %arg0, %c0_i32 : i32, i32
  }
}

</mosaic_0001>

<llo_original>
// kernel: deep_custom_nn_forward.1
$region0: #{deep_custom_nn_forward.1}
  #allocation0 [shape = 'u32[]', space=smem, size = 0x4, offset = 0x4, fixed_abs, tag = 'smem constant byte address 0x4 - core index']
  #allocation1 [shape = 'u32[144,128]{1,0:T(1,128)}', space=vmem, size = 0x12000, scoped, tag = 'internal scratch']
  %s0 = inlined_call_operand.vmem [shape: f32[8,3], index: 0, kind: input, shape index: {}]
  %s1 = inlined_call_operand.hbm [shape: bf16[3,1024], index: 1, kind: input, shape index: {}]
  %s2 = inlined_call_operand.vmem [shape: f32[1,1024], index: 2, kind: input, shape index: {}]
  %s3 = inlined_call_operand.hbm [shape: bf16[1024,512], index: 3, kind: input, shape index: {}]
  %s4 = inlined_call_operand.vmem [shape: f32[1,512], index: 4, kind: input, shape index: {}]
  %s5 = inlined_call_operand.hbm [shape: bf16[512,512], index: 5, kind: input, shape index: {}]
  %s6 = inlined_call_operand.vmem [shape: f32[1,512], index: 6, kind: input, shape index: {}]
  %s7 = inlined_call_operand.hbm [shape: bf16[512,256], index: 7, kind: input, shape index: {}]
  %s8 = inlined_call_operand.vmem [shape: f32[1,256], index: 8, kind: input, shape index: {}]
  %s9 = inlined_call_operand.hbm [shape: bf16[256,256], index: 9, kind: input, shape index: {}]
  %s10 = inlined_call_operand.vmem [shape: f32[1,256], index: 10, kind: input, shape index: {}]
  %s11 = inlined_call_operand.hbm [shape: bf16[256,128], index: 11, kind: input, shape index: {}]
  %s12 = inlined_call_operand.vmem [shape: f32[1,128], index: 12, kind: input, shape index: {}]
  %s13 = inlined_call_operand.hbm [shape: bf16[128,128], index: 13, kind: input, shape index: {}]
  %s14 = inlined_call_operand.vmem [shape: f32[1,128], index: 14, kind: input, shape index: {}]
  %s15 = inlined_call_operand.hbm [shape: bf16[128,128], index: 15, kind: input, shape index: {}]
  %s16 = inlined_call_operand.vmem [shape: f32[1,128], index: 16, kind: input, shape index: {}]
  %s17 = inlined_call_operand.hbm [shape: bf16[128,128], index: 17, kind: input, shape index: {}]
  %s18 = inlined_call_operand.vmem [shape: f32[1,128], index: 18, kind: input, shape index: {}]
  %s19 = inlined_call_operand.hbm [shape: bf16[128,256], index: 19, kind: input, shape index: {}]
  %s20 = inlined_call_operand.vmem [shape: f32[1,256], index: 20, kind: input, shape index: {}]
  %s21 = inlined_call_operand.hbm [shape: f32[8,256], index: 21, kind: output, shape index: {}]
  %s22 = sld [smem:[#allocation0]]
  $region134: #{deep_custom_nn_forward.1} parent=0
    _
  %s24 = ssub.s32 1, %s22
  %s25 = scalar_select 0, %s24, %s22
  $region1: #{deep_custom_nn_forward.1} parent=0
    #allocation2 [shape = 'u8[8192]{0}', space=vmem, size = 0x2000, scoped, tag = 'input window, operand 1, single buffered']
    #allocation3 [shape = 's32[1]{0}', space=sflag, size = 0x4, scoped, tag = 'scoped memory for deep_custom_nn_forward.1']
    #allocation4 [shape = 's32[1]{0}', space=sflag, size = 0x4, scoped, tag = 'scoped memory for deep_custom_nn_forward.1']
    #allocation5 [shape = 'u8[1048576]{0}', space=vmem, size = 0x100000, scoped, tag = 'input window, operand 3, single buffered']
    #allocation6 [shape = 's32[1]{0}', space=sflag, size = 0x4, scoped, tag = 'scoped memory for deep_custom_nn_forward.1']
    #allocation7 [shape = 'u8[524288]{0}', space=vmem, size = 0x80000, scoped, tag = 'input window, operand 5, single buffered']
    #allocation8 [shape = 'u8[262144]{0}', space=vmem, size = 0x40000, scoped, tag = 'input window, operand 7, single buffered']
    #allocation9 [shape = 's32[1]{0}', space=sflag, size = 0x4, scoped, tag = 'scoped memory for deep_custom_nn_forward.1']
    #allocation10 [shape = 'u8[131072]{0}', space=vmem, size = 0x20000, scoped, tag = 'input window, operand 9, single buffered']
    #allocation11 [shape = 'u8[65536]{0}', space=vmem, size = 0x10000, scoped, tag = 'input window, operand 11, single buffered']
    #allocation12 [shape = 's32[1]{0}', space=sflag, size = 0x4, scoped, tag = 'scoped memory for deep_custom_nn_forward.1']
    #allocation13 [shape = 'u8[32768]{0}', space=vmem, size = 0x8000, scoped, tag = 'input window, operand 13, single buffered']
    #allocation14 [shape = 'u8[32768]{0}', space=vmem, size = 0x8000, scoped, tag = 'input window, operand 15, single buffered']
    #allocation15 [shape = 's32[1]{0}', space=sflag, size = 0x4, scoped, tag = 'scoped memory for deep_custom_nn_forward.1']
    #allocation16 [shape = 'u8[32768]{0}', space=vmem, size = 0x8000, scoped, tag = 'input window, operand 17, single buffered']
    #allocation17 [shape = 'u8[65536]{0}', space=vmem, size = 0x10000, scoped, tag = 'input window, operand 19, single buffered']
    #allocation18 [shape = 's32[1]{0}', space=sflag, size = 0x4, scoped, tag = 'scoped memory for deep_custom_nn_forward.1']
    #allocation19 [shape = 'u8[8192]{0}', space=vmem, size = 0x2000, scoped, tag = 'output window, operand 0, single buffered']
    %26 = vsyncpa [#allocation3], 0
    %27 = vsyncpa [#allocation6], 0
    %28 = vsyncpa [#allocation9], 0
    %29 = vsyncpa [#allocation12], 0
    %30 = vsyncpa [#allocation15], 0
    %31 = vsyncpa [#allocation18], 0
    %32 = vsyncpa [#allocation4], 0
    // Predicated region
    $region2: #{deep_custom_nn_forward.1} parent=1 // pred_check
      _
    $region3: #{deep_custom_nn_forward.1} parent=1 // pred_check_branch
      %34 = sbr.rel (0) target = $region5
    $region4: #{deep_custom_nn_forward.1} parent=1 // pred_region
      _
    $region5: #{deep_custom_nn_forward.1} parent=1 // pred_fallthru
      _
    // Predicated region
    $region6: #{deep_custom_nn_forward.1} parent=1 // pred_check
      _
    $region7: #{deep_custom_nn_forward.1} parent=1 // pred_check_branch
      %36 = sbr.rel (0) target = $region9
    $region8: #{deep_custom_nn_forward.1} parent=1 // pred_region
      %s38 = ssub.s32 256, 256
      %39 = vsyncadd [#allocation3], %s38
      %s41 = sshll.u32 [#allocation2], 4
      %s42 = int_to_ptr.vmem [resolvable:$true] %s41
      %44 = dma.hbm_to_vmem [thread:$0]  %s1, 256, %s42, [#allocation3]
    $region9: #{deep_custom_nn_forward.1} parent=1 // pred_fallthru
      _
    // Predicated region
    $region10: #{deep_custom_nn_forward.1} parent=1 // pred_check
      _
    $region11: #{deep_custom_nn_forward.1} parent=1 // pred_check_branch
      %46 = sbr.rel (0) target = $region13
    $region12: #{deep_custom_nn_forward.1} parent=1 // pred_region
      _
    $region13: #{deep_custom_nn_forward.1} parent=1 // pred_fallthru
      _
    // Predicated region
    $region14: #{deep_custom_nn_forward.1} parent=1 // pred_check
      _
    $region15: #{deep_custom_nn_forward.1} parent=1 // pred_check_branch
      %48 = sbr.rel (0) target = $region17
    $region16: #{deep_custom_nn_forward.1} parent=1 // pred_region
      %s50 = ssub.s32 32768, 32768
      %51 = vsyncadd [#allocation6], %s50
      %s52 = sshll.u32 [#allocation5], 4
      %s53 = int_to_ptr.vmem [resolvable:$true] %s52
      %58 = dma.hbm_to_vmem [thread:$0]  %s3, 32768, %s53, [#allocation6], 256, 256, 16
    $region17: #{deep_custom_nn_forward.1} parent=1 // pred_fallthru
      _
    // Predicated region
    $region18: #{deep_custom_nn_forward.1} parent=1 // pred_check
      _
    $region19: #{deep_custom_nn_forward.1} parent=1 // pred_check_branch
      %60 = sbr.rel (0) target = $region21
    $region20: #{deep_custom_nn_forward.1} parent=1 // pred_region
      _
    $region21: #{deep_custom_nn_forward.1} parent=1 // pred_fallthru
      _
    // Predicated region
    $region22: #{deep_custom_nn_forward.1} parent=1 // pred_check
      _
    $region23: #{deep_custom_nn_forward.1} parent=1 // pred_check_branch
      %62 = sbr.rel (0) target = $region25
    $region24: #{deep_custom_nn_forward.1} parent=1 // pred_region
      %s64 = ssub.s32 16384, 16384
      %65 = vsyncadd [#allocation6], %s64
      %s66 = sshll.u32 [#allocation7], 4
      %s67 = int_to_ptr.vmem [resolvable:$true] %s66
      %72 = dma.hbm_to_vmem [thread:$0]  %s5, 16384, %s67, [#allocation6], 256, 256, 16
    $region25: #{deep_custom_nn_forward.1} parent=1 // pred_fallthru
      _
    // Predicated region
    $region26: #{deep_custom_nn_forward.1} parent=1 // pred_check
      _
    $region27: #{deep_custom_nn_forward.1} parent=1 // pred_check_branch
      %74 = sbr.rel (0) target = $region29
    $region28: #{deep_custom_nn_forward.1} parent=1 // pred_region
      _
    $region29: #{deep_custom_nn_forward.1} parent=1 // pred_fallthru
      _
    // Predicated region
    $region30: #{deep_custom_nn_forward.1} parent=1 // pred_check
      _
    $region31: #{deep_custom_nn_forward.1} parent=1 // pred_check_branch
      %76 = sbr.rel (0) target = $region33
    $region32: #{deep_custom_nn_forward.1} parent=1 // pred_region
      %s78 = ssub.s32 8192, 8192
      %79 = vsyncadd [#allocation9], %s78
      %s80 = sshll.u32 [#allocation8], 4
      %s81 = int_to_ptr.vmem [resolvable:$true] %s80
      %86 = dma.hbm_to_vmem [thread:$0]  %s7, 8192, %s81, [#allocation9], 128, 128, 8
    $region33: #{deep_custom_nn_forward.1} parent=1 // pred_fallthru
      _
    // Predicated region
    $region34: #{deep_custom_nn_forward.1} parent=1 // pred_check
      _
    $region35: #{deep_custom_nn_forward.1} parent=1 // pred_check_branch
      %88 = sbr.rel (0) target = $region37
    $region36: #{deep_custom_nn_forward.1} parent=1 // pred_region
      _
    $region37: #{deep_custom_nn_forward.1} parent=1 // pred_fallthru
      _
    // Predicated region
    $region38: #{deep_custom_nn_forward.1} parent=1 // pred_check
      _
    $region39: #{deep_custom_nn_forward.1} parent=1 // pred_check_branch
      %90 = sbr.rel (0) target = $region41
    $region40: #{deep_custom_nn_forward.1} parent=1 // pred_region
      %s92 = ssub.s32 4096, 4096
      %93 = vsyncadd [#allocation9], %s92
      %s94 = sshll.u32 [#allocation10], 4
      %s95 = int_to_ptr.vmem [resolvable:$true] %s94
      %100 = dma.hbm_to_vmem [thread:$0]  %s9, 4096, %s95, [#allocation9], 128, 128, 8
    $region41: #{deep_custom_nn_forward.1} parent=1 // pred_fallthru
      _
    // Predicated region
    $region42: #{deep_custom_nn_forward.1} parent=1 // pred_check
      _
    $region43: #{deep_custom_nn_forward.1} parent=1 // pred_check_branch
      %102 = sbr.rel (0) target = $region45
    $region44: #{deep_custom_nn_forward.1} parent=1 // pred_region
      _
    $region45: #{deep_custom_nn_forward.1} parent=1 // pred_fallthru
      _
    // Predicated region
    $region46: #{deep_custom_nn_forward.1} parent=1 // pred_check
      _
    $region47: #{deep_custom_nn_forward.1} parent=1 // pred_check_branch
      %104 = sbr.rel (0) target = $region49
    $region48: #{deep_custom_nn_forward.1} parent=1 // pred_region
      %s106 = ssub.s32 2048, 2048
      %107 = vsyncadd [#allocation12], %s106
      %s108 = sshll.u32 [#allocation11], 4
      %s109 = int_to_ptr.vmem [resolvable:$true] %s108
      %114 = dma.hbm_to_vmem [thread:$0]  %s11, 2048, %s109, [#allocation12], 64, 64, 4
    $region49: #{deep_custom_nn_forward.1} parent=1 // pred_fallthru
      _
    // Predicated region
    $region50: #{deep_custom_nn_forward.1} parent=1 // pred_check
      _
    $region51: #{deep_custom_nn_forward.1} parent=1 // pred_check_branch
      %116 = sbr.rel (0) target = $region53
    $region52: #{deep_custom_nn_forward.1} parent=1 // pred_region
      _
    $region53: #{deep_custom_nn_forward.1} parent=1 // pred_fallthru
      _
    // Predicated region
    $region54: #{deep_custom_nn_forward.1} parent=1 // pred_check
      _
    $region55: #{deep_custom_nn_forward.1} parent=1 // pred_check_branch
      %118 = sbr.rel (0) target = $region57
    $region56: #{deep_custom_nn_forward.1} parent=1 // pred_region
      %s120 = ssub.s32 1024, 1024
      %121 = vsyncadd [#allocation12], %s120
      %s122 = sshll.u32 [#allocation13], 4
      %s123 = int_to_ptr.vmem [resolvable:$true] %s122
      %128 = dma.hbm_to_vmem [thread:$0]  %s13, 1024, %s123, [#allocation12], 64, 64, 4
    $region57: #{deep_custom_nn_forward.1} parent=1 // pred_fallthru
      _
    // Predicated region
    $region58: #{deep_custom_nn_forward.1} parent=1 // pred_check
      _
    $region59: #{deep_custom_nn_forward.1} parent=1 // pred_check_branch
      %130 = sbr.rel (0) target = $region61
    $region60: #{deep_custom_nn_forward.1} parent=1 // pred_region
      _
    $region61: #{deep_custom_nn_forward.1} parent=1 // pred_fallthru
      _
    // Predicated region
    $region62: #{deep_custom_nn_forward.1} parent=1 // pred_check
      _
    $region63: #{deep_custom_nn_forward.1} parent=1 // pred_check_branch
      %132 = sbr.rel (0) target = $region65
    $region64: #{deep_custom_nn_forward.1} parent=1 // pred_region
      %s134 = ssub.s32 1024, 1024
      %135 = vsyncadd [#allocation15], %s134
      %s136 = sshll.u32 [#allocation14], 4
      %s137 = int_to_ptr.vmem [resolvable:$true] %s136
      %142 = dma.hbm_to_vmem [thread:$0]  %s15, 1024, %s137, [#allocation15], 64, 64, 4
    $region65: #{deep_custom_nn_forward.1} parent=1 // pred_fallthru
      _
    // Predicated region
    $region66: #{deep_custom_nn_forward.1} parent=1 // pred_check
      _
    $region67: #{deep_custom_nn_forward.1} parent=1 // pred_check_branch
      %144 = sbr.rel (0) target = $region69
    $region68: #{deep_custom_nn_forward.1} parent=1 // pred_region
      _
    $region69: #{deep_custom_nn_forward.1} parent=1 // pred_fallthru
      _
    // Predicated region
    $region70: #{deep_custom_nn_forward.1} parent=1 // pred_check
      _
    $region71: #{deep_custom_nn_forward.1} parent=1 // pred_check_branch
      %146 = sbr.rel (0) target = $region73
    $region72: #{deep_custom_nn_forward.1} parent=1 // pred_region
      %s148 = ssub.s32 1024, 1024
      %149 = vsyncadd [#allocation15], %s148
      %s150 = sshll.u32 [#allocation16], 4
      %s151 = int_to_ptr.vmem [resolvable:$true] %s150
      %156 = dma.hbm_to_vmem [thread:$0]  %s17, 1024, %s151, [#allocation15], 64, 64, 4
    $region73: #{deep_custom_nn_forward.1} parent=1 // pred_fallthru
      _
    // Predicated region
    $region74: #{deep_custom_nn_forward.1} parent=1 // pred_check
      _
    $region75: #{deep_custom_nn_forward.1} parent=1 // pred_check_branch
      %158 = sbr.rel (0) target = $region77
    $region76: #{deep_custom_nn_forward.1} parent=1 // pred_region
      _
    $region77: #{deep_custom_nn_forward.1} parent=1 // pred_fallthru
      _
    // Predicated region
    $region78: #{deep_custom_nn_forward.1} parent=1 // pred_check
      _
    $region79: #{deep_custom_nn_forward.1} parent=1 // pred_check_branch
      %160 = sbr.rel (0) target = $region81
    $region80: #{deep_custom_nn_forward.1} parent=1 // pred_region
      %s162 = ssub.s32 2048, 2048
      %163 = vsyncadd [#allocation18], %s162
      %s164 = sshll.u32 [#allocation17], 4
      %s165 = int_to_ptr.vmem [resolvable:$true] %s164
      %170 = dma.hbm_to_vmem [thread:$0]  %s19, 2048, %s165, [#allocation18], 128, 128, 8
    $region81: #{deep_custom_nn_forward.1} parent=1 // pred_fallthru
      _
    // Predicated region
    $region82: #{deep_custom_nn_forward.1} parent=1 // pred_check
      _
    $region83: #{deep_custom_nn_forward.1} parent=1 // pred_check_branch
      %172 = sbr.rel (0) target = $region85
    $region84: #{deep_custom_nn_forward.1} parent=1 // pred_region
      _
    $region85: #{deep_custom_nn_forward.1} parent=1 // pred_fallthru
      _
    // Predicated region
    $region86: #{deep_custom_nn_forward.1} parent=1 // pred_check
      _
    $region87: #{deep_custom_nn_forward.1} parent=1 // pred_check_branch
      %174 = sbr.rel (0) target = $region89
    $region88: #{deep_custom_nn_forward.1} parent=1 // pred_region
      %175 = dma.done [#allocation3], 256
    $region89: #{deep_custom_nn_forward.1} parent=1 // pred_fallthru
      _
    // Predicated region
    $region90: #{deep_custom_nn_forward.1} parent=1 // pred_check
      _
    $region91: #{deep_custom_nn_forward.1} parent=1 // pred_check_branch
      %177 = sbr.rel (0) target = $region93
    $region92: #{deep_custom_nn_forward.1} parent=1 // pred_region
      %178 = dma.done [#allocation6], 32768
    $region93: #{deep_custom_nn_forward.1} parent=1 // pred_fallthru
      _
    // Predicated region
    $region94: #{deep_custom_nn_forward.1} parent=1 // pred_check
      _
    $region95: #{deep_custom_nn_forward.1} parent=1 // pred_check_branch
      %180 = sbr.rel (0) target = $region97
    $region96: #{deep_custom_nn_forward.1} parent=1 // pred_region
      %181 = dma.done [#allocation6], 16384
    $region97: #{deep_custom_nn_forward.1} parent=1 // pred_fallthru
      _
    // Predicated region
    $region98: #{deep_custom_nn_forward.1} parent=1 // pred_check
      _
    $region99: #{deep_custom_nn_forward.1} parent=1 // pred_check_branch
      %183 = sbr.rel (0) target = $region101
    $region100: #{deep_custom_nn_forward.1} parent=1 // pred_region
      %184 = dma.done [#allocation9], 8192
    $region101: #{deep_custom_nn_forward.1} parent=1 // pred_fallthru
      _
    // Predicated region
    $region102: #{deep_custom_nn_forward.1} parent=1 // pred_check
      _
    $region103: #{deep_custom_nn_forward.1} parent=1 // pred_check_branch
      %186 = sbr.rel (0) target = $region105
    $region104: #{deep_custom_nn_forward.1} parent=1 // pred_region
      %187 = dma.done [#allocation9], 4096
    $region105: #{deep_custom_nn_forward.1} parent=1 // pred_fallthru
      _
    // Predicated region
    $region106: #{deep_custom_nn_forward.1} parent=1 // pred_check
      _
    $region107: #{deep_custom_nn_forward.1} parent=1 // pred_check_branch
      %189 = sbr.rel (0) target = $region109
    $region108: #{deep_custom_nn_forward.1} parent=1 // pred_region
      %190 = dma.done [#allocation12], 2048
    $region109: #{deep_custom_nn_forward.1} parent=1 // pred_fallthru
      _
    // Predicated region
    $region110: #{deep_custom_nn_forward.1} parent=1 // pred_check
      _
    $region111: #{deep_custom_nn_forward.1} parent=1 // pred_check_branch
      %192 = sbr.rel (0) target = $region113
    $region112: #{deep_custom_nn_forward.1} parent=1 // pred_region
      %193 = dma.done [#allocation12], 1024
    $region113: #{deep_custom_nn_forward.1} parent=1 // pred_fallthru
      _
    // Predicated region
    $region114: #{deep_custom_nn_forward.1} parent=1 // pred_check
      _
    $region115: #{deep_custom_nn_forward.1} parent=1 // pred_check_branch
      %195 = sbr.rel (0) target = $region117
    $region116: #{deep_custom_nn_forward.1} parent=1 // pred_region
      %196 = dma.done [#allocation15], 1024
    $region117: #{deep_custom_nn_forward.1} parent=1 // pred_fallthru
      _
    // Predicated region
    $region118: #{deep_custom_nn_forward.1} parent=1 // pred_check
      _
    $region119: #{deep_custom_nn_forward.1} parent=1 // pred_check_branch
      %198 = sbr.rel (0) target = $region121
    $region120: #{deep_custom_nn_forward.1} parent=1 // pred_region
      %199 = dma.done [#allocation15], 1024
    $region121: #{deep_custom_nn_forward.1} parent=1 // pred_fallthru
      _
    // Predicated region
    $region122: #{deep_custom_nn_forward.1} parent=1 // pred_check
      _
    $region123: #{deep_custom_nn_forward.1} parent=1 // pred_check_branch
      %201 = sbr.rel (0) target = $region125
    $region124: #{deep_custom_nn_forward.1} parent=1 // pred_region
      %202 = dma.done [#allocation18], 2048
    $region125: #{deep_custom_nn_forward.1} parent=1 // pred_fallthru
      _
    %v204 = vld [vmem:[%s0] sm:$0xff]
    %v205 = vld [vmem:[#allocation2] sm:$0xff]
    %v206 = vld [vmem:[#allocation2 + $0x8] sm:$0xff]
    %v207 = vld [vmem:[%s2] sm:$0xff]
    %v208 = vpack.c.bf16 %v204, %v204
    %v210 = vlaneseq
    %v211 = vshrl.u32 %v210, 7
    %v212 = vsub.s32 0, %v211
    %v213 = vrot.slane %v207, %v212
    %v214 = vlaneseq
    %v215 = vshrl.u32 %v214, 7
    %v216 = vsub.s32 1, %v215
    %v217 = vrot.slane %v207, %v216
    %v218 = vlaneseq
    %v219 = vshrl.u32 %v218, 7
    %v220 = vsub.s32 2, %v219
    %v221 = vrot.slane %v207, %v220
    %v222 = vlaneseq
    %v223 = vshrl.u32 %v222, 7
    %v224 = vsub.s32 3, %v223
    %v225 = vrot.slane %v207, %v224
    %v226 = vlaneseq
    %v227 = vshrl.u32 %v226, 7
    %v228 = vsub.s32 4, %v227
    %v229 = vrot.slane %v207, %v228
    %v230 = vlaneseq
    %v231 = vshrl.u32 %v230, 7
    %v232 = vsub.s32 5, %v231
    %v233 = vrot.slane %v207, %v232
    %v234 = vlaneseq
    %v235 = vshrl.u32 %v234, 7
    %v236 = vsub.s32 6, %v235
    %v237 = vrot.slane %v207, %v236
    %v238 = vlaneseq
    %v239 = vshrl.u32 %v238, 7
    %v240 = vsub.s32 7, %v239
    %v241 = vrot.slane %v207, %v240
    %v252 = vcombine.high %v205, %v205
    %v254 = vunpack.c.l.s4 1983009808
    %v255 = vunpack.c.0.s8 %v254
    %v256 = vlaneseq
    %v257 = vshrl.u32 %v256, 7
    %v258 = vsub.s32 %v255, %v257
    %v259 = vrot.slane %v205, %v258
    %v261 = vunpack.c.l.s4 1983009808
    %v262 = vunpack.c.0.s8 %v261
    %v263 = vlaneseq
    %v264 = vshrl.u32 %v263, 7
    %v265 = vsub.s32 %v262, %v264
    %v266 = vrot.slane %v252, %v265
    %v267 = vcombine.high %v259, %v259
    %v268 = vcombine.high %v266, %v266
    %v269 = vcombine.high %v206, %v206
    %v271 = vunpack.c.l.s4 1983009808
    %v272 = vunpack.c.0.s8 %v271
    %v273 = vlaneseq
    %v274 = vshrl.u32 %v273, 7
    %v275 = vsub.s32 %v272, %v274
    %v276 = vrot.slane %v206, %v275
    %v278 = vunpack.c.l.s4 1983009808
    %v279 = vunpack.c.0.s8 %v278
    %v280 = vlaneseq
    %v281 = vshrl.u32 %v280, 7
    %v282 = vsub.s32 %v279, %v281
    %v283 = vrot.slane %v269, %v282
    %v284 = vcombine.high %v276, %v276
    %v285 = vcombine.high %v283, %v283
    %vm286 = vcmask 23552
    %v288 = vsel %vm286, %v208, 0
    %vm290 = vcmask 1040384
    %vm291 = vcmask 1041408
    %v292 = vsel %vm290, 4294967295, 65535
    %v293 = vsel %vm291, %v292, 0
    %v295 = vand.u32 %v259, %v293
    %v298 = vand.u32 %v267, %v293
    %v301 = vand.u32 %v266, %v293
    %v304 = vand.u32 %v268, %v293
    %v307 = vand.u32 %v276, %v293
    %v310 = vand.u32 %v284, %v293
    %v313 = vand.u32 %v283, %v293
    %v316 = vand.u32 %v285, %v293
    %318 = vmatprep.subr.bf16.mxu0 0
    %319 = vmatpush1.bf16.msra.mxu0 0
    %320 = vmatprep.subr.bf16.mxu0 0
    %321 = vmatpush1.bf16.msra.mxu0 0
    %322 = vmatprep.subr.bf16.mxu0 0
    %323 = vmatpush1.bf16.msra.mxu0 0
    %324 = vmatprep.subr.bf16.mxu0 0
    %325 = vmatpush1.bf16.msra.mxu0 0
    %326 = vmatprep.subr.bf16.mxu0 0
    %327 = vmatpush1.bf16.msra.mxu0 0
    %328 = vmatprep.subr.bf16.mxu0 0
    %329 = vmatpush1.bf16.msra.mxu0 0
    %330 = vmatprep.subr.bf16.mxu0 0
    %331 = vmatpush1.bf16.msra.mxu0 0
    %332 = vmatprep.subr.bf16.mxu0 %v298
    %333 = vmatpush1.bf16.msra.mxu0 %v295
    %334 = vmatprep.subr.bf16.mxu0 0
    %335 = vmatpush2.bf16.msra.mxu0 0
    %336 = vmatprep.subr.bf16.mxu0 0
    %337 = vmatpush2.bf16.msra.mxu0 0
    %338 = vmatprep.subr.bf16.mxu0 0
    %339 = vmatpush2.bf16.msra.mxu0 0
    %340 = vmatprep.subr.bf16.mxu0 0
    %341 = vmatpush2.bf16.msra.mxu0 0
    %342 = vmatprep.subr.bf16.mxu0 0
    %343 = vmatpush2.bf16.msra.mxu0 0
    %344 = vmatprep.subr.bf16.mxu0 0
    %345 = vmatpush2.bf16.msra.mxu0 0
    %346 = vmatprep.subr.bf16.mxu0 0
    %347 = vmatpush2.bf16.msra.mxu0 0
    %348 = vmatprep.subr.bf16.mxu0 0
    %349 = vmatpush2.bf16.msra.mxu0 0
    %350 = vmatprep.mubr.bf16.mxu0 0
    %351 = vmatmul.mubr.bf16.gmra.mxu0 %v288
    %v352 = vpop.f32.mrf.mxu0
    %v353 = vadd.f32 %v213, %v352
    %v354 = vpop.f32.mrf.mxu0
    %v355 = vadd.f32 %v217, %v354
    %v356 = vpop.f32.mrf.mxu0
    %v357 = vpop.f32.mrf.mxu0
    %358 = vdwg.mxu0
    %359 = vmatprep.subr.bf16.mxu0 0
    %360 = vmatpush1.bf16.msra.mxu0 0
    %361 = vmatprep.subr.bf16.mxu0 0
    %362 = vmatpush1.bf16.msra.mxu0 0
    %363 = vmatprep.subr.bf16.mxu0 0
    %364 = vmatpush1.bf16.msra.mxu0 0
    %365 = vmatprep.subr.bf16.mxu0 0
    %366 = vmatpush1.bf16.msra.mxu0 0
    %367 = vmatprep.subr.bf16.mxu0 0
    %368 = vmatpush1.bf16.msra.mxu0 0
    %369 = vmatprep.subr.bf16.mxu0 0
    %370 = vmatpush1.bf16.msra.mxu0 0
    %371 = vmatprep.subr.bf16.mxu0 0
    %372 = vmatpush1.bf16.msra.mxu0 0
    %373 = vmatprep.subr.bf16.mxu0 %v304
    %374 = vmatpush1.bf16.msra.mxu0 %v301
    %375 = vmatprep.subr.bf16.mxu0 0
    %376 = vmatpush2.bf16.msra.mxu0 0
    %377 = vmatprep.subr.bf16.mxu0 0
    %378 = vmatpush2.bf16.msra.mxu0 0
    %379 = vmatprep.subr.bf16.mxu0 0
    %380 = vmatpush2.bf16.msra.mxu0 0
    %381 = vmatprep.subr.bf16.mxu0 0
    %382 = vmatpush2.bf16.msra.mxu0 0
    %383 = vmatprep.subr.bf16.mxu0 0
    %384 = vmatpush2.bf16.msra.mxu0 0
    %385 = vmatprep.subr.bf16.mxu0 0
    %386 = vmatpush2.bf16.msra.mxu0 0
    %387 = vmatprep.subr.bf16.mxu0 0
    %388 = vmatpush2.bf16.msra.mxu0 0
    %389 = vmatprep.subr.bf16.mxu0 0
    %390 = vmatpush2.bf16.msra.mxu0 0
    %391 = vmatprep.mubr.bf16.mxu0 0
    %392 = vmatmul.mubr.bf16.gmra.mxu0 %v288
    %v393 = vpop.f32.mrf.mxu0
    %v394 = vadd.f32 %v221, %v393
    %v395 = vpop.f32.mrf.mxu0
    %v396 = vadd.f32 %v225, %v395
    %v397 = vpop.f32.mrf.mxu0
    %v398 = vpop.f32.mrf.mxu0
    %399 = vdwg.mxu0
    %400 = vmatprep.subr.bf16.mxu0 0
    %401 = vmatpush1.bf16.msra.mxu0 0
    %402 = vmatprep.subr.bf16.mxu0 0
    %403 = vmatpush1.bf16.msra.mxu0 0
    %404 = vmatprep.subr.bf16.mxu0 0
    %405 = vmatpush1.bf16.msra.mxu0 0
    %406 = vmatprep.subr.bf16.mxu0 0
    %407 = vmatpush1.bf16.msra.mxu0 0
    %408 = vmatprep.subr.bf16.mxu0 0
    %409 = vmatpush1.bf16.msra.mxu0 0
    %410 = vmatprep.subr.bf16.mxu0 0
    %411 = vmatpush1.bf16.msra.mxu0 0
    %412 = vmatprep.subr.bf16.mxu0 0
    %413 = vmatpush1.bf16.msra.mxu0 0
    %414 = vmatprep.subr.bf16.mxu0 %v310
    %415 = vmatpush1.bf16.msra.mxu0 %v307
    %416 = vmatprep.subr.bf16.mxu0 0
    %417 = vmatpush2.bf16.msra.mxu0 0
    %418 = vmatprep.subr.bf16.mxu0 0
    %419 = vmatpush2.bf16.msra.mxu0 0
    %420 = vmatprep.subr.bf16.mxu0 0
    %421 = vmatpush2.bf16.msra.mxu0 0
    %422 = vmatprep.subr.bf16.mxu0 0
    %423 = vmatpush2.bf16.msra.mxu0 0
    %424 = vmatprep.subr.bf16.mxu0 0
    %425 = vmatpush2.bf16.msra.mxu0 0
    %426 = vmatprep.subr.bf16.mxu0 0
    %427 = vmatpush2.bf16.msra.mxu0 0
    %428 = vmatprep.subr.bf16.mxu0 0
    %429 = vmatpush2.bf16.msra.mxu0 0
    %430 = vmatprep.subr.bf16.mxu0 0
    %431 = vmatpush2.bf16.msra.mxu0 0
    %432 = vmatprep.mubr.bf16.mxu0 0
    %433 = vmatmul.mubr.bf16.gmra.mxu0 %v288
    %v434 = vpop.f32.mrf.mxu0
    %v435 = vadd.f32 %v229, %v434
    %v436 = vpop.f32.mrf.mxu0
    %v437 = vadd.f32 %v233, %v436
    %v438 = vpop.f32.mrf.mxu0
    %v439 = vpop.f32.mrf.mxu0
    %440 = vdwg.mxu0
    %441 = vmatprep.subr.bf16.mxu0 0
    %442 = vmatpush1.bf16.msra.mxu0 0
    %443 = vmatprep.subr.bf16.mxu0 0
    %444 = vmatpush1.bf16.msra.mxu0 0
    %445 = vmatprep.subr.bf16.mxu0 0
    %446 = vmatpush1.bf16.msra.mxu0 0
    %447 = vmatprep.subr.bf16.mxu0 0
    %448 = vmatpush1.bf16.msra.mxu0 0
    %449 = vmatprep.subr.bf16.mxu0 0
    %450 = vmatpush1.bf16.msra.mxu0 0
    %451 = vmatprep.subr.bf16.mxu0 0
    %452 = vmatpush1.bf16.msra.mxu0 0
    %453 = vmatprep.subr.bf16.mxu0 0
    %454 = vmatpush1.bf16.msra.mxu0 0
    %455 = vmatprep.subr.bf16.mxu0 %v316
    %456 = vmatpush1.bf16.msra.mxu0 %v313
    %457 = vmatprep.subr.bf16.mxu0 0
    %458 = vmatpush2.bf16.msra.mxu0 0
    %459 = vmatprep.subr.bf16.mxu0 0
    %460 = vmatpush2.bf16.msra.mxu0 0
    %461 = vmatprep.subr.bf16.mxu0 0
    %462 = vmatpush2.bf16.msra.mxu0 0
    %463 = vmatprep.subr.bf16.mxu0 0
    %464 = vmatpush2.bf16.msra.mxu0 0
    %465 = vmatprep.subr.bf16.mxu0 0
    %466 = vmatpush2.bf16.msra.mxu0 0
    %467 = vmatprep.subr.bf16.mxu0 0
    %468 = vmatpush2.bf16.msra.mxu0 0
    %469 = vmatprep.subr.bf16.mxu0 0
    %470 = vmatpush2.bf16.msra.mxu0 0
    %471 = vmatprep.subr.bf16.mxu0 0
    %472 = vmatpush2.bf16.msra.mxu0 0
    %473 = vmatprep.mubr.bf16.mxu0 0
    %474 = vmatmul.mubr.bf16.gmra.mxu0 %v288
    %v475 = vpop.f32.mrf.mxu0
    %v476 = vadd.f32 %v237, %v475
    %v477 = vpop.f32.mrf.mxu0
    %v478 = vadd.f32 %v241, %v477
    %v479 = vpop.f32.mrf.mxu0
    %v480 = vpop.f32.mrf.mxu0
    %481 = vdwg.mxu0
    %v482 = vmax.f32 %v353, 0.0
    %v483 = vmax.f32 %v355, 0.0
    %v484 = vmax.f32 %v394, 0.0
    %v485 = vmax.f32 %v396, 0.0
    %v486 = vmax.f32 %v435, 0.0
    %v487 = vmax.f32 %v437, 0.0
    %v488 = vmax.f32 %v476, 0.0
    %v489 = vmax.f32 %v478, 0.0
    %v490 = vld [vmem:[#allocation5] sm:$0xff]
    %v491 = vld [vmem:[#allocation5 + $0x8] sm:$0xff]
    %v492 = vld [vmem:[#allocation5 + $0x10] sm:$0xff]
    %v493 = vld [vmem:[#allocation5 + $0x18] sm:$0xff]
    %v494 = vld [vmem:[#allocation5 + $0x20] sm:$0xff]
    %v495 = vld [vmem:[#allocation5 + $0x28] sm:$0xff]
    %v496 = vld [vmem:[#allocation5 + $0x30] sm:$0xff]
    %v497 = vld [vmem:[#allocation5 + $0x38] sm:$0xff]
    %v498 = vld [vmem:[#allocation5 + $0x40] sm:$0xff]
    %v499 = vld [vmem:[#allocation5 + $0x48] sm:$0xff]
    %v500 = vld [vmem:[#allocation5 + $0x50] sm:$0xff]
    %v501 = vld [vmem:[#allocation5 + $0x58] sm:$0xff]
    %v502 = vld [vmem:[#allocation5 + $0x60] sm:$0xff]
    %v503 = vld [vmem:[#allocation5 + $0x68] sm:$0xff]
    %v504 = vld [vmem:[#allocation5 + $0x70] sm:$0xff]
    %v505 = vld [vmem:[#allocation5 + $0x78] sm:$0xff]
    %v506 = vld [vmem:[#allocation5 + $0x80] sm:$0xff]
    %v507 = vld [vmem:[#allocation5 + $0x88] sm:$0xff]
    %v508 = vld [vmem:[#allocation5 + $0x90] sm:$0xff]
    %v509 = vld [vmem:[#allocation5 + $0x98] sm:$0xff]
    %v510 = vld [vmem:[#allocation5 + $0xa0] sm:$0xff]
    %v511 = vld [vmem:[#allocation5 + $0xa8] sm:$0xff]
    %v512 = vld [vmem:[#allocation5 + $0xb0] sm:$0xff]
    %v513 = vld [vmem:[#allocation5 + $0xb8] sm:$0xff]
    %v514 = vld [vmem:[#allocation5 + $0xc0] sm:$0xff]
    %v515 = vld [vmem:[#allocation5 + $0xc8] sm:$0xff]
    %v516 = vld [vmem:[#allocation5 + $0xd0] sm:$0xff]
    %v517 = vld [vmem:[#allocation5 + $0xd8] sm:$0xff]
    %v518 = vld [vmem:[#allocation5 + $0xe0] sm:$0xff]
    %v519 = vld [vmem:[#allocation5 + $0xe8] sm:$0xff]
    %v520 = vld [vmem:[#allocation5 + $0xf0] sm:$0xff]
    %v521 = vld [vmem:[#allocation5 + $0xf8] sm:$0xff]
    %v522 = vld [vmem:[#allocation5 + $0x100] sm:$0xff]
    %v523 = vld [vmem:[#allocation5 + $0x108] sm:$0xff]
    %v524 = vld [vmem:[#allocation5 + $0x110] sm:$0xff]
    %v525 = vld [vmem:[#allocation5 + $0x118] sm:$0xff]
    %v526 = vld [vmem:[#allocation5 + $0x120] sm:$0xff]
    %v527 = vld [vmem:[#allocation5 + $0x128] sm:$0xff]
    %v528 = vld [vmem:[#allocation5 + $0x130] sm:$0xff]
    %v529 = vld [vmem:[#allocation5 + $0x138] sm:$0xff]
    %v530 = vld [vmem:[#allocation5 + $0x140] sm:$0xff]
    %v531 = vld [vmem:[#allocation5 + $0x148] sm:$0xff]
    %v532 = vld [vmem:[#allocation5 + $0x150] sm:$0xff]
    %v533 = vld [vmem:[#allocation5 + $0x158] sm:$0xff]
    %v534 = vld [vmem:[#allocation5 + $0x160] sm:$0xff]
    %v535 = vld [vmem:[#allocation5 + $0x168] sm:$0xff]
    %v536 = vld [vmem:[#allocation5 + $0x170] sm:$0xff]
    %v537 = vld [vmem:[#allocation5 + $0x178] sm:$0xff]
    %v538 = vld [vmem:[#allocation5 + $0x180] sm:$0xff]
    %v539 = vld [vmem:[#allocation5 + $0x188] sm:$0xff]
    %v540 = vld [vmem:[#allocation5 + $0x190] sm:$0xff]
    %v541 = vld [vmem:[#allocation5 + $0x198] sm:$0xff]
    %v542 = vld [vmem:[#allocation5 + $0x1a0] sm:$0xff]
    %v543 = vld [vmem:[#allocation5 + $0x1a8] sm:$0xff]
    %v544 = vld [vmem:[#allocation5 + $0x1b0] sm:$0xff]
    %v545 = vld [vmem:[#allocation5 + $0x1b8] sm:$0xff]
    %v546 = vld [vmem:[#allocation5 + $0x1c0] sm:$0xff]
    %v547 = vld [vmem:[#allocation5 + $0x1c8] sm:$0xff]
    %v548 = vld [vmem:[#allocation5 + $0x1d0] sm:$0xff]
    %v549 = vld [vmem:[#allocation5 + $0x1d8] sm:$0xff]
    %v550 = vld [vmem:[#allocation5 + $0x1e0] sm:$0xff]
    %v551 = vld [vmem:[#allocation5 + $0x1e8] sm:$0xff]
    %v552 = vld [vmem:[#allocation5 + $0x1f0] sm:$0xff]
    %v553 = vld [vmem:[#allocation5 + $0x1f8] sm:$0xff]
    %v554 = vld [vmem:[#allocation5 + $0x200] sm:$0xff]
    %v555 = vld [vmem:[#allocation5 + $0x208] sm:$0xff]
    %v556 = vld [vmem:[#allocation5 + $0x210] sm:$0xff]
    %v557 = vld [vmem:[#allocation5 + $0x218] sm:$0xff]
    %v558 = vld [vmem:[#allocation5 + $0x220] sm:$0xff]
    %v559 = vld [vmem:[#allocation5 + $0x228] sm:$0xff]
    %v560 = vld [vmem:[#allocation5 + $0x230] sm:$0xff]
    %v561 = vld [vmem:[#allocation5 + $0x238] sm:$0xff]
    %v562 = vld [vmem:[#allocation5 + $0x240] sm:$0xff]
    %v563 = vld [vmem:[#allocation5 + $0x248] sm:$0xff]
    %v564 = vld [vmem:[#allocation5 + $0x250] sm:$0xff]
    %v565 = vld [vmem:[#allocation5 + $0x258] sm:$0xff]
    %v566 = vld [vmem:[#allocation5 + $0x260] sm:$0xff]
    %v567 = vld [vmem:[#allocation5 + $0x268] sm:$0xff]
    %v568 = vld [vmem:[#allocation5 + $0x270] sm:$0xff]
    %v569 = vld [vmem:[#allocation5 + $0x278] sm:$0xff]
    %v570 = vld [vmem:[#allocation5 + $0x280] sm:$0xff]
    %v571 = vld [vmem:[#allocation5 + $0x288] sm:$0xff]
    %v572 = vld [vmem:[#allocation5 + $0x290] sm:$0xff]
    %v573 = vld [vmem:[#allocation5 + $0x298] sm:$0xff]
    %v574 = vld [vmem:[#allocation5 + $0x2a0] sm:$0xff]
    %v575 = vld [vmem:[#allocation5 + $0x2a8] sm:$0xff]
    %v576 = vld [vmem:[#allocation5 + $0x2b0] sm:$0xff]
    %v577 = vld [vmem:[#allocation5 + $0x2b8] sm:$0xff]
    %v578 = vld [vmem:[#allocation5 + $0x2c0] sm:$0xff]
    %v579 = vld [vmem:[#allocation5 + $0x2c8] sm:$0xff]
    %v580 = vld [vmem:[#allocation5 + $0x2d0] sm:$0xff]
    %v581 = vld [vmem:[#allocation5 + $0x2d8] sm:$0xff]
    %v582 = vld [vmem:[#allocation5 + $0x2e0] sm:$0xff]
    %v583 = vld [vmem:[#allocation5 + $0x2e8] sm:$0xff]
    %v584 = vld [vmem:[#allocation5 + $0x2f0] sm:$0xff]
    %v585 = vld [vmem:[#allocation5 + $0x2f8] sm:$0xff]
    %v586 = vld [vmem:[#allocation5 + $0x300] sm:$0xff]
    %v587 = vld [vmem:[#allocation5 + $0x308] sm:$0xff]
    %v588 = vld [vmem:[#allocation5 + $0x310] sm:$0xff]
    %v589 = vld [vmem:[#allocation5 + $0x318] sm:$0xff]
    %v590 = vld [vmem:[#allocation5 + $0x320] sm:$0xff]
    %v591 = vld [vmem:[#allocation5 + $0x328] sm:$0xff]
    %v592 = vld [vmem:[#allocation5 + $0x330] sm:$0xff]
    %v593 = vld [vmem:[#allocation5 + $0x338] sm:$0xff]
    %v594 = vld [vmem:[#allocation5 + $0x340] sm:$0xff]
    %v595 = vld [vmem:[#allocation5 + $0x348] sm:$0xff]
    %v596 = vld [vmem:[#allocation5 + $0x350] sm:$0xff]
    %v597 = vld [vmem:[#allocation5 + $0x358] sm:$0xff]
    %v598 = vld [vmem:[#allocation5 + $0x360] sm:$0xff]
    %v599 = vld [vmem:[#allocation5 + $0x368] sm:$0xff]
    %v600 = vld [vmem:[#allocation5 + $0x370] sm:$0xff]
    %v601 = vld [vmem:[#allocation5 + $0x378] sm:$0xff]
    %v602 = vld [vmem:[#allocation5 + $0x380] sm:$0xff]
    %v603 = vld [vmem:[#allocation5 + $0x388] sm:$0xff]
    %v604 = vld [vmem:[#allocation5 + $0x390] sm:$0xff]
    %v605 = vld [vmem:[#allocation5 + $0x398] sm:$0xff]
    %v606 = vld [vmem:[#allocation5 + $0x3a0] sm:$0xff]
    %v607 = vld [vmem:[#allocation5 + $0x3a8] sm:$0xff]
    %v608 = vld [vmem:[#allocation5 + $0x3b0] sm:$0xff]
    %v609 = vld [vmem:[#allocation5 + $0x3b8] sm:$0xff]
    %v610 = vld [vmem:[#allocation5 + $0x3c0] sm:$0xff]
    %v611 = vld [vmem:[#allocation5 + $0x3c8] sm:$0xff]
    %v612 = vld [vmem:[#allocation5 + $0x3d0] sm:$0xff]
    %v613 = vld [vmem:[#allocation5 + $0x3d8] sm:$0xff]
    %v614 = vld [vmem:[#allocation5 + $0x3e0] sm:$0xff]
    %v615 = vld [vmem:[#allocation5 + $0x3e8] sm:$0xff]
    %v616 = vld [vmem:[#allocation5 + $0x3f0] sm:$0xff]
    %v617 = vld [vmem:[#allocation5 + $0x3f8] sm:$0xff]
    %v618 = vld [vmem:[#allocation5 + $0x400] sm:$0xff]
    %v619 = vld [vmem:[#allocation5 + $0x408] sm:$0xff]
    %v620 = vld [vmem:[#allocation5 + $0x410] sm:$0xff]
    %v621 = vld [vmem:[#allocation5 + $0x418] sm:$0xff]
    %v622 = vld [vmem:[#allocation5 + $0x420] sm:$0xff]
    %v623 = vld [vmem:[#allocation5 + $0x428] sm:$0xff]
    %v624 = vld [vmem:[#allocation5 + $0x430] sm:$0xff]
    %v625 = vld [vmem:[#allocation5 + $0x438] sm:$0xff]
    %v626 = vld [vmem:[#allocation5 + $0x440] sm:$0xff]
    %v627 = vld [vmem:[#allocation5 + $0x448] sm:$0xff]
    %v628 = vld [vmem:[#allocation5 + $0x450] sm:$0xff]
    %v629 = vld [vmem:[#allocation5 + $0x458] sm:$0xff]
    %v630 = vld [vmem:[#allocation5 + $0x460] sm:$0xff]
    %v631 = vld [vmem:[#allocation5 + $0x468] sm:$0xff]
    %v632 = vld [vmem:[#allocation5 + $0x470] sm:$0xff]
    %v633 = vld [vmem:[#allocation5 + $0x478] sm:$0xff]
    %v634 = vld [vmem:[#allocation5 + $0x480] sm:$0xff]
    %v635 = vld [vmem:[#allocation5 + $0x488] sm:$0xff]
    %v636 = vld [vmem:[#allocation5 + $0x490] sm:$0xff]
    %v637 = vld [vmem:[#allocation5 + $0x498] sm:$0xff]
    %v638 = vld [vmem:[#allocation5 + $0x4a0] sm:$0xff]
    %v639 = vld [vmem:[#allocation5 + $0x4a8] sm:$0xff]
    %v640 = vld [vmem:[#allocation5 + $0x4b0] sm:$0xff]
    %v641 = vld [vmem:[#allocation5 + $0x4b8] sm:$0xff]
    %v642 = vld [vmem:[#allocation5 + $0x4c0] sm:$0xff]
    %v643 = vld [vmem:[#allocation5 + $0x4c8] sm:$0xff]
    %v644 = vld [vmem:[#allocation5 + $0x4d0] sm:$0xff]
    %v645 = vld [vmem:[#allocation5 + $0x4d8] sm:$0xff]
    %v646 = vld [vmem:[#allocation5 + $0x4e0] sm:$0xff]
    %v647 = vld [vmem:[#allocation5 + $0x4e8] sm:$0xff]
    %v648 = vld [vmem:[#allocation5 + $0x4f0] sm:$0xff]
    %v649 = vld [vmem:[#allocation5 + $0x4f8] sm:$0xff]
    %v650 = vld [vmem:[#allocation5 + $0x500] sm:$0xff]
    %v651 = vld [vmem:[#allocation5 + $0x508] sm:$0xff]
    %v652 = vld [vmem:[#allocation5 + $0x510] sm:$0xff]
    %v653 = vld [vmem:[#allocation5 + $0x518] sm:$0xff]
    %v654 = vld [vmem:[#allocation5 + $0x520] sm:$0xff]
    %v655 = vld [vmem:[#allocation5 + $0x528] sm:$0xff]
    %v656 = vld [vmem:[#allocation5 + $0x530] sm:$0xff]
    %v657 = vld [vmem:[#allocation5 + $0x538] sm:$0xff]
    %v658 = vld [vmem:[#allocation5 + $0x540] sm:$0xff]
    %v659 = vld [vmem:[#allocation5 + $0x548] sm:$0xff]
    %v660 = vld [vmem:[#allocation5 + $0x550] sm:$0xff]
    %v661 = vld [vmem:[#allocation5 + $0x558] sm:$0xff]
    %v662 = vld [vmem:[#allocation5 + $0x560] sm:$0xff]
    %v663 = vld [vmem:[#allocation5 + $0x568] sm:$0xff]
    %v664 = vld [vmem:[#allocation5 + $0x570] sm:$0xff]
    %v665 = vld [vmem:[#allocation5 + $0x578] sm:$0xff]
    %v666 = vld [vmem:[#allocation5 + $0x580] sm:$0xff]
    %v667 = vld [vmem:[#allocation5 + $0x588] sm:$0xff]
    %v668 = vld [vmem:[#allocation5 + $0x590] sm:$0xff]
    %v669 = vld [vmem:[#allocation5 + $0x598] sm:$0xff]
    %v670 = vld [vmem:[#allocation5 + $0x5a0] sm:$0xff]
    %v671 = vld [vmem:[#allocation5 + $0x5a8] sm:$0xff]
    %v672 = vld [vmem:[#allocation5 + $0x5b0] sm:$0xff]
    %v673 = vld [vmem:[#allocation5 + $0x5b8] sm:$0xff]
    %v674 = vld [vmem:[#allocation5 + $0x5c0] sm:$0xff]
    %v675 = vld [vmem:[#allocation5 + $0x5c8] sm:$0xff]
    %v676 = vld [vmem:[#allocation5 + $0x5d0] sm:$0xff]
    %v677 = vld [vmem:[#allocation5 + $0x5d8] sm:$0xff]
    %v678 = vld [vmem:[#allocation5 + $0x5e0] sm:$0xff]
    %v679 = vld [vmem:[#allocation5 + $0x5e8] sm:$0xff]
    %v680 = vld [vmem:[#allocation5 + $0x5f0] sm:$0xff]
    %v681 = vld [vmem:[#allocation5 + $0x5f8] sm:$0xff]
    %v682 = vld [vmem:[#allocation5 + $0x600] sm:$0xff]
    %v683 = vld [vmem:[#allocation5 + $0x608] sm:$0xff]
    %v684 = vld [vmem:[#allocation5 + $0x610] sm:$0xff]
    %v685 = vld [vmem:[#allocation5 + $0x618] sm:$0xff]
    %v686 = vld [vmem:[#allocation5 + $0x620] sm:$0xff]
    %v687 = vld [vmem:[#allocation5 + $0x628] sm:$0xff]
    %v688 = vld [vmem:[#allocation5 + $0x630] sm:$0xff]
    %v689 = vld [vmem:[#allocation5 + $0x638] sm:$0xff]
    %v690 = vld [vmem:[#allocation5 + $0x640] sm:$0xff]
    %v691 = vld [vmem:[#allocation5 + $0x648] sm:$0xff]
    %v692 = vld [vmem:[#allocation5 + $0x650] sm:$0xff]
    %v693 = vld [vmem:[#allocation5 + $0x658] sm:$0xff]
    %v694 = vld [vmem:[#allocation5 + $0x660] sm:$0xff]
    %v695 = vld [vmem:[#allocation5 + $0x668] sm:$0xff]
    %v696 = vld [vmem:[#allocation5 + $0x670] sm:$0xff]
    %v697 = vld [vmem:[#allocation5 + $0x678] sm:$0xff]
    %v698 = vld [vmem:[#allocation5 + $0x680] sm:$0xff]
    %v699 = vld [vmem:[#allocation5 + $0x688] sm:$0xff]
    %v700 = vld [vmem:[#allocation5 + $0x690] sm:$0xff]
    %v701 = vld [vmem:[#allocation5 + $0x698] sm:$0xff]
    %v702 = vld [vmem:[#allocation5 + $0x6a0] sm:$0xff]
    %v703 = vld [vmem:[#allocation5 + $0x6a8] sm:$0xff]
    %v704 = vld [vmem:[#allocation5 + $0x6b0] sm:$0xff]
    %v705 = vld [vmem:[#allocation5 + $0x6b8] sm:$0xff]
    %v706 = vld [vmem:[#allocation5 + $0x6c0] sm:$0xff]
    %v707 = vld [vmem:[#allocation5 + $0x6c8] sm:$0xff]
    %v708 = vld [vmem:[#allocation5 + $0x6d0] sm:$0xff]
    %v709 = vld [vmem:[#allocation5 + $0x6d8] sm:$0xff]
    %v710 = vld [vmem:[#allocation5 + $0x6e0] sm:$0xff]
    %v711 = vld [vmem:[#allocation5 + $0x6e8] sm:$0xff]
    %v712 = vld [vmem:[#allocation5 + $0x6f0] sm:$0xff]
    %v713 = vld [vmem:[#allocation5 + $0x6f8] sm:$0xff]
    %v714 = vld [vmem:[#allocation5 + $0x700] sm:$0xff]
    %v715 = vld [vmem:[#allocation5 + $0x708] sm:$0xff]
    %v716 = vld [vmem:[#allocation5 + $0x710] sm:$0xff]
    %v717 = vld [vmem:[#allocation5 + $0x718] sm:$0xff]
    %v718 = vld [vmem:[#allocation5 + $0x720] sm:$0xff]
    %v719 = vld [vmem:[#allocation5 + $0x728] sm:$0xff]
    %v720 = vld [vmem:[#allocation5 + $0x730] sm:$0xff]
    %v721 = vld [vmem:[#allocation5 + $0x738] sm:$0xff]
    %v722 = vld [vmem:[#allocation5 + $0x740] sm:$0xff]
    %v723 = vld [vmem:[#allocation5 + $0x748] sm:$0xff]
    %v724 = vld [vmem:[#allocation5 + $0x750] sm:$0xff]
    %v725 = vld [vmem:[#allocation5 + $0x758] sm:$0xff]
    %v726 = vld [vmem:[#allocation5 + $0x760] sm:$0xff]
    %v727 = vld [vmem:[#allocation5 + $0x768] sm:$0xff]
    %v728 = vld [vmem:[#allocation5 + $0x770] sm:$0xff]
    %v729 = vld [vmem:[#allocation5 + $0x778] sm:$0xff]
    %v730 = vld [vmem:[#allocation5 + $0x780] sm:$0xff]
    %v731 = vld [vmem:[#allocation5 + $0x788] sm:$0xff]
    %v732 = vld [vmem:[#allocation5 + $0x790] sm:$0xff]
    %v733 = vld [vmem:[#allocation5 + $0x798] sm:$0xff]
    %v734 = vld [vmem:[#allocation5 + $0x7a0] sm:$0xff]
    %v735 = vld [vmem:[#allocation5 + $0x7a8] sm:$0xff]
    %v736 = vld [vmem:[#allocation5 + $0x7b0] sm:$0xff]
    %v737 = vld [vmem:[#allocation5 + $0x7b8] sm:$0xff]
    %v738 = vld [vmem:[#allocation5 + $0x7c0] sm:$0xff]
    %v739 = vld [vmem:[#allocation5 + $0x7c8] sm:$0xff]
    %v740 = vld [vmem:[#allocation5 + $0x7d0] sm:$0xff]
    %v741 = vld [vmem:[#allocation5 + $0x7d8] sm:$0xff]
    %v742 = vld [vmem:[#allocation5 + $0x7e0] sm:$0xff]
    %v743 = vld [vmem:[#allocation5 + $0x7e8] sm:$0xff]
    %v744 = vld [vmem:[#allocation5 + $0x7f0] sm:$0xff]
    %v745 = vld [vmem:[#allocation5 + $0x7f8] sm:$0xff]
    %v746 = vld [vmem:[%s4] sm:$0xf]
    %v747 = vpack.c.bf16 %v482, %v482
    %v748 = vpack.c.bf16 %v483, %v483
    %v749 = vpack.c.bf16 %v484, %v484
    %v750 = vpack.c.bf16 %v485, %v485
    %v751 = vpack.c.bf16 %v486, %v486
    %v752 = vpack.c.bf16 %v487, %v487
    %v753 = vpack.c.bf16 %v488, %v488
    %v754 = vpack.c.bf16 %v489, %v489
    %v756 = vlaneseq
    %v757 = vshrl.u32 %v756, 7
    %v758 = vsub.s32 0, %v757
    %v759 = vrot.slane %v746, %v758
    %v760 = vlaneseq
    %v761 = vshrl.u32 %v760, 7
    %v762 = vsub.s32 1, %v761
    %v763 = vrot.slane %v746, %v762
    %v764 = vlaneseq
    %v765 = vshrl.u32 %v764, 7
    %v766 = vsub.s32 2, %v765
    %v767 = vrot.slane %v746, %v766
    %v768 = vlaneseq
    %v769 = vshrl.u32 %v768, 7
    %v770 = vsub.s32 3, %v769
    %v771 = vrot.slane %v746, %v770
    %v1032 = vunpack.c.l.b16 %v490
    %v1033 = vunpack.c.h.b16 %v490
    %v1034 = vunpack.c.l.b16 %v491
    %v1035 = vunpack.c.h.b16 %v491
    %v1036 = vunpack.c.l.b16 %v492
    %v1037 = vunpack.c.h.b16 %v492
    %v1038 = vunpack.c.l.b16 %v493
    %v1039 = vunpack.c.h.b16 %v493
    %v1040 = vunpack.c.l.b16 %v494
    %v1041 = vunpack.c.h.b16 %v494
    %v1042 = vunpack.c.l.b16 %v495
    %v1043 = vunpack.c.h.b16 %v495
    %v1044 = vunpack.c.l.b16 %v496
    %v1045 = vunpack.c.h.b16 %v496
    %v1046 = vunpack.c.l.b16 %v497
    %v1047 = vunpack.c.h.b16 %v497
    %v1048 = vunpack.c.l.b16 %v498
    %v1049 = vunpack.c.h.b16 %v498
    %v1050 = vunpack.c.l.b16 %v499
    %v1051 = vunpack.c.h.b16 %v499
    %v1052 = vunpack.c.l.b16 %v500
    %v1053 = vunpack.c.h.b16 %v500
    %v1054 = vunpack.c.l.b16 %v501
    %v1055 = vunpack.c.h.b16 %v501
    %v1056 = vunpack.c.l.b16 %v502
    %v1057 = vunpack.c.h.b16 %v502
    %v1058 = vunpack.c.l.b16 %v503
    %v1059 = vunpack.c.h.b16 %v503
    %v1060 = vunpack.c.l.b16 %v504
    %v1061 = vunpack.c.h.b16 %v504
    %v1062 = vunpack.c.l.b16 %v505
    %v1063 = vunpack.c.h.b16 %v505
    %v1064 = vunpack.c.l.b16 %v506
    %v1065 = vunpack.c.h.b16 %v506
    %v1066 = vunpack.c.l.b16 %v507
    %v1067 = vunpack.c.h.b16 %v507
    %v1068 = vunpack.c.l.b16 %v508
    %v1069 = vunpack.c.h.b16 %v508
    %v1070 = vunpack.c.l.b16 %v509
    %v1071 = vunpack.c.h.b16 %v509
    %v1072 = vunpack.c.l.b16 %v510
    %v1073 = vunpack.c.h.b16 %v510
    %v1074 = vunpack.c.l.b16 %v511
    %v1075 = vunpack.c.h.b16 %v511
    %v1076 = vunpack.c.l.b16 %v512
    %v1077 = vunpack.c.h.b16 %v512
    %v1078 = vunpack.c.l.b16 %v513
    %v1079 = vunpack.c.h.b16 %v513
    %v1080 = vunpack.c.l.b16 %v514
    %v1081 = vunpack.c.h.b16 %v514
    %v1082 = vunpack.c.l.b16 %v515
    %v1083 = vunpack.c.h.b16 %v515
    %v1084 = vunpack.c.l.b16 %v516
    %v1085 = vunpack.c.h.b16 %v516
    %v1086 = vunpack.c.l.b16 %v517
    %v1087 = vunpack.c.h.b16 %v517
    %v1088 = vunpack.c.l.b16 %v518
    %v1089 = vunpack.c.h.b16 %v518
    %v1090 = vunpack.c.l.b16 %v519
    %v1091 = vunpack.c.h.b16 %v519
    %v1092 = vunpack.c.l.b16 %v520
    %v1093 = vunpack.c.h.b16 %v520
    %v1094 = vunpack.c.l.b16 %v521
    %v1095 = vunpack.c.h.b16 %v521
    %v1096 = vunpack.c.l.b16 %v522
    %v1097 = vunpack.c.h.b16 %v522
    %v1098 = vunpack.c.l.b16 %v523
    %v1099 = vunpack.c.h.b16 %v523
    %v1100 = vunpack.c.l.b16 %v524
    %v1101 = vunpack.c.h.b16 %v524
    %v1102 = vunpack.c.l.b16 %v525
    %v1103 = vunpack.c.h.b16 %v525
    %v1104 = vunpack.c.l.b16 %v526
    %v1105 = vunpack.c.h.b16 %v526
    %v1106 = vunpack.c.l.b16 %v527
    %v1107 = vunpack.c.h.b16 %v527
    %v1108 = vunpack.c.l.b16 %v528
    %v1109 = vunpack.c.h.b16 %v528
    %v1110 = vunpack.c.l.b16 %v529
    %v1111 = vunpack.c.h.b16 %v529
    %v1112 = vunpack.c.l.b16 %v530
    %v1113 = vunpack.c.h.b16 %v530
    %v1114 = vunpack.c.l.b16 %v531
    %v1115 = vunpack.c.h.b16 %v531
    %v1116 = vunpack.c.l.b16 %v532
    %v1117 = vunpack.c.h.b16 %v532
    %v1118 = vunpack.c.l.b16 %v533
    %v1119 = vunpack.c.h.b16 %v533
    %v1120 = vunpack.c.l.b16 %v534
    %v1121 = vunpack.c.h.b16 %v534
    %v1122 = vunpack.c.l.b16 %v535
    %v1123 = vunpack.c.h.b16 %v535
    %v1124 = vunpack.c.l.b16 %v536
    %v1125 = vunpack.c.h.b16 %v536
    %v1126 = vunpack.c.l.b16 %v537
    %v1127 = vunpack.c.h.b16 %v537
    %v1128 = vunpack.c.l.b16 %v538
    %v1129 = vunpack.c.h.b16 %v538
    %v1130 = vunpack.c.l.b16 %v539
    %v1131 = vunpack.c.h.b16 %v539
    %v1132 = vunpack.c.l.b16 %v540
    %v1133 = vunpack.c.h.b16 %v540
    %v1134 = vunpack.c.l.b16 %v541
    %v1135 = vunpack.c.h.b16 %v541
    %v1136 = vunpack.c.l.b16 %v542
    %v1137 = vunpack.c.h.b16 %v542
    %v1138 = vunpack.c.l.b16 %v543
    %v1139 = vunpack.c.h.b16 %v543
    %v1140 = vunpack.c.l.b16 %v544
    %v1141 = vunpack.c.h.b16 %v544
    %v1142 = vunpack.c.l.b16 %v545
    %v1143 = vunpack.c.h.b16 %v545
    %v1144 = vunpack.c.l.b16 %v546
    %v1145 = vunpack.c.h.b16 %v546
    %v1146 = vunpack.c.l.b16 %v547
    %v1147 = vunpack.c.h.b16 %v547
    %v1148 = vunpack.c.l.b16 %v548
    %v1149 = vunpack.c.h.b16 %v548
    %v1150 = vunpack.c.l.b16 %v549
    %v1151 = vunpack.c.h.b16 %v549
    %v1152 = vunpack.c.l.b16 %v550
    %v1153 = vunpack.c.h.b16 %v550
    %v1154 = vunpack.c.l.b16 %v551
    %v1155 = vunpack.c.h.b16 %v551
    %v1156 = vunpack.c.l.b16 %v552
    %v1157 = vunpack.c.h.b16 %v552
    %v1158 = vunpack.c.l.b16 %v553
    %v1159 = vunpack.c.h.b16 %v553
    %v1160 = vunpack.c.l.b16 %v554
    %v1161 = vunpack.c.h.b16 %v554
    %v1162 = vunpack.c.l.b16 %v555
    %v1163 = vunpack.c.h.b16 %v555
    %v1164 = vunpack.c.l.b16 %v556
    %v1165 = vunpack.c.h.b16 %v556
    %v1166 = vunpack.c.l.b16 %v557
    %v1167 = vunpack.c.h.b16 %v557
    %v1168 = vunpack.c.l.b16 %v558
    %v1169 = vunpack.c.h.b16 %v558
    %v1170 = vunpack.c.l.b16 %v559
    %v1171 = vunpack.c.h.b16 %v559
    %v1172 = vunpack.c.l.b16 %v560
    %v1173 = vunpack.c.h.b16 %v560
    %v1174 = vunpack.c.l.b16 %v561
    %v1175 = vunpack.c.h.b16 %v561
    %v1176 = vunpack.c.l.b16 %v562
    %v1177 = vunpack.c.h.b16 %v562
    %v1178 = vunpack.c.l.b16 %v563
    %v1179 = vunpack.c.h.b16 %v563
    %v1180 = vunpack.c.l.b16 %v564
    %v1181 = vunpack.c.h.b16 %v564
    %v1182 = vunpack.c.l.b16 %v565
    %v1183 = vunpack.c.h.b16 %v565
    %v1184 = vunpack.c.l.b16 %v566
    %v1185 = vunpack.c.h.b16 %v566
    %v1186 = vunpack.c.l.b16 %v567
    %v1187 = vunpack.c.h.b16 %v567
    %v1188 = vunpack.c.l.b16 %v568
    %v1189 = vunpack.c.h.b16 %v568
    %v1190 = vunpack.c.l.b16 %v569
    %v1191 = vunpack.c.h.b16 %v569
    %v1192 = vunpack.c.l.b16 %v570
    %v1193 = vunpack.c.h.b16 %v570
    %v1194 = vunpack.c.l.b16 %v571
    %v1195 = vunpack.c.h.b16 %v571
    %v1196 = vunpack.c.l.b16 %v572
    %v1197 = vunpack.c.h.b16 %v572
    %v1198 = vunpack.c.l.b16 %v573
    %v1199 = vunpack.c.h.b16 %v573
    %v1200 = vunpack.c.l.b16 %v574
    %v1201 = vunpack.c.h.b16 %v574
    %v1202 = vunpack.c.l.b16 %v575
    %v1203 = vunpack.c.h.b16 %v575
    %v1204 = vunpack.c.l.b16 %v576
    %v1205 = vunpack.c.h.b16 %v576
    %v1206 = vunpack.c.l.b16 %v577
    %v1207 = vunpack.c.h.b16 %v577
    %v1208 = vunpack.c.l.b16 %v578
    %v1209 = vunpack.c.h.b16 %v578
    %v1210 = vunpack.c.l.b16 %v579
    %v1211 = vunpack.c.h.b16 %v579
    %v1212 = vunpack.c.l.b16 %v580
    %v1213 = vunpack.c.h.b16 %v580
    %v1214 = vunpack.c.l.b16 %v581
    %v1215 = vunpack.c.h.b16 %v581
    %v1216 = vunpack.c.l.b16 %v582
    %v1217 = vunpack.c.h.b16 %v582
    %v1218 = vunpack.c.l.b16 %v583
    %v1219 = vunpack.c.h.b16 %v583
    %v1220 = vunpack.c.l.b16 %v584
    %v1221 = vunpack.c.h.b16 %v584
    %v1222 = vunpack.c.l.b16 %v585
    %v1223 = vunpack.c.h.b16 %v585
    %v1224 = vunpack.c.l.b16 %v586
    %v1225 = vunpack.c.h.b16 %v586
    %v1226 = vunpack.c.l.b16 %v587
    %v1227 = vunpack.c.h.b16 %v587
    %v1228 = vunpack.c.l.b16 %v588
    %v1229 = vunpack.c.h.b16 %v588
    %v1230 = vunpack.c.l.b16 %v589
    %v1231 = vunpack.c.h.b16 %v589
    %v1232 = vunpack.c.l.b16 %v590
    %v1233 = vunpack.c.h.b16 %v590
    %v1234 = vunpack.c.l.b16 %v591
    %v1235 = vunpack.c.h.b16 %v591
    %v1236 = vunpack.c.l.b16 %v592
    %v1237 = vunpack.c.h.b16 %v592
    %v1238 = vunpack.c.l.b16 %v593
    %v1239 = vunpack.c.h.b16 %v593
    %v1240 = vunpack.c.l.b16 %v594
    %v1241 = vunpack.c.h.b16 %v594
    %v1242 = vunpack.c.l.b16 %v595
    %v1243 = vunpack.c.h.b16 %v595
    %v1244 = vunpack.c.l.b16 %v596
    %v1245 = vunpack.c.h.b16 %v596
    %v1246 = vunpack.c.l.b16 %v597
    %v1247 = vunpack.c.h.b16 %v597
    %v1248 = vunpack.c.l.b16 %v598
    %v1249 = vunpack.c.h.b16 %v598
    %v1250 = vunpack.c.l.b16 %v599
    %v1251 = vunpack.c.h.b16 %v599
    %v1252 = vunpack.c.l.b16 %v600
    %v1253 = vunpack.c.h.b16 %v600
    %v1254 = vunpack.c.l.b16 %v601
    %v1255 = vunpack.c.h.b16 %v601
    %v1256 = vunpack.c.l.b16 %v602
    %v1257 = vunpack.c.h.b16 %v602
    %v1258 = vunpack.c.l.b16 %v603
    %v1259 = vunpack.c.h.b16 %v603
    %v1260 = vunpack.c.l.b16 %v604
    %v1261 = vunpack.c.h.b16 %v604
    %v1262 = vunpack.c.l.b16 %v605
    %v1263 = vunpack.c.h.b16 %v605
    %v1264 = vunpack.c.l.b16 %v606
    %v1265 = vunpack.c.h.b16 %v606
    %v1266 = vunpack.c.l.b16 %v607
    %v1267 = vunpack.c.h.b16 %v607
    %v1268 = vunpack.c.l.b16 %v608
    %v1269 = vunpack.c.h.b16 %v608
    %v1270 = vunpack.c.l.b16 %v609
    %v1271 = vunpack.c.h.b16 %v609
    %v1272 = vunpack.c.l.b16 %v610
    %v1273 = vunpack.c.h.b16 %v610
    %v1274 = vunpack.c.l.b16 %v611
    %v1275 = vunpack.c.h.b16 %v611
    %v1276 = vunpack.c.l.b16 %v612
    %v1277 = vunpack.c.h.b16 %v612
    %v1278 = vunpack.c.l.b16 %v613
    %v1279 = vunpack.c.h.b16 %v613
    %v1280 = vunpack.c.l.b16 %v614
    %v1281 = vunpack.c.h.b16 %v614
    %v1282 = vunpack.c.l.b16 %v615
    %v1283 = vunpack.c.h.b16 %v615
    %v1284 = vunpack.c.l.b16 %v616
    %v1285 = vunpack.c.h.b16 %v616
    %v1286 = vunpack.c.l.b16 %v617
    %v1287 = vunpack.c.h.b16 %v617
    %v1288 = vunpack.c.l.b16 %v618
    %v1289 = vunpack.c.h.b16 %v618
    %v1290 = vunpack.c.l.b16 %v619
    %v1291 = vunpack.c.h.b16 %v619
    %v1292 = vunpack.c.l.b16 %v620
    %v1293 = vunpack.c.h.b16 %v620
    %v1294 = vunpack.c.l.b16 %v621
    %v1295 = vunpack.c.h.b16 %v621
    %v1296 = vunpack.c.l.b16 %v622
    %v1297 = vunpack.c.h.b16 %v622
    %v1298 = vunpack.c.l.b16 %v623
    %v1299 = vunpack.c.h.b16 %v623
    %v1300 = vunpack.c.l.b16 %v624
    %v1301 = vunpack.c.h.b16 %v624
    %v1302 = vunpack.c.l.b16 %v625
    %v1303 = vunpack.c.h.b16 %v625
    %v1304 = vunpack.c.l.b16 %v626
    %v1305 = vunpack.c.h.b16 %v626
    %v1306 = vunpack.c.l.b16 %v627
    %v1307 = vunpack.c.h.b16 %v627
    %v1308 = vunpack.c.l.b16 %v628
    %v1309 = vunpack.c.h.b16 %v628
    %v1310 = vunpack.c.l.b16 %v629
    %v1311 = vunpack.c.h.b16 %v629
    %v1312 = vunpack.c.l.b16 %v630
    %v1313 = vunpack.c.h.b16 %v630
    %v1314 = vunpack.c.l.b16 %v631
    %v1315 = vunpack.c.h.b16 %v631
    %v1316 = vunpack.c.l.b16 %v632
    %v1317 = vunpack.c.h.b16 %v632
    %v1318 = vunpack.c.l.b16 %v633
    %v1319 = vunpack.c.h.b16 %v633
    %v1320 = vunpack.c.l.b16 %v634
    %v1321 = vunpack.c.h.b16 %v634
    %v1322 = vunpack.c.l.b16 %v635
    %v1323 = vunpack.c.h.b16 %v635
    %v1324 = vunpack.c.l.b16 %v636
    %v1325 = vunpack.c.h.b16 %v636
    %v1326 = vunpack.c.l.b16 %v637
    %v1327 = vunpack.c.h.b16 %v637
    %v1328 = vunpack.c.l.b16 %v638
    %v1329 = vunpack.c.h.b16 %v638
    %v1330 = vunpack.c.l.b16 %v639
    %v1331 = vunpack.c.h.b16 %v639
    %v1332 = vunpack.c.l.b16 %v640
    %v1333 = vunpack.c.h.b16 %v640
    %v1334 = vunpack.c.l.b16 %v641
    %v1335 = vunpack.c.h.b16 %v641
    %v1336 = vunpack.c.l.b16 %v642
    %v1337 = vunpack.c.h.b16 %v642
    %v1338 = vunpack.c.l.b16 %v643
    %v1339 = vunpack.c.h.b16 %v643
    %v1340 = vunpack.c.l.b16 %v644
    %v1341 = vunpack.c.h.b16 %v644
    %v1342 = vunpack.c.l.b16 %v645
    %v1343 = vunpack.c.h.b16 %v645
    %v1344 = vunpack.c.l.b16 %v646
    %v1345 = vunpack.c.h.b16 %v646
    %v1346 = vunpack.c.l.b16 %v647
    %v1347 = vunpack.c.h.b16 %v647
    %v1348 = vunpack.c.l.b16 %v648
    %v1349 = vunpack.c.h.b16 %v648
    %v1350 = vunpack.c.l.b16 %v649
    %v1351 = vunpack.c.h.b16 %v649
    %v1352 = vunpack.c.l.b16 %v650
    %v1353 = vunpack.c.h.b16 %v650
    %v1354 = vunpack.c.l.b16 %v651
    %v1355 = vunpack.c.h.b16 %v651
    %v1356 = vunpack.c.l.b16 %v652
    %v1357 = vunpack.c.h.b16 %v652
    %v1358 = vunpack.c.l.b16 %v653
    %v1359 = vunpack.c.h.b16 %v653
    %v1360 = vunpack.c.l.b16 %v654
    %v1361 = vunpack.c.h.b16 %v654
    %v1362 = vunpack.c.l.b16 %v655
    %v1363 = vunpack.c.h.b16 %v655
    %v1364 = vunpack.c.l.b16 %v656
    %v1365 = vunpack.c.h.b16 %v656
    %v1366 = vunpack.c.l.b16 %v657
    %v1367 = vunpack.c.h.b16 %v657
    %v1368 = vunpack.c.l.b16 %v658
    %v1369 = vunpack.c.h.b16 %v658
    %v1370 = vunpack.c.l.b16 %v659
    %v1371 = vunpack.c.h.b16 %v659
    %v1372 = vunpack.c.l.b16 %v660
    %v1373 = vunpack.c.h.b16 %v660
    %v1374 = vunpack.c.l.b16 %v661
    %v1375 = vunpack.c.h.b16 %v661
    %v1376 = vunpack.c.l.b16 %v662
    %v1377 = vunpack.c.h.b16 %v662
    %v1378 = vunpack.c.l.b16 %v663
    %v1379 = vunpack.c.h.b16 %v663
    %v1380 = vunpack.c.l.b16 %v664
    %v1381 = vunpack.c.h.b16 %v664
    %v1382 = vunpack.c.l.b16 %v665
    %v1383 = vunpack.c.h.b16 %v665
    %v1384 = vunpack.c.l.b16 %v666
    %v1385 = vunpack.c.h.b16 %v666
    %v1386 = vunpack.c.l.b16 %v667
    %v1387 = vunpack.c.h.b16 %v667
    %v1388 = vunpack.c.l.b16 %v668
    %v1389 = vunpack.c.h.b16 %v668
    %v1390 = vunpack.c.l.b16 %v669
    %v1391 = vunpack.c.h.b16 %v669
    %v1392 = vunpack.c.l.b16 %v670
    %v1393 = vunpack.c.h.b16 %v670
    %v1394 = vunpack.c.l.b16 %v671
    %v1395 = vunpack.c.h.b16 %v671
    %v1396 = vunpack.c.l.b16 %v672
    %v1397 = vunpack.c.h.b16 %v672
    %v1398 = vunpack.c.l.b16 %v673
    %v1399 = vunpack.c.h.b16 %v673
    %v1400 = vunpack.c.l.b16 %v674
    %v1401 = vunpack.c.h.b16 %v674
    %v1402 = vunpack.c.l.b16 %v675
    %v1403 = vunpack.c.h.b16 %v675
    %v1404 = vunpack.c.l.b16 %v676
    %v1405 = vunpack.c.h.b16 %v676
    %v1406 = vunpack.c.l.b16 %v677
    %v1407 = vunpack.c.h.b16 %v677
    %v1408 = vunpack.c.l.b16 %v678
    %v1409 = vunpack.c.h.b16 %v678
    %v1410 = vunpack.c.l.b16 %v679
    %v1411 = vunpack.c.h.b16 %v679
    %v1412 = vunpack.c.l.b16 %v680
    %v1413 = vunpack.c.h.b16 %v680
    %v1414 = vunpack.c.l.b16 %v681
    %v1415 = vunpack.c.h.b16 %v681
    %v1416 = vunpack.c.l.b16 %v682
    %v1417 = vunpack.c.h.b16 %v682
    %v1418 = vunpack.c.l.b16 %v683
    %v1419 = vunpack.c.h.b16 %v683
    %v1420 = vunpack.c.l.b16 %v684
    %v1421 = vunpack.c.h.b16 %v684
    %v1422 = vunpack.c.l.b16 %v685
    %v1423 = vunpack.c.h.b16 %v685
    %v1424 = vunpack.c.l.b16 %v686
    %v1425 = vunpack.c.h.b16 %v686
    %v1426 = vunpack.c.l.b16 %v687
    %v1427 = vunpack.c.h.b16 %v687
    %v1428 = vunpack.c.l.b16 %v688
    %v1429 = vunpack.c.h.b16 %v688
    %v1430 = vunpack.c.l.b16 %v689
    %v1431 = vunpack.c.h.b16 %v689
    %v1432 = vunpack.c.l.b16 %v690
    %v1433 = vunpack.c.h.b16 %v690
    %v1434 = vunpack.c.l.b16 %v691
    %v1435 = vunpack.c.h.b16 %v691
    %v1436 = vunpack.c.l.b16 %v692
    %v1437 = vunpack.c.h.b16 %v692
    %v1438 = vunpack.c.l.b16 %v693
    %v1439 = vunpack.c.h.b16 %v693
    %v1440 = vunpack.c.l.b16 %v694
    %v1441 = vunpack.c.h.b16 %v694
    %v1442 = vunpack.c.l.b16 %v695
    %v1443 = vunpack.c.h.b16 %v695
    %v1444 = vunpack.c.l.b16 %v696
    %v1445 = vunpack.c.h.b16 %v696
    %v1446 = vunpack.c.l.b16 %v697
    %v1447 = vunpack.c.h.b16 %v697
    %v1448 = vunpack.c.l.b16 %v698
    %v1449 = vunpack.c.h.b16 %v698
    %v1450 = vunpack.c.l.b16 %v699
    %v1451 = vunpack.c.h.b16 %v699
    %v1452 = vunpack.c.l.b16 %v700
    %v1453 = vunpack.c.h.b16 %v700
    %v1454 = vunpack.c.l.b16 %v701
    %v1455 = vunpack.c.h.b16 %v701
    %v1456 = vunpack.c.l.b16 %v702
    %v1457 = vunpack.c.h.b16 %v702
    %v1458 = vunpack.c.l.b16 %v703
    %v1459 = vunpack.c.h.b16 %v703
    %v1460 = vunpack.c.l.b16 %v704
    %v1461 = vunpack.c.h.b16 %v704
    %v1462 = vunpack.c.l.b16 %v705
    %v1463 = vunpack.c.h.b16 %v705
    %v1464 = vunpack.c.l.b16 %v706
    %v1465 = vunpack.c.h.b16 %v706
    %v1466 = vunpack.c.l.b16 %v707
    %v1467 = vunpack.c.h.b16 %v707
    %v1468 = vunpack.c.l.b16 %v708
    %v1469 = vunpack.c.h.b16 %v708
    %v1470 = vunpack.c.l.b16 %v709
    %v1471 = vunpack.c.h.b16 %v709
    %v1472 = vunpack.c.l.b16 %v710
    %v1473 = vunpack.c.h.b16 %v710
    %v1474 = vunpack.c.l.b16 %v711
    %v1475 = vunpack.c.h.b16 %v711
    %v1476 = vunpack.c.l.b16 %v712
    %v1477 = vunpack.c.h.b16 %v712
    %v1478 = vunpack.c.l.b16 %v713
    %v1479 = vunpack.c.h.b16 %v713
    %v1480 = vunpack.c.l.b16 %v714
    %v1481 = vunpack.c.h.b16 %v714
    %v1482 = vunpack.c.l.b16 %v715
    %v1483 = vunpack.c.h.b16 %v715
    %v1484 = vunpack.c.l.b16 %v716
    %v1485 = vunpack.c.h.b16 %v716
    %v1486 = vunpack.c.l.b16 %v717
    %v1487 = vunpack.c.h.b16 %v717
    %v1488 = vunpack.c.l.b16 %v718
    %v1489 = vunpack.c.h.b16 %v718
    %v1490 = vunpack.c.l.b16 %v719
    %v1491 = vunpack.c.h.b16 %v719
    %v1492 = vunpack.c.l.b16 %v720
    %v1493 = vunpack.c.h.b16 %v720
    %v1494 = vunpack.c.l.b16 %v721
    %v1495 = vunpack.c.h.b16 %v721
    %v1496 = vunpack.c.l.b16 %v722
    %v1497 = vunpack.c.h.b16 %v722
    %v1498 = vunpack.c.l.b16 %v723
    %v1499 = vunpack.c.h.b16 %v723
    %v1500 = vunpack.c.l.b16 %v724
    %v1501 = vunpack.c.h.b16 %v724
    %v1502 = vunpack.c.l.b16 %v725
    %v1503 = vunpack.c.h.b16 %v725
    %v1504 = vunpack.c.l.b16 %v726
    %v1505 = vunpack.c.h.b16 %v726
    %v1506 = vunpack.c.l.b16 %v727
    %v1507 = vunpack.c.h.b16 %v727
    %v1508 = vunpack.c.l.b16 %v728
    %v1509 = vunpack.c.h.b16 %v728
    %v1510 = vunpack.c.l.b16 %v729
    %v1511 = vunpack.c.h.b16 %v729
    %v1512 = vunpack.c.l.b16 %v730
    %v1513 = vunpack.c.h.b16 %v730
    %v1514 = vunpack.c.l.b16 %v731
    %v1515 = vunpack.c.h.b16 %v731
    %v1516 = vunpack.c.l.b16 %v732
    %v1517 = vunpack.c.h.b16 %v732
    %v1518 = vunpack.c.l.b16 %v733
    %v1519 = vunpack.c.h.b16 %v733
    %v1520 = vunpack.c.l.b16 %v734
    %v1521 = vunpack.c.h.b16 %v734
    %v1522 = vunpack.c.l.b16 %v735
    %v1523 = vunpack.c.h.b16 %v735
    %v1524 = vunpack.c.l.b16 %v736
    %v1525 = vunpack.c.h.b16 %v736
    %v1526 = vunpack.c.l.b16 %v737
    %v1527 = vunpack.c.h.b16 %v737
    %v1528 = vunpack.c.l.b16 %v738
    %v1529 = vunpack.c.h.b16 %v738
    %v1530 = vunpack.c.l.b16 %v739
    %v1531 = vunpack.c.h.b16 %v739
    %v1532 = vunpack.c.l.b16 %v740
    %v1533 = vunpack.c.h.b16 %v740
    %v1534 = vunpack.c.l.b16 %v741
    %v1535 = vunpack.c.h.b16 %v741
    %v1536 = vunpack.c.l.b16 %v742
    %v1537 = vunpack.c.h.b16 %v742
    %v1538 = vunpack.c.l.b16 %v743
    %v1539 = vunpack.c.h.b16 %v743
    %v1540 = vunpack.c.l.b16 %v744
    %v1541 = vunpack.c.h.b16 %v744
    %v1542 = vunpack.c.l.b16 %v745
    %v1543 = vunpack.c.h.b16 %v745
    %v1544 = vpack.c.b16 %v1036, %v1032
    %v1545 = vpack.c.b16 %v1037, %v1033
    %v1546 = vpack.c.b16 %v1038, %v1034
    %v1547 = vpack.c.b16 %v1039, %v1035
    %v1548 = vpack.c.b16 %v1044, %v1040
    %v1549 = vpack.c.b16 %v1045, %v1041
    %v1550 = vpack.c.b16 %v1046, %v1042
    %v1551 = vpack.c.b16 %v1047, %v1043
    %v1552 = vpack.c.b16 %v1052, %v1048
    %v1553 = vpack.c.b16 %v1053, %v1049
    %v1554 = vpack.c.b16 %v1054, %v1050
    %v1555 = vpack.c.b16 %v1055, %v1051
    %v1556 = vpack.c.b16 %v1060, %v1056
    %v1557 = vpack.c.b16 %v1061, %v1057
    %v1558 = vpack.c.b16 %v1062, %v1058
    %v1559 = vpack.c.b16 %v1063, %v1059
    %v1560 = vpack.c.b16 %v1068, %v1064
    %v1561 = vpack.c.b16 %v1069, %v1065
    %v1562 = vpack.c.b16 %v1070, %v1066
    %v1563 = vpack.c.b16 %v1071, %v1067
    %v1564 = vpack.c.b16 %v1076, %v1072
    %v1565 = vpack.c.b16 %v1077, %v1073
    %v1566 = vpack.c.b16 %v1078, %v1074
    %v1567 = vpack.c.b16 %v1079, %v1075
    %v1568 = vpack.c.b16 %v1084, %v1080
    %v1569 = vpack.c.b16 %v1085, %v1081
    %v1570 = vpack.c.b16 %v1086, %v1082
    %v1571 = vpack.c.b16 %v1087, %v1083
    %v1572 = vpack.c.b16 %v1092, %v1088
    %v1573 = vpack.c.b16 %v1093, %v1089
    %v1574 = vpack.c.b16 %v1094, %v1090
    %v1575 = vpack.c.b16 %v1095, %v1091
    %v1576 = vpack.c.b16 %v1100, %v1096
    %v1577 = vpack.c.b16 %v1101, %v1097
    %v1578 = vpack.c.b16 %v1102, %v1098
    %v1579 = vpack.c.b16 %v1103, %v1099
    %v1580 = vpack.c.b16 %v1108, %v1104
    %v1581 = vpack.c.b16 %v1109, %v1105
    %v1582 = vpack.c.b16 %v1110, %v1106
    %v1583 = vpack.c.b16 %v1111, %v1107
    %v1584 = vpack.c.b16 %v1116, %v1112
    %v1585 = vpack.c.b16 %v1117, %v1113
    %v1586 = vpack.c.b16 %v1118, %v1114
    %v1587 = vpack.c.b16 %v1119, %v1115
    %v1588 = vpack.c.b16 %v1124, %v1120
    %v1589 = vpack.c.b16 %v1125, %v1121
    %v1590 = vpack.c.b16 %v1126, %v1122
    %v1591 = vpack.c.b16 %v1127, %v1123
    %v1592 = vpack.c.b16 %v1132, %v1128
    %v1593 = vpack.c.b16 %v1133, %v1129
    %v1594 = vpack.c.b16 %v1134, %v1130
    %v1595 = vpack.c.b16 %v1135, %v1131
    %v1596 = vpack.c.b16 %v1140, %v1136
    %v1597 = vpack.c.b16 %v1141, %v1137
    %v1598 = vpack.c.b16 %v1142, %v1138
    %v1599 = vpack.c.b16 %v1143, %v1139
    %v1600 = vpack.c.b16 %v1148, %v1144
    %v1601 = vpack.c.b16 %v1149, %v1145
    %v1602 = vpack.c.b16 %v1150, %v1146
    %v1603 = vpack.c.b16 %v1151, %v1147
    %v1604 = vpack.c.b16 %v1156, %v1152
    %v1605 = vpack.c.b16 %v1157, %v1153
    %v1606 = vpack.c.b16 %v1158, %v1154
    %v1607 = vpack.c.b16 %v1159, %v1155
    %v1608 = vpack.c.b16 %v1164, %v1160
    %v1609 = vpack.c.b16 %v1165, %v1161
    %v1610 = vpack.c.b16 %v1166, %v1162
    %v1611 = vpack.c.b16 %v1167, %v1163
    %v1612 = vpack.c.b16 %v1172, %v1168
    %v1613 = vpack.c.b16 %v1173, %v1169
    %v1614 = vpack.c.b16 %v1174, %v1170
    %v1615 = vpack.c.b16 %v1175, %v1171
    %v1616 = vpack.c.b16 %v1180, %v1176
    %v1617 = vpack.c.b16 %v1181, %v1177
    %v1618 = vpack.c.b16 %v1182, %v1178
    %v1619 = vpack.c.b16 %v1183, %v1179
    %v1620 = vpack.c.b16 %v1188, %v1184
    %v1621 = vpack.c.b16 %v1189, %v1185
    %v1622 = vpack.c.b16 %v1190, %v1186
    %v1623 = vpack.c.b16 %v1191, %v1187
    %v1624 = vpack.c.b16 %v1196, %v1192
    %v1625 = vpack.c.b16 %v1197, %v1193
    %v1626 = vpack.c.b16 %v1198, %v1194
    %v1627 = vpack.c.b16 %v1199, %v1195
    %v1628 = vpack.c.b16 %v1204, %v1200
    %v1629 = vpack.c.b16 %v1205, %v1201
    %v1630 = vpack.c.b16 %v1206, %v1202
    %v1631 = vpack.c.b16 %v1207, %v1203
    %v1632 = vpack.c.b16 %v1212, %v1208
    %v1633 = vpack.c.b16 %v1213, %v1209
    %v1634 = vpack.c.b16 %v1214, %v1210
    %v1635 = vpack.c.b16 %v1215, %v1211
    %v1636 = vpack.c.b16 %v1220, %v1216
    %v1637 = vpack.c.b16 %v1221, %v1217
    %v1638 = vpack.c.b16 %v1222, %v1218
    %v1639 = vpack.c.b16 %v1223, %v1219
    %v1640 = vpack.c.b16 %v1228, %v1224
    %v1641 = vpack.c.b16 %v1229, %v1225
    %v1642 = vpack.c.b16 %v1230, %v1226
    %v1643 = vpack.c.b16 %v1231, %v1227
    %v1644 = vpack.c.b16 %v1236, %v1232
    %v1645 = vpack.c.b16 %v1237, %v1233
    %v1646 = vpack.c.b16 %v1238, %v1234
    %v1647 = vpack.c.b16 %v1239, %v1235
    %v1648 = vpack.c.b16 %v1244, %v1240
    %v1649 = vpack.c.b16 %v1245, %v1241
    %v1650 = vpack.c.b16 %v1246, %v1242
    %v1651 = vpack.c.b16 %v1247, %v1243
    %v1652 = vpack.c.b16 %v1252, %v1248
    %v1653 = vpack.c.b16 %v1253, %v1249
    %v1654 = vpack.c.b16 %v1254, %v1250
    %v1655 = vpack.c.b16 %v1255, %v1251
    %v1656 = vpack.c.b16 %v1260, %v1256
    %v1657 = vpack.c.b16 %v1261, %v1257
    %v1658 = vpack.c.b16 %v1262, %v1258
    %v1659 = vpack.c.b16 %v1263, %v1259
    %v1660 = vpack.c.b16 %v1268, %v1264
    %v1661 = vpack.c.b16 %v1269, %v1265
    %v1662 = vpack.c.b16 %v1270, %v1266
    %v1663 = vpack.c.b16 %v1271, %v1267
    %v1664 = vpack.c.b16 %v1276, %v1272
    %v1665 = vpack.c.b16 %v1277, %v1273
    %v1666 = vpack.c.b16 %v1278, %v1274
    %v1667 = vpack.c.b16 %v1279, %v1275
    %v1668 = vpack.c.b16 %v1284, %v1280
    %v1669 = vpack.c.b16 %v1285, %v1281
    %v1670 = vpack.c.b16 %v1286, %v1282
    %v1671 = vpack.c.b16 %v1287, %v1283
    %v1672 = vpack.c.b16 %v1292, %v1288
    %v1673 = vpack.c.b16 %v1293, %v1289
    %v1674 = vpack.c.b16 %v1294, %v1290
    %v1675 = vpack.c.b16 %v1295, %v1291
    %v1676 = vpack.c.b16 %v1300, %v1296
    %v1677 = vpack.c.b16 %v1301, %v1297
    %v1678 = vpack.c.b16 %v1302, %v1298
    %v1679 = vpack.c.b16 %v1303, %v1299
    %v1680 = vpack.c.b16 %v1308, %v1304
    %v1681 = vpack.c.b16 %v1309, %v1305
    %v1682 = vpack.c.b16 %v1310, %v1306
    %v1683 = vpack.c.b16 %v1311, %v1307
    %v1684 = vpack.c.b16 %v1316, %v1312
    %v1685 = vpack.c.b16 %v1317, %v1313
    %v1686 = vpack.c.b16 %v1318, %v1314
    %v1687 = vpack.c.b16 %v1319, %v1315
    %v1688 = vpack.c.b16 %v1324, %v1320
    %v1689 = vpack.c.b16 %v1325, %v1321
    %v1690 = vpack.c.b16 %v1326, %v1322
    %v1691 = vpack.c.b16 %v1327, %v1323
    %v1692 = vpack.c.b16 %v1332, %v1328
    %v1693 = vpack.c.b16 %v1333, %v1329
    %v1694 = vpack.c.b16 %v1334, %v1330
    %v1695 = vpack.c.b16 %v1335, %v1331
    %v1696 = vpack.c.b16 %v1340, %v1336
    %v1697 = vpack.c.b16 %v1341, %v1337
    %v1698 = vpack.c.b16 %v1342, %v1338
    %v1699 = vpack.c.b16 %v1343, %v1339
    %v1700 = vpack.c.b16 %v1348, %v1344
    %v1701 = vpack.c.b16 %v1349, %v1345
    %v1702 = vpack.c.b16 %v1350, %v1346
    %v1703 = vpack.c.b16 %v1351, %v1347
    %v1704 = vpack.c.b16 %v1356, %v1352
    %v1705 = vpack.c.b16 %v1357, %v1353
    %v1706 = vpack.c.b16 %v1358, %v1354
    %v1707 = vpack.c.b16 %v1359, %v1355
    %v1708 = vpack.c.b16 %v1364, %v1360
    %v1709 = vpack.c.b16 %v1365, %v1361
    %v1710 = vpack.c.b16 %v1366, %v1362
    %v1711 = vpack.c.b16 %v1367, %v1363
    %v1712 = vpack.c.b16 %v1372, %v1368
    %v1713 = vpack.c.b16 %v1373, %v1369
    %v1714 = vpack.c.b16 %v1374, %v1370
    %v1715 = vpack.c.b16 %v1375, %v1371
    %v1716 = vpack.c.b16 %v1380, %v1376
    %v1717 = vpack.c.b16 %v1381, %v1377
    %v1718 = vpack.c.b16 %v1382, %v1378
    %v1719 = vpack.c.b16 %v1383, %v1379
    %v1720 = vpack.c.b16 %v1388, %v1384
    %v1721 = vpack.c.b16 %v1389, %v1385
    %v1722 = vpack.c.b16 %v1390, %v1386
    %v1723 = vpack.c.b16 %v1391, %v1387
    %v1724 = vpack.c.b16 %v1396, %v1392
    %v1725 = vpack.c.b16 %v1397, %v1393
    %v1726 = vpack.c.b16 %v1398, %v1394
    %v1727 = vpack.c.b16 %v1399, %v1395
    %v1728 = vpack.c.b16 %v1404, %v1400
    %v1729 = vpack.c.b16 %v1405, %v1401
    %v1730 = vpack.c.b16 %v1406, %v1402
    %v1731 = vpack.c.b16 %v1407, %v1403
    %v1732 = vpack.c.b16 %v1412, %v1408
    %v1733 = vpack.c.b16 %v1413, %v1409
    %v1734 = vpack.c.b16 %v1414, %v1410
    %v1735 = vpack.c.b16 %v1415, %v1411
    %v1736 = vpack.c.b16 %v1420, %v1416
    %v1737 = vpack.c.b16 %v1421, %v1417
    %v1738 = vpack.c.b16 %v1422, %v1418
    %v1739 = vpack.c.b16 %v1423, %v1419
    %v1740 = vpack.c.b16 %v1428, %v1424
    %v1741 = vpack.c.b16 %v1429, %v1425
    %v1742 = vpack.c.b16 %v1430, %v1426
    %v1743 = vpack.c.b16 %v1431, %v1427
    %v1744 = vpack.c.b16 %v1436, %v1432
    %v1745 = vpack.c.b16 %v1437, %v1433
    %v1746 = vpack.c.b16 %v1438, %v1434
    %v1747 = vpack.c.b16 %v1439, %v1435
    %v1748 = vpack.c.b16 %v1444, %v1440
    %v1749 = vpack.c.b16 %v1445, %v1441
    %v1750 = vpack.c.b16 %v1446, %v1442
    %v1751 = vpack.c.b16 %v1447, %v1443
    %v1752 = vpack.c.b16 %v1452, %v1448
    %v1753 = vpack.c.b16 %v1453, %v1449
    %v1754 = vpack.c.b16 %v1454, %v1450
    %v1755 = vpack.c.b16 %v1455, %v1451
    %v1756 = vpack.c.b16 %v1460, %v1456
    %v1757 = vpack.c.b16 %v1461, %v1457
    %v1758 = vpack.c.b16 %v1462, %v1458
    %v1759 = vpack.c.b16 %v1463, %v1459
    %v1760 = vpack.c.b16 %v1468, %v1464
    %v1761 = vpack.c.b16 %v1469, %v1465
    %v1762 = vpack.c.b16 %v1470, %v1466
    %v1763 = vpack.c.b16 %v1471, %v1467
    %v1764 = vpack.c.b16 %v1476, %v1472
    %v1765 = vpack.c.b16 %v1477, %v1473
    %v1766 = vpack.c.b16 %v1478, %v1474
    %v1767 = vpack.c.b16 %v1479, %v1475
    %v1768 = vpack.c.b16 %v1484, %v1480
    %v1769 = vpack.c.b16 %v1485, %v1481
    %v1770 = vpack.c.b16 %v1486, %v1482
    %v1771 = vpack.c.b16 %v1487, %v1483
    %v1772 = vpack.c.b16 %v1492, %v1488
    %v1773 = vpack.c.b16 %v1493, %v1489
    %v1774 = vpack.c.b16 %v1494, %v1490
    %v1775 = vpack.c.b16 %v1495, %v1491
    %v1776 = vpack.c.b16 %v1500, %v1496
    %v1777 = vpack.c.b16 %v1501, %v1497
    %v1778 = vpack.c.b16 %v1502, %v1498
    %v1779 = vpack.c.b16 %v1503, %v1499
    %v1780 = vpack.c.b16 %v1508, %v1504
    %v1781 = vpack.c.b16 %v1509, %v1505
    %v1782 = vpack.c.b16 %v1510, %v1506
    %v1783 = vpack.c.b16 %v1511, %v1507
    %v1784 = vpack.c.b16 %v1516, %v1512
    %v1785 = vpack.c.b16 %v1517, %v1513
    %v1786 = vpack.c.b16 %v1518, %v1514
    %v1787 = vpack.c.b16 %v1519, %v1515
    %v1788 = vpack.c.b16 %v1524, %v1520
    %v1789 = vpack.c.b16 %v1525, %v1521
    %v1790 = vpack.c.b16 %v1526, %v1522
    %v1791 = vpack.c.b16 %v1527, %v1523
    %v1792 = vpack.c.b16 %v1532, %v1528
    %v1793 = vpack.c.b16 %v1533, %v1529
    %v1794 = vpack.c.b16 %v1534, %v1530
    %v1795 = vpack.c.b16 %v1535, %v1531
    %v1796 = vpack.c.b16 %v1540, %v1536
    %v1797 = vpack.c.b16 %v1541, %v1537
    %v1798 = vpack.c.b16 %v1542, %v1538
    %v1799 = vpack.c.b16 %v1543, %v1539
    %2056 = vmatprep.subr.bf16.mxu0 %v1573
    %2057 = vmatpush1.bf16.msra.mxu0 %v1572
    %2058 = vmatprep.subr.bf16.mxu0 %v1569
    %2059 = vmatpush1.bf16.msra.mxu0 %v1568
    %2060 = vmatprep.subr.bf16.mxu0 %v1565
    %2061 = vmatpush1.bf16.msra.mxu0 %v1564
    %2062 = vmatprep.subr.bf16.mxu0 %v1561
    %2063 = vmatpush1.bf16.msra.mxu0 %v1560
    %2064 = vmatprep.subr.bf16.mxu0 %v1557
    %2065 = vmatpush1.bf16.msra.mxu0 %v1556
    %2066 = vmatprep.subr.bf16.mxu0 %v1553
    %2067 = vmatpush1.bf16.msra.mxu0 %v1552
    %2068 = vmatprep.subr.bf16.mxu0 %v1549
    %2069 = vmatpush1.bf16.msra.mxu0 %v1548
    %2070 = vmatprep.subr.bf16.mxu0 %v1545
    %2071 = vmatpush1.bf16.msra.mxu0 %v1544
    %2072 = vmatprep.subr.bf16.mxu0 %v1605
    %2073 = vmatpush2.bf16.msra.mxu0 %v1604
    %2074 = vmatprep.subr.bf16.mxu0 %v1601
    %2075 = vmatpush2.bf16.msra.mxu0 %v1600
    %2076 = vmatprep.subr.bf16.mxu0 %v1597
    %2077 = vmatpush2.bf16.msra.mxu0 %v1596
    %2078 = vmatprep.subr.bf16.mxu0 %v1593
    %2079 = vmatpush2.bf16.msra.mxu0 %v1592
    %2080 = vmatprep.subr.bf16.mxu0 %v1589
    %2081 = vmatpush2.bf16.msra.mxu0 %v1588
    %2082 = vmatprep.subr.bf16.mxu0 %v1585
    %2083 = vmatpush2.bf16.msra.mxu0 %v1584
    %2084 = vmatprep.subr.bf16.mxu0 %v1581
    %2085 = vmatpush2.bf16.msra.mxu0 %v1580
    %2086 = vmatprep.subr.bf16.mxu0 %v1577
    %2087 = vmatpush2.bf16.msra.mxu0 %v1576
    %2088 = vmatprep.mubr.bf16.mxu0 %v748
    %2089 = vmatmul.mubr.bf16.gmra.mxu0 %v747
    %v2090 = vpop.f32.mrf.mxu0
    %v2091 = vadd.f32 %v759, %v2090
    %v2092 = vpop.f32.mrf.mxu0
    %v2093 = vadd.f32 %v763, %v2092
    %v2094 = vpop.f32.mrf.mxu0
    %v2095 = vpop.f32.mrf.mxu0
    %2096 = vdwg.mxu0
    %2097 = vmatprep.subr.bf16.mxu0 %v1637
    %2098 = vmatpush1.bf16.msra.mxu0 %v1636
    %2099 = vmatprep.subr.bf16.mxu0 %v1633
    %2100 = vmatpush1.bf16.msra.mxu0 %v1632
    %2101 = vmatprep.subr.bf16.mxu0 %v1629
    %2102 = vmatpush1.bf16.msra.mxu0 %v1628
    %2103 = vmatprep.subr.bf16.mxu0 %v1625
    %2104 = vmatpush1.bf16.msra.mxu0 %v1624
    %2105 = vmatprep.subr.bf16.mxu0 %v1621
    %2106 = vmatpush1.bf16.msra.mxu0 %v1620
    %2107 = vmatprep.subr.bf16.mxu0 %v1617
    %2108 = vmatpush1.bf16.msra.mxu0 %v1616
    %2109 = vmatprep.subr.bf16.mxu0 %v1613
    %2110 = vmatpush1.bf16.msra.mxu0 %v1612
    %2111 = vmatprep.subr.bf16.mxu0 %v1609
    %2112 = vmatpush1.bf16.msra.mxu0 %v1608
    %2113 = vmatprep.subr.bf16.mxu0 %v1669
    %2114 = vmatpush2.bf16.msra.mxu0 %v1668
    %2115 = vmatprep.subr.bf16.mxu0 %v1665
    %2116 = vmatpush2.bf16.msra.mxu0 %v1664
    %2117 = vmatprep.subr.bf16.mxu0 %v1661
    %2118 = vmatpush2.bf16.msra.mxu0 %v1660
    %2119 = vmatprep.subr.bf16.mxu0 %v1657
    %2120 = vmatpush2.bf16.msra.mxu0 %v1656
    %2121 = vmatprep.subr.bf16.mxu0 %v1653
    %2122 = vmatpush2.bf16.msra.mxu0 %v1652
    %2123 = vmatprep.subr.bf16.mxu0 %v1649
    %2124 = vmatpush2.bf16.msra.mxu0 %v1648
    %2125 = vmatprep.subr.bf16.mxu0 %v1645
    %2126 = vmatpush2.bf16.msra.mxu0 %v1644
    %2127 = vmatprep.subr.bf16.mxu0 %v1641
    %2128 = vmatpush2.bf16.msra.mxu0 %v1640
    %2129 = vmatprep.mubr.bf16.mxu0 %v750
    %2130 = vmatmul.mubr.bf16.gmra.mxu0 %v749
    %v2131 = vpop.f32.mrf.mxu0
    %v2132 = vadd.f32 %v2091, %v2131
    %v2133 = vpop.f32.mrf.mxu0
    %v2134 = vadd.f32 %v2093, %v2133
    %v2135 = vpop.f32.mrf.mxu0
    %v2136 = vpop.f32.mrf.mxu0
    %2137 = vdwg.mxu0
    %2138 = vmatprep.subr.bf16.mxu0 %v1701
    %2139 = vmatpush1.bf16.msra.mxu0 %v1700
    %2140 = vmatprep.subr.bf16.mxu0 %v1697
    %2141 = vmatpush1.bf16.msra.mxu0 %v1696
    %2142 = vmatprep.subr.bf16.mxu0 %v1693
    %2143 = vmatpush1.bf16.msra.mxu0 %v1692
    %2144 = vmatprep.subr.bf16.mxu0 %v1689
    %2145 = vmatpush1.bf16.msra.mxu0 %v1688
    %2146 = vmatprep.subr.bf16.mxu0 %v1685
    %2147 = vmatpush1.bf16.msra.mxu0 %v1684
    %2148 = vmatprep.subr.bf16.mxu0 %v1681
    %2149 = vmatpush1.bf16.msra.mxu0 %v1680
    %2150 = vmatprep.subr.bf16.mxu0 %v1677
    %2151 = vmatpush1.bf16.msra.mxu0 %v1676
    %2152 = vmatprep.subr.bf16.mxu0 %v1673
    %2153 = vmatpush1.bf16.msra.mxu0 %v1672
    %2154 = vmatprep.subr.bf16.mxu0 %v1733
    %2155 = vmatpush2.bf16.msra.mxu0 %v1732
    %2156 = vmatprep.subr.bf16.mxu0 %v1729
    %2157 = vmatpush2.bf16.msra.mxu0 %v1728
    %2158 = vmatprep.subr.bf16.mxu0 %v1725
    %2159 = vmatpush2.bf16.msra.mxu0 %v1724
    %2160 = vmatprep.subr.bf16.mxu0 %v1721
    %2161 = vmatpush2.bf16.msra.mxu0 %v1720
    %2162 = vmatprep.subr.bf16.mxu0 %v1717
    %2163 = vmatpush2.bf16.msra.mxu0 %v1716
    %2164 = vmatprep.subr.bf16.mxu0 %v1713
    %2165 = vmatpush2.bf16.msra.mxu0 %v1712
    %2166 = vmatprep.subr.bf16.mxu0 %v1709
    %2167 = vmatpush2.bf16.msra.mxu0 %v1708
    %2168 = vmatprep.subr.bf16.mxu0 %v1705
    %2169 = vmatpush2.bf16.msra.mxu0 %v1704
    %2170 = vmatprep.mubr.bf16.mxu0 %v752
    %2171 = vmatmul.mubr.bf16.gmra.mxu0 %v751
    %v2172 = vpop.f32.mrf.mxu0
    %v2173 = vadd.f32 %v2132, %v2172
    %v2174 = vpop.f32.mrf.mxu0
    %v2175 = vadd.f32 %v2134, %v2174
    %v2176 = vpop.f32.mrf.mxu0
    %v2177 = vpop.f32.mrf.mxu0
    %2178 = vdwg.mxu0
    %2179 = vmatprep.subr.bf16.mxu0 %v1765
    %2180 = vmatpush1.bf16.msra.mxu0 %v1764
    %2181 = vmatprep.subr.bf16.mxu0 %v1761
    %2182 = vmatpush1.bf16.msra.mxu0 %v1760
    %2183 = vmatprep.subr.bf16.mxu0 %v1757
    %2184 = vmatpush1.bf16.msra.mxu0 %v1756
    %2185 = vmatprep.subr.bf16.mxu0 %v1753
    %2186 = vmatpush1.bf16.msra.mxu0 %v1752
    %2187 = vmatprep.subr.bf16.mxu0 %v1749
    %2188 = vmatpush1.bf16.msra.mxu0 %v1748
    %2189 = vmatprep.subr.bf16.mxu0 %v1745
    %2190 = vmatpush1.bf16.msra.mxu0 %v1744
    %2191 = vmatprep.subr.bf16.mxu0 %v1741
    %2192 = vmatpush1.bf16.msra.mxu0 %v1740
    %2193 = vmatprep.subr.bf16.mxu0 %v1737
    %2194 = vmatpush1.bf16.msra.mxu0 %v1736
    %2195 = vmatprep.subr.bf16.mxu0 %v1797
    %2196 = vmatpush2.bf16.msra.mxu0 %v1796
    %2197 = vmatprep.subr.bf16.mxu0 %v1793
    %2198 = vmatpush2.bf16.msra.mxu0 %v1792
    %2199 = vmatprep.subr.bf16.mxu0 %v1789
    %2200 = vmatpush2.bf16.msra.mxu0 %v1788
    %2201 = vmatprep.subr.bf16.mxu0 %v1785
    %2202 = vmatpush2.bf16.msra.mxu0 %v1784
    %2203 = vmatprep.subr.bf16.mxu0 %v1781
    %2204 = vmatpush2.bf16.msra.mxu0 %v1780
    %2205 = vmatprep.subr.bf16.mxu0 %v1777
    %2206 = vmatpush2.bf16.msra.mxu0 %v1776
    %2207 = vmatprep.subr.bf16.mxu0 %v1773
    %2208 = vmatpush2.bf16.msra.mxu0 %v1772
    %2209 = vmatprep.subr.bf16.mxu0 %v1769
    %2210 = vmatpush2.bf16.msra.mxu0 %v1768
    %2211 = vmatprep.mubr.bf16.mxu0 %v754
    %2212 = vmatmul.mubr.bf16.gmra.mxu0 %v753
    %v2213 = vpop.f32.mrf.mxu0
    %v2214 = vadd.f32 %v2173, %v2213
    %v2215 = vpop.f32.mrf.mxu0
    %v2216 = vadd.f32 %v2175, %v2215
    %v2217 = vpop.f32.mrf.mxu0
    %v2218 = vpop.f32.mrf.mxu0
    %2219 = vdwg.mxu0
    %2220 = vmatprep.subr.bf16.mxu0 %v1575
    %2221 = vmatpush1.bf16.msra.mxu0 %v1574
    %2222 = vmatprep.subr.bf16.mxu0 %v1571
    %2223 = vmatpush1.bf16.msra.mxu0 %v1570
    %2224 = vmatprep.subr.bf16.mxu0 %v1567
    %2225 = vmatpush1.bf16.msra.mxu0 %v1566
    %2226 = vmatprep.subr.bf16.mxu0 %v1563
    %2227 = vmatpush1.bf16.msra.mxu0 %v1562
    %2228 = vmatprep.subr.bf16.mxu0 %v1559
    %2229 = vmatpush1.bf16.msra.mxu0 %v1558
    %2230 = vmatprep.subr.bf16.mxu0 %v1555
    %2231 = vmatpush1.bf16.msra.mxu0 %v1554
    %2232 = vmatprep.subr.bf16.mxu0 %v1551
    %2233 = vmatpush1.bf16.msra.mxu0 %v1550
    %2234 = vmatprep.subr.bf16.mxu0 %v1547
    %2235 = vmatpush1.bf16.msra.mxu0 %v1546
    %2236 = vmatprep.subr.bf16.mxu0 %v1607
    %2237 = vmatpush2.bf16.msra.mxu0 %v1606
    %2238 = vmatprep.subr.bf16.mxu0 %v1603
    %2239 = vmatpush2.bf16.msra.mxu0 %v1602
    %2240 = vmatprep.subr.bf16.mxu0 %v1599
    %2241 = vmatpush2.bf16.msra.mxu0 %v1598
    %2242 = vmatprep.subr.bf16.mxu0 %v1595
    %2243 = vmatpush2.bf16.msra.mxu0 %v1594
    %2244 = vmatprep.subr.bf16.mxu0 %v1591
    %2245 = vmatpush2.bf16.msra.mxu0 %v1590
    %2246 = vmatprep.subr.bf16.mxu0 %v1587
    %2247 = vmatpush2.bf16.msra.mxu0 %v1586
    %2248 = vmatprep.subr.bf16.mxu0 %v1583
    %2249 = vmatpush2.bf16.msra.mxu0 %v1582
    %2250 = vmatprep.subr.bf16.mxu0 %v1579
    %2251 = vmatpush2.bf16.msra.mxu0 %v1578
    %2252 = vmatprep.mubr.bf16.mxu0 %v748
    %2253 = vmatmul.mubr.bf16.gmra.mxu0 %v747
    %v2254 = vpop.f32.mrf.mxu0
    %v2255 = vadd.f32 %v767, %v2254
    %v2256 = vpop.f32.mrf.mxu0
    %v2257 = vadd.f32 %v771, %v2256
    %v2258 = vpop.f32.mrf.mxu0
    %v2259 = vpop.f32.mrf.mxu0
    %2260 = vdwg.mxu0
    %2261 = vmatprep.subr.bf16.mxu0 %v1639
    %2262 = vmatpush1.bf16.msra.mxu0 %v1638
    %2263 = vmatprep.subr.bf16.mxu0 %v1635
    %2264 = vmatpush1.bf16.msra.mxu0 %v1634
    %2265 = vmatprep.subr.bf16.mxu0 %v1631
    %2266 = vmatpush1.bf16.msra.mxu0 %v1630
    %2267 = vmatprep.subr.bf16.mxu0 %v1627
    %2268 = vmatpush1.bf16.msra.mxu0 %v1626
    %2269 = vmatprep.subr.bf16.mxu0 %v1623
    %2270 = vmatpush1.bf16.msra.mxu0 %v1622
    %2271 = vmatprep.subr.bf16.mxu0 %v1619
    %2272 = vmatpush1.bf16.msra.mxu0 %v1618
    %2273 = vmatprep.subr.bf16.mxu0 %v1615
    %2274 = vmatpush1.bf16.msra.mxu0 %v1614
    %2275 = vmatprep.subr.bf16.mxu0 %v1611
    %2276 = vmatpush1.bf16.msra.mxu0 %v1610
    %2277 = vmatprep.subr.bf16.mxu0 %v1671
    %2278 = vmatpush2.bf16.msra.mxu0 %v1670
    %2279 = vmatprep.subr.bf16.mxu0 %v1667
    %2280 = vmatpush2.bf16.msra.mxu0 %v1666
    %2281 = vmatprep.subr.bf16.mxu0 %v1663
    %2282 = vmatpush2.bf16.msra.mxu0 %v1662
    %2283 = vmatprep.subr.bf16.mxu0 %v1659
    %2284 = vmatpush2.bf16.msra.mxu0 %v1658
    %2285 = vmatprep.subr.bf16.mxu0 %v1655
    %2286 = vmatpush2.bf16.msra.mxu0 %v1654
    %2287 = vmatprep.subr.bf16.mxu0 %v1651
    %2288 = vmatpush2.bf16.msra.mxu0 %v1650
    %2289 = vmatprep.subr.bf16.mxu0 %v1647
    %2290 = vmatpush2.bf16.msra.mxu0 %v1646
    %2291 = vmatprep.subr.bf16.mxu0 %v1643
    %2292 = vmatpush2.bf16.msra.mxu0 %v1642
    %2293 = vmatprep.mubr.bf16.mxu0 %v750
    %2294 = vmatmul.mubr.bf16.gmra.mxu0 %v749
    %v2295 = vpop.f32.mrf.mxu0
    %v2296 = vadd.f32 %v2255, %v2295
    %v2297 = vpop.f32.mrf.mxu0
    %v2298 = vadd.f32 %v2257, %v2297
    %v2299 = vpop.f32.mrf.mxu0
    %v2300 = vpop.f32.mrf.mxu0
    %2301 = vdwg.mxu0
    %2302 = vmatprep.subr.bf16.mxu0 %v1703
    %2303 = vmatpush1.bf16.msra.mxu0 %v1702
    %2304 = vmatprep.subr.bf16.mxu0 %v1699
    %2305 = vmatpush1.bf16.msra.mxu0 %v1698
    %2306 = vmatprep.subr.bf16.mxu0 %v1695
    %2307 = vmatpush1.bf16.msra.mxu0 %v1694
    %2308 = vmatprep.subr.bf16.mxu0 %v1691
    %2309 = vmatpush1.bf16.msra.mxu0 %v1690
    %2310 = vmatprep.subr.bf16.mxu0 %v1687
    %2311 = vmatpush1.bf16.msra.mxu0 %v1686
    %2312 = vmatprep.subr.bf16.mxu0 %v1683
    %2313 = vmatpush1.bf16.msra.mxu0 %v1682
    %2314 = vmatprep.subr.bf16.mxu0 %v1679
    %2315 = vmatpush1.bf16.msra.mxu0 %v1678
    %2316 = vmatprep.subr.bf16.mxu0 %v1675
    %2317 = vmatpush1.bf16.msra.mxu0 %v1674
    %2318 = vmatprep.subr.bf16.mxu0 %v1735
    %2319 = vmatpush2.bf16.msra.mxu0 %v1734
    %2320 = vmatprep.subr.bf16.mxu0 %v1731
    %2321 = vmatpush2.bf16.msra.mxu0 %v1730
    %2322 = vmatprep.subr.bf16.mxu0 %v1727
    %2323 = vmatpush2.bf16.msra.mxu0 %v1726
    %2324 = vmatprep.subr.bf16.mxu0 %v1723
    %2325 = vmatpush2.bf16.msra.mxu0 %v1722
    %2326 = vmatprep.subr.bf16.mxu0 %v1719
    %2327 = vmatpush2.bf16.msra.mxu0 %v1718
    %2328 = vmatprep.subr.bf16.mxu0 %v1715
    %2329 = vmatpush2.bf16.msra.mxu0 %v1714
    %2330 = vmatprep.subr.bf16.mxu0 %v1711
    %2331 = vmatpush2.bf16.msra.mxu0 %v1710
    %2332 = vmatprep.subr.bf16.mxu0 %v1707
    %2333 = vmatpush2.bf16.msra.mxu0 %v1706
    %2334 = vmatprep.mubr.bf16.mxu0 %v752
    %2335 = vmatmul.mubr.bf16.gmra.mxu0 %v751
    %v2336 = vpop.f32.mrf.mxu0
    %v2337 = vadd.f32 %v2296, %v2336
    %v2338 = vpop.f32.mrf.mxu0
    %v2339 = vadd.f32 %v2298, %v2338
    %v2340 = vpop.f32.mrf.mxu0
    %v2341 = vpop.f32.mrf.mxu0
    %2342 = vdwg.mxu0
    %2343 = vmatprep.subr.bf16.mxu0 %v1767
    %2344 = vmatpush1.bf16.msra.mxu0 %v1766
    %2345 = vmatprep.subr.bf16.mxu0 %v1763
    %2346 = vmatpush1.bf16.msra.mxu0 %v1762
    %2347 = vmatprep.subr.bf16.mxu0 %v1759
    %2348 = vmatpush1.bf16.msra.mxu0 %v1758
    %2349 = vmatprep.subr.bf16.mxu0 %v1755
    %2350 = vmatpush1.bf16.msra.mxu0 %v1754
    %2351 = vmatprep.subr.bf16.mxu0 %v1751
    %2352 = vmatpush1.bf16.msra.mxu0 %v1750
    %2353 = vmatprep.subr.bf16.mxu0 %v1747
    %2354 = vmatpush1.bf16.msra.mxu0 %v1746
    %2355 = vmatprep.subr.bf16.mxu0 %v1743
    %2356 = vmatpush1.bf16.msra.mxu0 %v1742
    %2357 = vmatprep.subr.bf16.mxu0 %v1739
    %2358 = vmatpush1.bf16.msra.mxu0 %v1738
    %2359 = vmatprep.subr.bf16.mxu0 %v1799
    %2360 = vmatpush2.bf16.msra.mxu0 %v1798
    %2361 = vmatprep.subr.bf16.mxu0 %v1795
    %2362 = vmatpush2.bf16.msra.mxu0 %v1794
    %2363 = vmatprep.subr.bf16.mxu0 %v1791
    %2364 = vmatpush2.bf16.msra.mxu0 %v1790
    %2365 = vmatprep.subr.bf16.mxu0 %v1787
    %2366 = vmatpush2.bf16.msra.mxu0 %v1786
    %2367 = vmatprep.subr.bf16.mxu0 %v1783
    %2368 = vmatpush2.bf16.msra.mxu0 %v1782
    %2369 = vmatprep.subr.bf16.mxu0 %v1779
    %2370 = vmatpush2.bf16.msra.mxu0 %v1778
    %2371 = vmatprep.subr.bf16.mxu0 %v1775
    %2372 = vmatpush2.bf16.msra.mxu0 %v1774
    %2373 = vmatprep.subr.bf16.mxu0 %v1771
    %2374 = vmatpush2.bf16.msra.mxu0 %v1770
    %2375 = vmatprep.mubr.bf16.mxu0 %v754
    %2376 = vmatmul.mubr.bf16.gmra.mxu0 %v753
    %v2377 = vpop.f32.mrf.mxu0
    %v2378 = vadd.f32 %v2337, %v2377
    %v2379 = vpop.f32.mrf.mxu0
    %v2380 = vadd.f32 %v2339, %v2379
    %v2381 = vpop.f32.mrf.mxu0
    %v2382 = vpop.f32.mrf.mxu0
    %2383 = vdwg.mxu0
    %v2384 = vmax.f32 %v2214, 0.0
    %v2385 = vmax.f32 %v2216, 0.0
    %v2386 = vmax.f32 %v2378, 0.0
    %v2387 = vmax.f32 %v2380, 0.0
    %v2388 = vld [vmem:[#allocation7] sm:$0xff]
    %v2389 = vld [vmem:[#allocation7 + $0x8] sm:$0xff]
    %v2390 = vld [vmem:[#allocation7 + $0x10] sm:$0xff]
    %v2391 = vld [vmem:[#allocation7 + $0x18] sm:$0xff]
    %v2392 = vld [vmem:[#allocation7 + $0x20] sm:$0xff]
    %v2393 = vld [vmem:[#allocation7 + $0x28] sm:$0xff]
    %v2394 = vld [vmem:[#allocation7 + $0x30] sm:$0xff]
    %v2395 = vld [vmem:[#allocation7 + $0x38] sm:$0xff]
    %v2396 = vld [vmem:[#allocation7 + $0x40] sm:$0xff]
    %v2397 = vld [vmem:[#allocation7 + $0x48] sm:$0xff]
    %v2398 = vld [vmem:[#allocation7 + $0x50] sm:$0xff]
    %v2399 = vld [vmem:[#allocation7 + $0x58] sm:$0xff]
    %v2400 = vld [vmem:[#allocation7 + $0x60] sm:$0xff]
    %v2401 = vld [vmem:[#allocation7 + $0x68] sm:$0xff]
    %v2402 = vld [vmem:[#allocation7 + $0x70] sm:$0xff]
    %v2403 = vld [vmem:[#allocation7 + $0x78] sm:$0xff]
    %v2404 = vld [vmem:[#allocation7 + $0x80] sm:$0xff]
    %v2405 = vld [vmem:[#allocation7 + $0x88] sm:$0xff]
    %v2406 = vld [vmem:[#allocation7 + $0x90] sm:$0xff]
    %v2407 = vld [vmem:[#allocation7 + $0x98] sm:$0xff]
    %v2408 = vld [vmem:[#allocation7 + $0xa0] sm:$0xff]
    %v2409 = vld [vmem:[#allocation7 + $0xa8] sm:$0xff]
    %v2410 = vld [vmem:[#allocation7 + $0xb0] sm:$0xff]
    %v2411 = vld [vmem:[#allocation7 + $0xb8] sm:$0xff]
    %v2412 = vld [vmem:[#allocation7 + $0xc0] sm:$0xff]
    %v2413 = vld [vmem:[#allocation7 + $0xc8] sm:$0xff]
    %v2414 = vld [vmem:[#allocation7 + $0xd0] sm:$0xff]
    %v2415 = vld [vmem:[#allocation7 + $0xd8] sm:$0xff]
    %v2416 = vld [vmem:[#allocation7 + $0xe0] sm:$0xff]
    %v2417 = vld [vmem:[#allocation7 + $0xe8] sm:$0xff]
    %v2418 = vld [vmem:[#allocation7 + $0xf0] sm:$0xff]
    %v2419 = vld [vmem:[#allocation7 + $0xf8] sm:$0xff]
    %v2420 = vld [vmem:[#allocation7 + $0x100] sm:$0xff]
    %v2421 = vld [vmem:[#allocation7 + $0x108] sm:$0xff]
    %v2422 = vld [vmem:[#allocation7 + $0x110] sm:$0xff]
    %v2423 = vld [vmem:[#allocation7 + $0x118] sm:$0xff]
    %v2424 = vld [vmem:[#allocation7 + $0x120] sm:$0xff]
    %v2425 = vld [vmem:[#allocation7 + $0x128] sm:$0xff]
    %v2426 = vld [vmem:[#allocation7 + $0x130] sm:$0xff]
    %v2427 = vld [vmem:[#allocation7 + $0x138] sm:$0xff]
    %v2428 = vld [vmem:[#allocation7 + $0x140] sm:$0xff]
    %v2429 = vld [vmem:[#allocation7 + $0x148] sm:$0xff]
    %v2430 = vld [vmem:[#allocation7 + $0x150] sm:$0xff]
    %v2431 = vld [vmem:[#allocation7 + $0x158] sm:$0xff]
    %v2432 = vld [vmem:[#allocation7 + $0x160] sm:$0xff]
    %v2433 = vld [vmem:[#allocation7 + $0x168] sm:$0xff]
    %v2434 = vld [vmem:[#allocation7 + $0x170] sm:$0xff]
    %v2435 = vld [vmem:[#allocation7 + $0x178] sm:$0xff]
    %v2436 = vld [vmem:[#allocation7 + $0x180] sm:$0xff]
    %v2437 = vld [vmem:[#allocation7 + $0x188] sm:$0xff]
    %v2438 = vld [vmem:[#allocation7 + $0x190] sm:$0xff]
    %v2439 = vld [vmem:[#allocation7 + $0x198] sm:$0xff]
    %v2440 = vld [vmem:[#allocation7 + $0x1a0] sm:$0xff]
    %v2441 = vld [vmem:[#allocation7 + $0x1a8] sm:$0xff]
    %v2442 = vld [vmem:[#allocation7 + $0x1b0] sm:$0xff]
    %v2443 = vld [vmem:[#allocation7 + $0x1b8] sm:$0xff]
    %v2444 = vld [vmem:[#allocation7 + $0x1c0] sm:$0xff]
    %v2445 = vld [vmem:[#allocation7 + $0x1c8] sm:$0xff]
    %v2446 = vld [vmem:[#allocation7 + $0x1d0] sm:$0xff]
    %v2447 = vld [vmem:[#allocation7 + $0x1d8] sm:$0xff]
    %v2448 = vld [vmem:[#allocation7 + $0x1e0] sm:$0xff]
    %v2449 = vld [vmem:[#allocation7 + $0x1e8] sm:$0xff]
    %v2450 = vld [vmem:[#allocation7 + $0x1f0] sm:$0xff]
    %v2451 = vld [vmem:[#allocation7 + $0x1f8] sm:$0xff]
    %v2452 = vld [vmem:[#allocation7 + $0x200] sm:$0xff]
    %v2453 = vld [vmem:[#allocation7 + $0x208] sm:$0xff]
    %v2454 = vld [vmem:[#allocation7 + $0x210] sm:$0xff]
    %v2455 = vld [vmem:[#allocation7 + $0x218] sm:$0xff]
    %v2456 = vld [vmem:[#allocation7 + $0x220] sm:$0xff]
    %v2457 = vld [vmem:[#allocation7 + $0x228] sm:$0xff]
    %v2458 = vld [vmem:[#allocation7 + $0x230] sm:$0xff]
    %v2459 = vld [vmem:[#allocation7 + $0x238] sm:$0xff]
    %v2460 = vld [vmem:[#allocation7 + $0x240] sm:$0xff]
    %v2461 = vld [vmem:[#allocation7 + $0x248] sm:$0xff]
    %v2462 = vld [vmem:[#allocation7 + $0x250] sm:$0xff]
    %v2463 = vld [vmem:[#allocation7 + $0x258] sm:$0xff]
    %v2464 = vld [vmem:[#allocation7 + $0x260] sm:$0xff]
    %v2465 = vld [vmem:[#allocation7 + $0x268] sm:$0xff]
    %v2466 = vld [vmem:[#allocation7 + $0x270] sm:$0xff]
    %v2467 = vld [vmem:[#allocation7 + $0x278] sm:$0xff]
    %v2468 = vld [vmem:[#allocation7 + $0x280] sm:$0xff]
    %v2469 = vld [vmem:[#allocation7 + $0x288] sm:$0xff]
    %v2470 = vld [vmem:[#allocation7 + $0x290] sm:$0xff]
    %v2471 = vld [vmem:[#allocation7 + $0x298] sm:$0xff]
    %v2472 = vld [vmem:[#allocation7 + $0x2a0] sm:$0xff]
    %v2473 = vld [vmem:[#allocation7 + $0x2a8] sm:$0xff]
    %v2474 = vld [vmem:[#allocation7 + $0x2b0] sm:$0xff]
    %v2475 = vld [vmem:[#allocation7 + $0x2b8] sm:$0xff]
    %v2476 = vld [vmem:[#allocation7 + $0x2c0] sm:$0xff]
    %v2477 = vld [vmem:[#allocation7 + $0x2c8] sm:$0xff]
    %v2478 = vld [vmem:[#allocation7 + $0x2d0] sm:$0xff]
    %v2479 = vld [vmem:[#allocation7 + $0x2d8] sm:$0xff]
    %v2480 = vld [vmem:[#allocation7 + $0x2e0] sm:$0xff]
    %v2481 = vld [vmem:[#allocation7 + $0x2e8] sm:$0xff]
    %v2482 = vld [vmem:[#allocation7 + $0x2f0] sm:$0xff]
    %v2483 = vld [vmem:[#allocation7 + $0x2f8] sm:$0xff]
    %v2484 = vld [vmem:[#allocation7 + $0x300] sm:$0xff]
    %v2485 = vld [vmem:[#allocation7 + $0x308] sm:$0xff]
    %v2486 = vld [vmem:[#allocation7 + $0x310] sm:$0xff]
    %v2487 = vld [vmem:[#allocation7 + $0x318] sm:$0xff]
    %v2488 = vld [vmem:[#allocation7 + $0x320] sm:$0xff]
    %v2489 = vld [vmem:[#allocation7 + $0x328] sm:$0xff]
    %v2490 = vld [vmem:[#allocation7 + $0x330] sm:$0xff]
    %v2491 = vld [vmem:[#allocation7 + $0x338] sm:$0xff]
    %v2492 = vld [vmem:[#allocation7 + $0x340] sm:$0xff]
    %v2493 = vld [vmem:[#allocation7 + $0x348] sm:$0xff]
    %v2494 = vld [vmem:[#allocation7 + $0x350] sm:$0xff]
    %v2495 = vld [vmem:[#allocation7 + $0x358] sm:$0xff]
    %v2496 = vld [vmem:[#allocation7 + $0x360] sm:$0xff]
    %v2497 = vld [vmem:[#allocation7 + $0x368] sm:$0xff]
    %v2498 = vld [vmem:[#allocation7 + $0x370] sm:$0xff]
    %v2499 = vld [vmem:[#allocation7 + $0x378] sm:$0xff]
    %v2500 = vld [vmem:[#allocation7 + $0x380] sm:$0xff]
    %v2501 = vld [vmem:[#allocation7 + $0x388] sm:$0xff]
    %v2502 = vld [vmem:[#allocation7 + $0x390] sm:$0xff]
    %v2503 = vld [vmem:[#allocation7 + $0x398] sm:$0xff]
    %v2504 = vld [vmem:[#allocation7 + $0x3a0] sm:$0xff]
    %v2505 = vld [vmem:[#allocation7 + $0x3a8] sm:$0xff]
    %v2506 = vld [vmem:[#allocation7 + $0x3b0] sm:$0xff]
    %v2507 = vld [vmem:[#allocation7 + $0x3b8] sm:$0xff]
    %v2508 = vld [vmem:[#allocation7 + $0x3c0] sm:$0xff]
    %v2509 = vld [vmem:[#allocation7 + $0x3c8] sm:$0xff]
    %v2510 = vld [vmem:[#allocation7 + $0x3d0] sm:$0xff]
    %v2511 = vld [vmem:[#allocation7 + $0x3d8] sm:$0xff]
    %v2512 = vld [vmem:[#allocation7 + $0x3e0] sm:$0xff]
    %v2513 = vld [vmem:[#allocation7 + $0x3e8] sm:$0xff]
    %v2514 = vld [vmem:[#allocation7 + $0x3f0] sm:$0xff]
    %v2515 = vld [vmem:[#allocation7 + $0x3f8] sm:$0xff]
    %v2516 = vld [vmem:[%s6] sm:$0xf]
    %v2517 = vpack.c.bf16 %v2384, %v2384
    %v2518 = vpack.c.bf16 %v2385, %v2385
    %v2519 = vpack.c.bf16 %v2386, %v2386
    %v2520 = vpack.c.bf16 %v2387, %v2387
    %v2522 = vlaneseq
    %v2523 = vshrl.u32 %v2522, 7
    %v2524 = vsub.s32 0, %v2523
    %v2525 = vrot.slane %v2516, %v2524
    %v2526 = vlaneseq
    %v2527 = vshrl.u32 %v2526, 7
    %v2528 = vsub.s32 1, %v2527
    %v2529 = vrot.slane %v2516, %v2528
    %v2530 = vlaneseq
    %v2531 = vshrl.u32 %v2530, 7
    %v2532 = vsub.s32 2, %v2531
    %v2533 = vrot.slane %v2516, %v2532
    %v2534 = vlaneseq
    %v2535 = vshrl.u32 %v2534, 7
    %v2536 = vsub.s32 3, %v2535
    %v2537 = vrot.slane %v2516, %v2536
    %v2670 = vunpack.c.l.b16 %v2388
    %v2671 = vunpack.c.h.b16 %v2388
    %v2672 = vunpack.c.l.b16 %v2389
    %v2673 = vunpack.c.h.b16 %v2389
    %v2674 = vunpack.c.l.b16 %v2390
    %v2675 = vunpack.c.h.b16 %v2390
    %v2676 = vunpack.c.l.b16 %v2391
    %v2677 = vunpack.c.h.b16 %v2391
    %v2678 = vunpack.c.l.b16 %v2392
    %v2679 = vunpack.c.h.b16 %v2392
    %v2680 = vunpack.c.l.b16 %v2393
    %v2681 = vunpack.c.h.b16 %v2393
    %v2682 = vunpack.c.l.b16 %v2394
    %v2683 = vunpack.c.h.b16 %v2394
    %v2684 = vunpack.c.l.b16 %v2395
    %v2685 = vunpack.c.h.b16 %v2395
    %v2686 = vunpack.c.l.b16 %v2396
    %v2687 = vunpack.c.h.b16 %v2396
    %v2688 = vunpack.c.l.b16 %v2397
    %v2689 = vunpack.c.h.b16 %v2397
    %v2690 = vunpack.c.l.b16 %v2398
    %v2691 = vunpack.c.h.b16 %v2398
    %v2692 = vunpack.c.l.b16 %v2399
    %v2693 = vunpack.c.h.b16 %v2399
    %v2694 = vunpack.c.l.b16 %v2400
    %v2695 = vunpack.c.h.b16 %v2400
    %v2696 = vunpack.c.l.b16 %v2401
    %v2697 = vunpack.c.h.b16 %v2401
    %v2698 = vunpack.c.l.b16 %v2402
    %v2699 = vunpack.c.h.b16 %v2402
    %v2700 = vunpack.c.l.b16 %v2403
    %v2701 = vunpack.c.h.b16 %v2403
    %v2702 = vunpack.c.l.b16 %v2404
    %v2703 = vunpack.c.h.b16 %v2404
    %v2704 = vunpack.c.l.b16 %v2405
    %v2705 = vunpack.c.h.b16 %v2405
    %v2706 = vunpack.c.l.b16 %v2406
    %v2707 = vunpack.c.h.b16 %v2406
    %v2708 = vunpack.c.l.b16 %v2407
    %v2709 = vunpack.c.h.b16 %v2407
    %v2710 = vunpack.c.l.b16 %v2408
    %v2711 = vunpack.c.h.b16 %v2408
    %v2712 = vunpack.c.l.b16 %v2409
    %v2713 = vunpack.c.h.b16 %v2409
    %v2714 = vunpack.c.l.b16 %v2410
    %v2715 = vunpack.c.h.b16 %v2410
    %v2716 = vunpack.c.l.b16 %v2411
    %v2717 = vunpack.c.h.b16 %v2411
    %v2718 = vunpack.c.l.b16 %v2412
    %v2719 = vunpack.c.h.b16 %v2412
    %v2720 = vunpack.c.l.b16 %v2413
    %v2721 = vunpack.c.h.b16 %v2413
    %v2722 = vunpack.c.l.b16 %v2414
    %v2723 = vunpack.c.h.b16 %v2414
    %v2724 = vunpack.c.l.b16 %v2415
    %v2725 = vunpack.c.h.b16 %v2415
    %v2726 = vunpack.c.l.b16 %v2416
    %v2727 = vunpack.c.h.b16 %v2416
    %v2728 = vunpack.c.l.b16 %v2417
    %v2729 = vunpack.c.h.b16 %v2417
    %v2730 = vunpack.c.l.b16 %v2418
    %v2731 = vunpack.c.h.b16 %v2418
    %v2732 = vunpack.c.l.b16 %v2419
    %v2733 = vunpack.c.h.b16 %v2419
    %v2734 = vunpack.c.l.b16 %v2420
    %v2735 = vunpack.c.h.b16 %v2420
    %v2736 = vunpack.c.l.b16 %v2421
    %v2737 = vunpack.c.h.b16 %v2421
    %v2738 = vunpack.c.l.b16 %v2422
    %v2739 = vunpack.c.h.b16 %v2422
    %v2740 = vunpack.c.l.b16 %v2423
    %v2741 = vunpack.c.h.b16 %v2423
    %v2742 = vunpack.c.l.b16 %v2424
    %v2743 = vunpack.c.h.b16 %v2424
    %v2744 = vunpack.c.l.b16 %v2425
    %v2745 = vunpack.c.h.b16 %v2425
    %v2746 = vunpack.c.l.b16 %v2426
    %v2747 = vunpack.c.h.b16 %v2426
    %v2748 = vunpack.c.l.b16 %v2427
    %v2749 = vunpack.c.h.b16 %v2427
    %v2750 = vunpack.c.l.b16 %v2428
    %v2751 = vunpack.c.h.b16 %v2428
    %v2752 = vunpack.c.l.b16 %v2429
    %v2753 = vunpack.c.h.b16 %v2429
    %v2754 = vunpack.c.l.b16 %v2430
    %v2755 = vunpack.c.h.b16 %v2430
    %v2756 = vunpack.c.l.b16 %v2431
    %v2757 = vunpack.c.h.b16 %v2431
    %v2758 = vunpack.c.l.b16 %v2432
    %v2759 = vunpack.c.h.b16 %v2432
    %v2760 = vunpack.c.l.b16 %v2433
    %v2761 = vunpack.c.h.b16 %v2433
    %v2762 = vunpack.c.l.b16 %v2434
    %v2763 = vunpack.c.h.b16 %v2434
    %v2764 = vunpack.c.l.b16 %v2435
    %v2765 = vunpack.c.h.b16 %v2435
    %v2766 = vunpack.c.l.b16 %v2436
    %v2767 = vunpack.c.h.b16 %v2436
    %v2768 = vunpack.c.l.b16 %v2437
    %v2769 = vunpack.c.h.b16 %v2437
    %v2770 = vunpack.c.l.b16 %v2438
    %v2771 = vunpack.c.h.b16 %v2438
    %v2772 = vunpack.c.l.b16 %v2439
    %v2773 = vunpack.c.h.b16 %v2439
    %v2774 = vunpack.c.l.b16 %v2440
    %v2775 = vunpack.c.h.b16 %v2440
    %v2776 = vunpack.c.l.b16 %v2441
    %v2777 = vunpack.c.h.b16 %v2441
    %v2778 = vunpack.c.l.b16 %v2442
    %v2779 = vunpack.c.h.b16 %v2442
    %v2780 = vunpack.c.l.b16 %v2443
    %v2781 = vunpack.c.h.b16 %v2443
    %v2782 = vunpack.c.l.b16 %v2444
    %v2783 = vunpack.c.h.b16 %v2444
    %v2784 = vunpack.c.l.b16 %v2445
    %v2785 = vunpack.c.h.b16 %v2445
    %v2786 = vunpack.c.l.b16 %v2446
    %v2787 = vunpack.c.h.b16 %v2446
    %v2788 = vunpack.c.l.b16 %v2447
    %v2789 = vunpack.c.h.b16 %v2447
    %v2790 = vunpack.c.l.b16 %v2448
    %v2791 = vunpack.c.h.b16 %v2448
    %v2792 = vunpack.c.l.b16 %v2449
    %v2793 = vunpack.c.h.b16 %v2449
    %v2794 = vunpack.c.l.b16 %v2450
    %v2795 = vunpack.c.h.b16 %v2450
    %v2796 = vunpack.c.l.b16 %v2451
    %v2797 = vunpack.c.h.b16 %v2451
    %v2798 = vunpack.c.l.b16 %v2452
    %v2799 = vunpack.c.h.b16 %v2452
    %v2800 = vunpack.c.l.b16 %v2453
    %v2801 = vunpack.c.h.b16 %v2453
    %v2802 = vunpack.c.l.b16 %v2454
    %v2803 = vunpack.c.h.b16 %v2454
    %v2804 = vunpack.c.l.b16 %v2455
    %v2805 = vunpack.c.h.b16 %v2455
    %v2806 = vunpack.c.l.b16 %v2456
    %v2807 = vunpack.c.h.b16 %v2456
    %v2808 = vunpack.c.l.b16 %v2457
    %v2809 = vunpack.c.h.b16 %v2457
    %v2810 = vunpack.c.l.b16 %v2458
    %v2811 = vunpack.c.h.b16 %v2458
    %v2812 = vunpack.c.l.b16 %v2459
    %v2813 = vunpack.c.h.b16 %v2459
    %v2814 = vunpack.c.l.b16 %v2460
    %v2815 = vunpack.c.h.b16 %v2460
    %v2816 = vunpack.c.l.b16 %v2461
    %v2817 = vunpack.c.h.b16 %v2461
    %v2818 = vunpack.c.l.b16 %v2462
    %v2819 = vunpack.c.h.b16 %v2462
    %v2820 = vunpack.c.l.b16 %v2463
    %v2821 = vunpack.c.h.b16 %v2463
    %v2822 = vunpack.c.l.b16 %v2464
    %v2823 = vunpack.c.h.b16 %v2464
    %v2824 = vunpack.c.l.b16 %v2465
    %v2825 = vunpack.c.h.b16 %v2465
    %v2826 = vunpack.c.l.b16 %v2466
    %v2827 = vunpack.c.h.b16 %v2466
    %v2828 = vunpack.c.l.b16 %v2467
    %v2829 = vunpack.c.h.b16 %v2467
    %v2830 = vunpack.c.l.b16 %v2468
    %v2831 = vunpack.c.h.b16 %v2468
    %v2832 = vunpack.c.l.b16 %v2469
    %v2833 = vunpack.c.h.b16 %v2469
    %v2834 = vunpack.c.l.b16 %v2470
    %v2835 = vunpack.c.h.b16 %v2470
    %v2836 = vunpack.c.l.b16 %v2471
    %v2837 = vunpack.c.h.b16 %v2471
    %v2838 = vunpack.c.l.b16 %v2472
    %v2839 = vunpack.c.h.b16 %v2472
    %v2840 = vunpack.c.l.b16 %v2473
    %v2841 = vunpack.c.h.b16 %v2473
    %v2842 = vunpack.c.l.b16 %v2474
    %v2843 = vunpack.c.h.b16 %v2474
    %v2844 = vunpack.c.l.b16 %v2475
    %v2845 = vunpack.c.h.b16 %v2475
    %v2846 = vunpack.c.l.b16 %v2476
    %v2847 = vunpack.c.h.b16 %v2476
    %v2848 = vunpack.c.l.b16 %v2477
    %v2849 = vunpack.c.h.b16 %v2477
    %v2850 = vunpack.c.l.b16 %v2478
    %v2851 = vunpack.c.h.b16 %v2478
    %v2852 = vunpack.c.l.b16 %v2479
    %v2853 = vunpack.c.h.b16 %v2479
    %v2854 = vunpack.c.l.b16 %v2480
    %v2855 = vunpack.c.h.b16 %v2480
    %v2856 = vunpack.c.l.b16 %v2481
    %v2857 = vunpack.c.h.b16 %v2481
    %v2858 = vunpack.c.l.b16 %v2482
    %v2859 = vunpack.c.h.b16 %v2482
    %v2860 = vunpack.c.l.b16 %v2483
    %v2861 = vunpack.c.h.b16 %v2483
    %v2862 = vunpack.c.l.b16 %v2484
    %v2863 = vunpack.c.h.b16 %v2484
    %v2864 = vunpack.c.l.b16 %v2485
    %v2865 = vunpack.c.h.b16 %v2485
    %v2866 = vunpack.c.l.b16 %v2486
    %v2867 = vunpack.c.h.b16 %v2486
    %v2868 = vunpack.c.l.b16 %v2487
    %v2869 = vunpack.c.h.b16 %v2487
    %v2870 = vunpack.c.l.b16 %v2488
    %v2871 = vunpack.c.h.b16 %v2488
    %v2872 = vunpack.c.l.b16 %v2489
    %v2873 = vunpack.c.h.b16 %v2489
    %v2874 = vunpack.c.l.b16 %v2490
    %v2875 = vunpack.c.h.b16 %v2490
    %v2876 = vunpack.c.l.b16 %v2491
    %v2877 = vunpack.c.h.b16 %v2491
    %v2878 = vunpack.c.l.b16 %v2492
    %v2879 = vunpack.c.h.b16 %v2492
    %v2880 = vunpack.c.l.b16 %v2493
    %v2881 = vunpack.c.h.b16 %v2493
    %v2882 = vunpack.c.l.b16 %v2494
    %v2883 = vunpack.c.h.b16 %v2494
    %v2884 = vunpack.c.l.b16 %v2495
    %v2885 = vunpack.c.h.b16 %v2495
    %v2886 = vunpack.c.l.b16 %v2496
    %v2887 = vunpack.c.h.b16 %v2496
    %v2888 = vunpack.c.l.b16 %v2497
    %v2889 = vunpack.c.h.b16 %v2497
    %v2890 = vunpack.c.l.b16 %v2498
    %v2891 = vunpack.c.h.b16 %v2498
    %v2892 = vunpack.c.l.b16 %v2499
    %v2893 = vunpack.c.h.b16 %v2499
    %v2894 = vunpack.c.l.b16 %v2500
    %v2895 = vunpack.c.h.b16 %v2500
    %v2896 = vunpack.c.l.b16 %v2501
    %v2897 = vunpack.c.h.b16 %v2501
    %v2898 = vunpack.c.l.b16 %v2502
    %v2899 = vunpack.c.h.b16 %v2502
    %v2900 = vunpack.c.l.b16 %v2503
    %v2901 = vunpack.c.h.b16 %v2503
    %v2902 = vunpack.c.l.b16 %v2504
    %v2903 = vunpack.c.h.b16 %v2504
    %v2904 = vunpack.c.l.b16 %v2505
    %v2905 = vunpack.c.h.b16 %v2505
    %v2906 = vunpack.c.l.b16 %v2506
    %v2907 = vunpack.c.h.b16 %v2506
    %v2908 = vunpack.c.l.b16 %v2507
    %v2909 = vunpack.c.h.b16 %v2507
    %v2910 = vunpack.c.l.b16 %v2508
    %v2911 = vunpack.c.h.b16 %v2508
    %v2912 = vunpack.c.l.b16 %v2509
    %v2913 = vunpack.c.h.b16 %v2509
    %v2914 = vunpack.c.l.b16 %v2510
    %v2915 = vunpack.c.h.b16 %v2510
    %v2916 = vunpack.c.l.b16 %v2511
    %v2917 = vunpack.c.h.b16 %v2511
    %v2918 = vunpack.c.l.b16 %v2512
    %v2919 = vunpack.c.h.b16 %v2512
    %v2920 = vunpack.c.l.b16 %v2513
    %v2921 = vunpack.c.h.b16 %v2513
    %v2922 = vunpack.c.l.b16 %v2514
    %v2923 = vunpack.c.h.b16 %v2514
    %v2924 = vunpack.c.l.b16 %v2515
    %v2925 = vunpack.c.h.b16 %v2515
    %v2926 = vpack.c.b16 %v2674, %v2670
    %v2927 = vpack.c.b16 %v2675, %v2671
    %v2928 = vpack.c.b16 %v2676, %v2672
    %v2929 = vpack.c.b16 %v2677, %v2673
    %v2930 = vpack.c.b16 %v2682, %v2678
    %v2931 = vpack.c.b16 %v2683, %v2679
    %v2932 = vpack.c.b16 %v2684, %v2680
    %v2933 = vpack.c.b16 %v2685, %v2681
    %v2934 = vpack.c.b16 %v2690, %v2686
    %v2935 = vpack.c.b16 %v2691, %v2687
    %v2936 = vpack.c.b16 %v2692, %v2688
    %v2937 = vpack.c.b16 %v2693, %v2689
    %v2938 = vpack.c.b16 %v2698, %v2694
    %v2939 = vpack.c.b16 %v2699, %v2695
    %v2940 = vpack.c.b16 %v2700, %v2696
    %v2941 = vpack.c.b16 %v2701, %v2697
    %v2942 = vpack.c.b16 %v2706, %v2702
    %v2943 = vpack.c.b16 %v2707, %v2703
    %v2944 = vpack.c.b16 %v2708, %v2704
    %v2945 = vpack.c.b16 %v2709, %v2705
    %v2946 = vpack.c.b16 %v2714, %v2710
    %v2947 = vpack.c.b16 %v2715, %v2711
    %v2948 = vpack.c.b16 %v2716, %v2712
    %v2949 = vpack.c.b16 %v2717, %v2713
    %v2950 = vpack.c.b16 %v2722, %v2718
    %v2951 = vpack.c.b16 %v2723, %v2719
    %v2952 = vpack.c.b16 %v2724, %v2720
    %v2953 = vpack.c.b16 %v2725, %v2721
    %v2954 = vpack.c.b16 %v2730, %v2726
    %v2955 = vpack.c.b16 %v2731, %v2727
    %v2956 = vpack.c.b16 %v2732, %v2728
    %v2957 = vpack.c.b16 %v2733, %v2729
    %v2958 = vpack.c.b16 %v2738, %v2734
    %v2959 = vpack.c.b16 %v2739, %v2735
    %v2960 = vpack.c.b16 %v2740, %v2736
    %v2961 = vpack.c.b16 %v2741, %v2737
    %v2962 = vpack.c.b16 %v2746, %v2742
    %v2963 = vpack.c.b16 %v2747, %v2743
    %v2964 = vpack.c.b16 %v2748, %v2744
    %v2965 = vpack.c.b16 %v2749, %v2745
    %v2966 = vpack.c.b16 %v2754, %v2750
    %v2967 = vpack.c.b16 %v2755, %v2751
    %v2968 = vpack.c.b16 %v2756, %v2752
    %v2969 = vpack.c.b16 %v2757, %v2753
    %v2970 = vpack.c.b16 %v2762, %v2758
    %v2971 = vpack.c.b16 %v2763, %v2759
    %v2972 = vpack.c.b16 %v2764, %v2760
    %v2973 = vpack.c.b16 %v2765, %v2761
    %v2974 = vpack.c.b16 %v2770, %v2766
    %v2975 = vpack.c.b16 %v2771, %v2767
    %v2976 = vpack.c.b16 %v2772, %v2768
    %v2977 = vpack.c.b16 %v2773, %v2769
    %v2978 = vpack.c.b16 %v2778, %v2774
    %v2979 = vpack.c.b16 %v2779, %v2775
    %v2980 = vpack.c.b16 %v2780, %v2776
    %v2981 = vpack.c.b16 %v2781, %v2777
    %v2982 = vpack.c.b16 %v2786, %v2782
    %v2983 = vpack.c.b16 %v2787, %v2783
    %v2984 = vpack.c.b16 %v2788, %v2784
    %v2985 = vpack.c.b16 %v2789, %v2785
    %v2986 = vpack.c.b16 %v2794, %v2790
    %v2987 = vpack.c.b16 %v2795, %v2791
    %v2988 = vpack.c.b16 %v2796, %v2792
    %v2989 = vpack.c.b16 %v2797, %v2793
    %v2990 = vpack.c.b16 %v2802, %v2798
    %v2991 = vpack.c.b16 %v2803, %v2799
    %v2992 = vpack.c.b16 %v2804, %v2800
    %v2993 = vpack.c.b16 %v2805, %v2801
    %v2994 = vpack.c.b16 %v2810, %v2806
    %v2995 = vpack.c.b16 %v2811, %v2807
    %v2996 = vpack.c.b16 %v2812, %v2808
    %v2997 = vpack.c.b16 %v2813, %v2809
    %v2998 = vpack.c.b16 %v2818, %v2814
    %v2999 = vpack.c.b16 %v2819, %v2815
    %v3000 = vpack.c.b16 %v2820, %v2816
    %v3001 = vpack.c.b16 %v2821, %v2817
    %v3002 = vpack.c.b16 %v2826, %v2822
    %v3003 = vpack.c.b16 %v2827, %v2823
    %v3004 = vpack.c.b16 %v2828, %v2824
    %v3005 = vpack.c.b16 %v2829, %v2825
    %v3006 = vpack.c.b16 %v2834, %v2830
    %v3007 = vpack.c.b16 %v2835, %v2831
    %v3008 = vpack.c.b16 %v2836, %v2832
    %v3009 = vpack.c.b16 %v2837, %v2833
    %v3010 = vpack.c.b16 %v2842, %v2838
    %v3011 = vpack.c.b16 %v2843, %v2839
    %v3012 = vpack.c.b16 %v2844, %v2840
    %v3013 = vpack.c.b16 %v2845, %v2841
    %v3014 = vpack.c.b16 %v2850, %v2846
    %v3015 = vpack.c.b16 %v2851, %v2847
    %v3016 = vpack.c.b16 %v2852, %v2848
    %v3017 = vpack.c.b16 %v2853, %v2849
    %v3018 = vpack.c.b16 %v2858, %v2854
    %v3019 = vpack.c.b16 %v2859, %v2855
    %v3020 = vpack.c.b16 %v2860, %v2856
    %v3021 = vpack.c.b16 %v2861, %v2857
    %v3022 = vpack.c.b16 %v2866, %v2862
    %v3023 = vpack.c.b16 %v2867, %v2863
    %v3024 = vpack.c.b16 %v2868, %v2864
    %v3025 = vpack.c.b16 %v2869, %v2865
    %v3026 = vpack.c.b16 %v2874, %v2870
    %v3027 = vpack.c.b16 %v2875, %v2871
    %v3028 = vpack.c.b16 %v2876, %v2872
    %v3029 = vpack.c.b16 %v2877, %v2873
    %v3030 = vpack.c.b16 %v2882, %v2878
    %v3031 = vpack.c.b16 %v2883, %v2879
    %v3032 = vpack.c.b16 %v2884, %v2880
    %v3033 = vpack.c.b16 %v2885, %v2881
    %v3034 = vpack.c.b16 %v2890, %v2886
    %v3035 = vpack.c.b16 %v2891, %v2887
    %v3036 = vpack.c.b16 %v2892, %v2888
    %v3037 = vpack.c.b16 %v2893, %v2889
    %v3038 = vpack.c.b16 %v2898, %v2894
    %v3039 = vpack.c.b16 %v2899, %v2895
    %v3040 = vpack.c.b16 %v2900, %v2896
    %v3041 = vpack.c.b16 %v2901, %v2897
    %v3042 = vpack.c.b16 %v2906, %v2902
    %v3043 = vpack.c.b16 %v2907, %v2903
    %v3044 = vpack.c.b16 %v2908, %v2904
    %v3045 = vpack.c.b16 %v2909, %v2905
    %v3046 = vpack.c.b16 %v2914, %v2910
    %v3047 = vpack.c.b16 %v2915, %v2911
    %v3048 = vpack.c.b16 %v2916, %v2912
    %v3049 = vpack.c.b16 %v2917, %v2913
    %v3050 = vpack.c.b16 %v2922, %v2918
    %v3051 = vpack.c.b16 %v2923, %v2919
    %v3052 = vpack.c.b16 %v2924, %v2920
    %v3053 = vpack.c.b16 %v2925, %v2921
    %3182 = vmatprep.subr.bf16.mxu0 %v2955
    %3183 = vmatpush1.bf16.msra.mxu0 %v2954
    %3184 = vmatprep.subr.bf16.mxu0 %v2951
    %3185 = vmatpush1.bf16.msra.mxu0 %v2950
    %3186 = vmatprep.subr.bf16.mxu0 %v2947
    %3187 = vmatpush1.bf16.msra.mxu0 %v2946
    %3188 = vmatprep.subr.bf16.mxu0 %v2943
    %3189 = vmatpush1.bf16.msra.mxu0 %v2942
    %3190 = vmatprep.subr.bf16.mxu0 %v2939
    %3191 = vmatpush1.bf16.msra.mxu0 %v2938
    %3192 = vmatprep.subr.bf16.mxu0 %v2935
    %3193 = vmatpush1.bf16.msra.mxu0 %v2934
    %3194 = vmatprep.subr.bf16.mxu0 %v2931
    %3195 = vmatpush1.bf16.msra.mxu0 %v2930
    %3196 = vmatprep.subr.bf16.mxu0 %v2927
    %3197 = vmatpush1.bf16.msra.mxu0 %v2926
    %3198 = vmatprep.subr.bf16.mxu0 %v2987
    %3199 = vmatpush2.bf16.msra.mxu0 %v2986
    %3200 = vmatprep.subr.bf16.mxu0 %v2983
    %3201 = vmatpush2.bf16.msra.mxu0 %v2982
    %3202 = vmatprep.subr.bf16.mxu0 %v2979
    %3203 = vmatpush2.bf16.msra.mxu0 %v2978
    %3204 = vmatprep.subr.bf16.mxu0 %v2975
    %3205 = vmatpush2.bf16.msra.mxu0 %v2974
    %3206 = vmatprep.subr.bf16.mxu0 %v2971
    %3207 = vmatpush2.bf16.msra.mxu0 %v2970
    %3208 = vmatprep.subr.bf16.mxu0 %v2967
    %3209 = vmatpush2.bf16.msra.mxu0 %v2966
    %3210 = vmatprep.subr.bf16.mxu0 %v2963
    %3211 = vmatpush2.bf16.msra.mxu0 %v2962
    %3212 = vmatprep.subr.bf16.mxu0 %v2959
    %3213 = vmatpush2.bf16.msra.mxu0 %v2958
    %3214 = vmatprep.mubr.bf16.mxu0 %v2518
    %3215 = vmatmul.mubr.bf16.gmra.mxu0 %v2517
    %v3216 = vpop.f32.mrf.mxu0
    %v3217 = vadd.f32 %v2525, %v3216
    %v3218 = vpop.f32.mrf.mxu0
    %v3219 = vadd.f32 %v2529, %v3218
    %v3220 = vpop.f32.mrf.mxu0
    %v3221 = vpop.f32.mrf.mxu0
    %3222 = vdwg.mxu0
    %3223 = vmatprep.subr.bf16.mxu0 %v3019
    %3224 = vmatpush1.bf16.msra.mxu0 %v3018
    %3225 = vmatprep.subr.bf16.mxu0 %v3015
    %3226 = vmatpush1.bf16.msra.mxu0 %v3014
    %3227 = vmatprep.subr.bf16.mxu0 %v3011
    %3228 = vmatpush1.bf16.msra.mxu0 %v3010
    %3229 = vmatprep.subr.bf16.mxu0 %v3007
    %3230 = vmatpush1.bf16.msra.mxu0 %v3006
    %3231 = vmatprep.subr.bf16.mxu0 %v3003
    %3232 = vmatpush1.bf16.msra.mxu0 %v3002
    %3233 = vmatprep.subr.bf16.mxu0 %v2999
    %3234 = vmatpush1.bf16.msra.mxu0 %v2998
    %3235 = vmatprep.subr.bf16.mxu0 %v2995
    %3236 = vmatpush1.bf16.msra.mxu0 %v2994
    %3237 = vmatprep.subr.bf16.mxu0 %v2991
    %3238 = vmatpush1.bf16.msra.mxu0 %v2990
    %3239 = vmatprep.subr.bf16.mxu0 %v3051
    %3240 = vmatpush2.bf16.msra.mxu0 %v3050
    %3241 = vmatprep.subr.bf16.mxu0 %v3047
    %3242 = vmatpush2.bf16.msra.mxu0 %v3046
    %3243 = vmatprep.subr.bf16.mxu0 %v3043
    %3244 = vmatpush2.bf16.msra.mxu0 %v3042
    %3245 = vmatprep.subr.bf16.mxu0 %v3039
    %3246 = vmatpush2.bf16.msra.mxu0 %v3038
    %3247 = vmatprep.subr.bf16.mxu0 %v3035
    %3248 = vmatpush2.bf16.msra.mxu0 %v3034
    %3249 = vmatprep.subr.bf16.mxu0 %v3031
    %3250 = vmatpush2.bf16.msra.mxu0 %v3030
    %3251 = vmatprep.subr.bf16.mxu0 %v3027
    %3252 = vmatpush2.bf16.msra.mxu0 %v3026
    %3253 = vmatprep.subr.bf16.mxu0 %v3023
    %3254 = vmatpush2.bf16.msra.mxu0 %v3022
    %3255 = vmatprep.mubr.bf16.mxu0 %v2520
    %3256 = vmatmul.mubr.bf16.gmra.mxu0 %v2519
    %v3257 = vpop.f32.mrf.mxu0
    %v3258 = vadd.f32 %v3217, %v3257
    %v3259 = vpop.f32.mrf.mxu0
    %v3260 = vadd.f32 %v3219, %v3259
    %v3261 = vpop.f32.mrf.mxu0
    %v3262 = vpop.f32.mrf.mxu0
    %3263 = vdwg.mxu0
    %3264 = vmatprep.subr.bf16.mxu0 %v2957
    %3265 = vmatpush1.bf16.msra.mxu0 %v2956
    %3266 = vmatprep.subr.bf16.mxu0 %v2953
    %3267 = vmatpush1.bf16.msra.mxu0 %v2952
    %3268 = vmatprep.subr.bf16.mxu0 %v2949
    %3269 = vmatpush1.bf16.msra.mxu0 %v2948
    %3270 = vmatprep.subr.bf16.mxu0 %v2945
    %3271 = vmatpush1.bf16.msra.mxu0 %v2944
    %3272 = vmatprep.subr.bf16.mxu0 %v2941
    %3273 = vmatpush1.bf16.msra.mxu0 %v2940
    %3274 = vmatprep.subr.bf16.mxu0 %v2937
    %3275 = vmatpush1.bf16.msra.mxu0 %v2936
    %3276 = vmatprep.subr.bf16.mxu0 %v2933
    %3277 = vmatpush1.bf16.msra.mxu0 %v2932
    %3278 = vmatprep.subr.bf16.mxu0 %v2929
    %3279 = vmatpush1.bf16.msra.mxu0 %v2928
    %3280 = vmatprep.subr.bf16.mxu0 %v2989
    %3281 = vmatpush2.bf16.msra.mxu0 %v2988
    %3282 = vmatprep.subr.bf16.mxu0 %v2985
    %3283 = vmatpush2.bf16.msra.mxu0 %v2984
    %3284 = vmatprep.subr.bf16.mxu0 %v2981
    %3285 = vmatpush2.bf16.msra.mxu0 %v2980
    %3286 = vmatprep.subr.bf16.mxu0 %v2977
    %3287 = vmatpush2.bf16.msra.mxu0 %v2976
    %3288 = vmatprep.subr.bf16.mxu0 %v2973
    %3289 = vmatpush2.bf16.msra.mxu0 %v2972
    %3290 = vmatprep.subr.bf16.mxu0 %v2969
    %3291 = vmatpush2.bf16.msra.mxu0 %v2968
    %3292 = vmatprep.subr.bf16.mxu0 %v2965
    %3293 = vmatpush2.bf16.msra.mxu0 %v2964
    %3294 = vmatprep.subr.bf16.mxu0 %v2961
    %3295 = vmatpush2.bf16.msra.mxu0 %v2960
    %3296 = vmatprep.mubr.bf16.mxu0 %v2518
    %3297 = vmatmul.mubr.bf16.gmra.mxu0 %v2517
    %v3298 = vpop.f32.mrf.mxu0
    %v3299 = vadd.f32 %v2533, %v3298
    %v3300 = vpop.f32.mrf.mxu0
    %v3301 = vadd.f32 %v2537, %v3300
    %v3302 = vpop.f32.mrf.mxu0
    %v3303 = vpop.f32.mrf.mxu0
    %3304 = vdwg.mxu0
    %3305 = vmatprep.subr.bf16.mxu0 %v3021
    %3306 = vmatpush1.bf16.msra.mxu0 %v3020
    %3307 = vmatprep.subr.bf16.mxu0 %v3017
    %3308 = vmatpush1.bf16.msra.mxu0 %v3016
    %3309 = vmatprep.subr.bf16.mxu0 %v3013
    %3310 = vmatpush1.bf16.msra.mxu0 %v3012
    %3311 = vmatprep.subr.bf16.mxu0 %v3009
    %3312 = vmatpush1.bf16.msra.mxu0 %v3008
    %3313 = vmatprep.subr.bf16.mxu0 %v3005
    %3314 = vmatpush1.bf16.msra.mxu0 %v3004
    %3315 = vmatprep.subr.bf16.mxu0 %v3001
    %3316 = vmatpush1.bf16.msra.mxu0 %v3000
    %3317 = vmatprep.subr.bf16.mxu0 %v2997
    %3318 = vmatpush1.bf16.msra.mxu0 %v2996
    %3319 = vmatprep.subr.bf16.mxu0 %v2993
    %3320 = vmatpush1.bf16.msra.mxu0 %v2992
    %3321 = vmatprep.subr.bf16.mxu0 %v3053
    %3322 = vmatpush2.bf16.msra.mxu0 %v3052
    %3323 = vmatprep.subr.bf16.mxu0 %v3049
    %3324 = vmatpush2.bf16.msra.mxu0 %v3048
    %3325 = vmatprep.subr.bf16.mxu0 %v3045
    %3326 = vmatpush2.bf16.msra.mxu0 %v3044
    %3327 = vmatprep.subr.bf16.mxu0 %v3041
    %3328 = vmatpush2.bf16.msra.mxu0 %v3040
    %3329 = vmatprep.subr.bf16.mxu0 %v3037
    %3330 = vmatpush2.bf16.msra.mxu0 %v3036
    %3331 = vmatprep.subr.bf16.mxu0 %v3033
    %3332 = vmatpush2.bf16.msra.mxu0 %v3032
    %3333 = vmatprep.subr.bf16.mxu0 %v3029
    %3334 = vmatpush2.bf16.msra.mxu0 %v3028
    %3335 = vmatprep.subr.bf16.mxu0 %v3025
    %3336 = vmatpush2.bf16.msra.mxu0 %v3024
    %3337 = vmatprep.mubr.bf16.mxu0 %v2520
    %3338 = vmatmul.mubr.bf16.gmra.mxu0 %v2519
    %v3339 = vpop.f32.mrf.mxu0
    %v3340 = vadd.f32 %v3299, %v3339
    %v3341 = vpop.f32.mrf.mxu0
    %v3342 = vadd.f32 %v3301, %v3341
    %v3343 = vpop.f32.mrf.mxu0
    %v3344 = vpop.f32.mrf.mxu0
    %3345 = vdwg.mxu0
    %v3346 = vmax.f32 %v3258, 0.0
    %v3347 = vmax.f32 %v3260, 0.0
    %v3348 = vmax.f32 %v3340, 0.0
    %v3349 = vmax.f32 %v3342, 0.0
    %v3350 = vld [vmem:[#allocation8] sm:$0xff]
    %v3351 = vld [vmem:[#allocation8 + $0x8] sm:$0xff]
    %v3352 = vld [vmem:[#allocation8 + $0x10] sm:$0xff]
    %v3353 = vld [vmem:[#allocation8 + $0x18] sm:$0xff]
    %v3354 = vld [vmem:[#allocation8 + $0x20] sm:$0xff]
    %v3355 = vld [vmem:[#allocation8 + $0x28] sm:$0xff]
    %v3356 = vld [vmem:[#allocation8 + $0x30] sm:$0xff]
    %v3357 = vld [vmem:[#allocation8 + $0x38] sm:$0xff]
    %v3358 = vld [vmem:[#allocation8 + $0x40] sm:$0xff]
    %v3359 = vld [vmem:[#allocation8 + $0x48] sm:$0xff]
    %v3360 = vld [vmem:[#allocation8 + $0x50] sm:$0xff]
    %v3361 = vld [vmem:[#allocation8 + $0x58] sm:$0xff]
    %v3362 = vld [vmem:[#allocation8 + $0x60] sm:$0xff]
    %v3363 = vld [vmem:[#allocation8 + $0x68] sm:$0xff]
    %v3364 = vld [vmem:[#allocation8 + $0x70] sm:$0xff]
    %v3365 = vld [vmem:[#allocation8 + $0x78] sm:$0xff]
    %v3366 = vld [vmem:[#allocation8 + $0x80] sm:$0xff]
    %v3367 = vld [vmem:[#allocation8 + $0x88] sm:$0xff]
    %v3368 = vld [vmem:[#allocation8 + $0x90] sm:$0xff]
    %v3369 = vld [vmem:[#allocation8 + $0x98] sm:$0xff]
    %v3370 = vld [vmem:[#allocation8 + $0xa0] sm:$0xff]
    %v3371 = vld [vmem:[#allocation8 + $0xa8] sm:$0xff]
    %v3372 = vld [vmem:[#allocation8 + $0xb0] sm:$0xff]
    %v3373 = vld [vmem:[#allocation8 + $0xb8] sm:$0xff]
    %v3374 = vld [vmem:[#allocation8 + $0xc0] sm:$0xff]
    %v3375 = vld [vmem:[#allocation8 + $0xc8] sm:$0xff]
    %v3376 = vld [vmem:[#allocation8 + $0xd0] sm:$0xff]
    %v3377 = vld [vmem:[#allocation8 + $0xd8] sm:$0xff]
    %v3378 = vld [vmem:[#allocation8 + $0xe0] sm:$0xff]
    %v3379 = vld [vmem:[#allocation8 + $0xe8] sm:$0xff]
    %v3380 = vld [vmem:[#allocation8 + $0xf0] sm:$0xff]
    %v3381 = vld [vmem:[#allocation8 + $0xf8] sm:$0xff]
    %v3382 = vld [vmem:[#allocation8 + $0x100] sm:$0xff]
    %v3383 = vld [vmem:[#allocation8 + $0x108] sm:$0xff]
    %v3384 = vld [vmem:[#allocation8 + $0x110] sm:$0xff]
    %v3385 = vld [vmem:[#allocation8 + $0x118] sm:$0xff]
    %v3386 = vld [vmem:[#allocation8 + $0x120] sm:$0xff]
    %v3387 = vld [vmem:[#allocation8 + $0x128] sm:$0xff]
    %v3388 = vld [vmem:[#allocation8 + $0x130] sm:$0xff]
    %v3389 = vld [vmem:[#allocation8 + $0x138] sm:$0xff]
    %v3390 = vld [vmem:[#allocation8 + $0x140] sm:$0xff]
    %v3391 = vld [vmem:[#allocation8 + $0x148] sm:$0xff]
    %v3392 = vld [vmem:[#allocation8 + $0x150] sm:$0xff]
    %v3393 = vld [vmem:[#allocation8 + $0x158] sm:$0xff]
    %v3394 = vld [vmem:[#allocation8 + $0x160] sm:$0xff]
    %v3395 = vld [vmem:[#allocation8 + $0x168] sm:$0xff]
    %v3396 = vld [vmem:[#allocation8 + $0x170] sm:$0xff]
    %v3397 = vld [vmem:[#allocation8 + $0x178] sm:$0xff]
    %v3398 = vld [vmem:[#allocation8 + $0x180] sm:$0xff]
    %v3399 = vld [vmem:[#allocation8 + $0x188] sm:$0xff]
    %v3400 = vld [vmem:[#allocation8 + $0x190] sm:$0xff]
    %v3401 = vld [vmem:[#allocation8 + $0x198] sm:$0xff]
    %v3402 = vld [vmem:[#allocation8 + $0x1a0] sm:$0xff]
    %v3403 = vld [vmem:[#allocation8 + $0x1a8] sm:$0xff]
    %v3404 = vld [vmem:[#allocation8 + $0x1b0] sm:$0xff]
    %v3405 = vld [vmem:[#allocation8 + $0x1b8] sm:$0xff]
    %v3406 = vld [vmem:[#allocation8 + $0x1c0] sm:$0xff]
    %v3407 = vld [vmem:[#allocation8 + $0x1c8] sm:$0xff]
    %v3408 = vld [vmem:[#allocation8 + $0x1d0] sm:$0xff]
    %v3409 = vld [vmem:[#allocation8 + $0x1d8] sm:$0xff]
    %v3410 = vld [vmem:[#allocation8 + $0x1e0] sm:$0xff]
    %v3411 = vld [vmem:[#allocation8 + $0x1e8] sm:$0xff]
    %v3412 = vld [vmem:[#allocation8 + $0x1f0] sm:$0xff]
    %v3413 = vld [vmem:[#allocation8 + $0x1f8] sm:$0xff]
    %v3414 = vld [vmem:[%s8] sm:$0x3]
    %v3415 = vpack.c.bf16 %v3346, %v3346
    %v3416 = vpack.c.bf16 %v3347, %v3347
    %v3417 = vpack.c.bf16 %v3348, %v3348
    %v3418 = vpack.c.bf16 %v3349, %v3349
    %v3420 = vlaneseq
    %v3421 = vshrl.u32 %v3420, 7
    %v3422 = vsub.s32 0, %v3421
    %v3423 = vrot.slane %v3414, %v3422
    %v3424 = vlaneseq
    %v3425 = vshrl.u32 %v3424, 7
    %v3426 = vsub.s32 1, %v3425
    %v3427 = vrot.slane %v3414, %v3426
    %v3494 = vunpack.c.l.b16 %v3350
    %v3495 = vunpack.c.h.b16 %v3350
    %v3496 = vunpack.c.l.b16 %v3351
    %v3497 = vunpack.c.h.b16 %v3351
    %v3498 = vunpack.c.l.b16 %v3352
    %v3499 = vunpack.c.h.b16 %v3352
    %v3500 = vunpack.c.l.b16 %v3353
    %v3501 = vunpack.c.h.b16 %v3353
    %v3502 = vunpack.c.l.b16 %v3354
    %v3503 = vunpack.c.h.b16 %v3354
    %v3504 = vunpack.c.l.b16 %v3355
    %v3505 = vunpack.c.h.b16 %v3355
    %v3506 = vunpack.c.l.b16 %v3356
    %v3507 = vunpack.c.h.b16 %v3356
    %v3508 = vunpack.c.l.b16 %v3357
    %v3509 = vunpack.c.h.b16 %v3357
    %v3510 = vunpack.c.l.b16 %v3358
    %v3511 = vunpack.c.h.b16 %v3358
    %v3512 = vunpack.c.l.b16 %v3359
    %v3513 = vunpack.c.h.b16 %v3359
    %v3514 = vunpack.c.l.b16 %v3360
    %v3515 = vunpack.c.h.b16 %v3360
    %v3516 = vunpack.c.l.b16 %v3361
    %v3517 = vunpack.c.h.b16 %v3361
    %v3518 = vunpack.c.l.b16 %v3362
    %v3519 = vunpack.c.h.b16 %v3362
    %v3520 = vunpack.c.l.b16 %v3363
    %v3521 = vunpack.c.h.b16 %v3363
    %v3522 = vunpack.c.l.b16 %v3364
    %v3523 = vunpack.c.h.b16 %v3364
    %v3524 = vunpack.c.l.b16 %v3365
    %v3525 = vunpack.c.h.b16 %v3365
    %v3526 = vunpack.c.l.b16 %v3366
    %v3527 = vunpack.c.h.b16 %v3366
    %v3528 = vunpack.c.l.b16 %v3367
    %v3529 = vunpack.c.h.b16 %v3367
    %v3530 = vunpack.c.l.b16 %v3368
    %v3531 = vunpack.c.h.b16 %v3368
    %v3532 = vunpack.c.l.b16 %v3369
    %v3533 = vunpack.c.h.b16 %v3369
    %v3534 = vunpack.c.l.b16 %v3370
    %v3535 = vunpack.c.h.b16 %v3370
    %v3536 = vunpack.c.l.b16 %v3371
    %v3537 = vunpack.c.h.b16 %v3371
    %v3538 = vunpack.c.l.b16 %v3372
    %v3539 = vunpack.c.h.b16 %v3372
    %v3540 = vunpack.c.l.b16 %v3373
    %v3541 = vunpack.c.h.b16 %v3373
    %v3542 = vunpack.c.l.b16 %v3374
    %v3543 = vunpack.c.h.b16 %v3374
    %v3544 = vunpack.c.l.b16 %v3375
    %v3545 = vunpack.c.h.b16 %v3375
    %v3546 = vunpack.c.l.b16 %v3376
    %v3547 = vunpack.c.h.b16 %v3376
    %v3548 = vunpack.c.l.b16 %v3377
    %v3549 = vunpack.c.h.b16 %v3377
    %v3550 = vunpack.c.l.b16 %v3378
    %v3551 = vunpack.c.h.b16 %v3378
    %v3552 = vunpack.c.l.b16 %v3379
    %v3553 = vunpack.c.h.b16 %v3379
    %v3554 = vunpack.c.l.b16 %v3380
    %v3555 = vunpack.c.h.b16 %v3380
    %v3556 = vunpack.c.l.b16 %v3381
    %v3557 = vunpack.c.h.b16 %v3381
    %v3558 = vunpack.c.l.b16 %v3382
    %v3559 = vunpack.c.h.b16 %v3382
    %v3560 = vunpack.c.l.b16 %v3383
    %v3561 = vunpack.c.h.b16 %v3383
    %v3562 = vunpack.c.l.b16 %v3384
    %v3563 = vunpack.c.h.b16 %v3384
    %v3564 = vunpack.c.l.b16 %v3385
    %v3565 = vunpack.c.h.b16 %v3385
    %v3566 = vunpack.c.l.b16 %v3386
    %v3567 = vunpack.c.h.b16 %v3386
    %v3568 = vunpack.c.l.b16 %v3387
    %v3569 = vunpack.c.h.b16 %v3387
    %v3570 = vunpack.c.l.b16 %v3388
    %v3571 = vunpack.c.h.b16 %v3388
    %v3572 = vunpack.c.l.b16 %v3389
    %v3573 = vunpack.c.h.b16 %v3389
    %v3574 = vunpack.c.l.b16 %v3390
    %v3575 = vunpack.c.h.b16 %v3390
    %v3576 = vunpack.c.l.b16 %v3391
    %v3577 = vunpack.c.h.b16 %v3391
    %v3578 = vunpack.c.l.b16 %v3392
    %v3579 = vunpack.c.h.b16 %v3392
    %v3580 = vunpack.c.l.b16 %v3393
    %v3581 = vunpack.c.h.b16 %v3393
    %v3582 = vunpack.c.l.b16 %v3394
    %v3583 = vunpack.c.h.b16 %v3394
    %v3584 = vunpack.c.l.b16 %v3395
    %v3585 = vunpack.c.h.b16 %v3395
    %v3586 = vunpack.c.l.b16 %v3396
    %v3587 = vunpack.c.h.b16 %v3396
    %v3588 = vunpack.c.l.b16 %v3397
    %v3589 = vunpack.c.h.b16 %v3397
    %v3590 = vunpack.c.l.b16 %v3398
    %v3591 = vunpack.c.h.b16 %v3398
    %v3592 = vunpack.c.l.b16 %v3399
    %v3593 = vunpack.c.h.b16 %v3399
    %v3594 = vunpack.c.l.b16 %v3400
    %v3595 = vunpack.c.h.b16 %v3400
    %v3596 = vunpack.c.l.b16 %v3401
    %v3597 = vunpack.c.h.b16 %v3401
    %v3598 = vunpack.c.l.b16 %v3402
    %v3599 = vunpack.c.h.b16 %v3402
    %v3600 = vunpack.c.l.b16 %v3403
    %v3601 = vunpack.c.h.b16 %v3403
    %v3602 = vunpack.c.l.b16 %v3404
    %v3603 = vunpack.c.h.b16 %v3404
    %v3604 = vunpack.c.l.b16 %v3405
    %v3605 = vunpack.c.h.b16 %v3405
    %v3606 = vunpack.c.l.b16 %v3406
    %v3607 = vunpack.c.h.b16 %v3406
    %v3608 = vunpack.c.l.b16 %v3407
    %v3609 = vunpack.c.h.b16 %v3407
    %v3610 = vunpack.c.l.b16 %v3408
    %v3611 = vunpack.c.h.b16 %v3408
    %v3612 = vunpack.c.l.b16 %v3409
    %v3613 = vunpack.c.h.b16 %v3409
    %v3614 = vunpack.c.l.b16 %v3410
    %v3615 = vunpack.c.h.b16 %v3410
    %v3616 = vunpack.c.l.b16 %v3411
    %v3617 = vunpack.c.h.b16 %v3411
    %v3618 = vunpack.c.l.b16 %v3412
    %v3619 = vunpack.c.h.b16 %v3412
    %v3620 = vunpack.c.l.b16 %v3413
    %v3621 = vunpack.c.h.b16 %v3413
    %v3622 = vpack.c.b16 %v3496, %v3494
    %v3623 = vpack.c.b16 %v3497, %v3495
    %v3624 = vpack.c.b16 %v3500, %v3498
    %v3625 = vpack.c.b16 %v3501, %v3499
    %v3626 = vpack.c.b16 %v3504, %v3502
    %v3627 = vpack.c.b16 %v3505, %v3503
    %v3628 = vpack.c.b16 %v3508, %v3506
    %v3629 = vpack.c.b16 %v3509, %v3507
    %v3630 = vpack.c.b16 %v3512, %v3510
    %v3631 = vpack.c.b16 %v3513, %v3511
    %v3632 = vpack.c.b16 %v3516, %v3514
    %v3633 = vpack.c.b16 %v3517, %v3515
    %v3634 = vpack.c.b16 %v3520, %v3518
    %v3635 = vpack.c.b16 %v3521, %v3519
    %v3636 = vpack.c.b16 %v3524, %v3522
    %v3637 = vpack.c.b16 %v3525, %v3523
    %v3638 = vpack.c.b16 %v3528, %v3526
    %v3639 = vpack.c.b16 %v3529, %v3527
    %v3640 = vpack.c.b16 %v3532, %v3530
    %v3641 = vpack.c.b16 %v3533, %v3531
    %v3642 = vpack.c.b16 %v3536, %v3534
    %v3643 = vpack.c.b16 %v3537, %v3535
    %v3644 = vpack.c.b16 %v3540, %v3538
    %v3645 = vpack.c.b16 %v3541, %v3539
    %v3646 = vpack.c.b16 %v3544, %v3542
    %v3647 = vpack.c.b16 %v3545, %v3543
    %v3648 = vpack.c.b16 %v3548, %v3546
    %v3649 = vpack.c.b16 %v3549, %v3547
    %v3650 = vpack.c.b16 %v3552, %v3550
    %v3651 = vpack.c.b16 %v3553, %v3551
    %v3652 = vpack.c.b16 %v3556, %v3554
    %v3653 = vpack.c.b16 %v3557, %v3555
    %v3654 = vpack.c.b16 %v3560, %v3558
    %v3655 = vpack.c.b16 %v3561, %v3559
    %v3656 = vpack.c.b16 %v3564, %v3562
    %v3657 = vpack.c.b16 %v3565, %v3563
    %v3658 = vpack.c.b16 %v3568, %v3566
    %v3659 = vpack.c.b16 %v3569, %v3567
    %v3660 = vpack.c.b16 %v3572, %v3570
    %v3661 = vpack.c.b16 %v3573, %v3571
    %v3662 = vpack.c.b16 %v3576, %v3574
    %v3663 = vpack.c.b16 %v3577, %v3575
    %v3664 = vpack.c.b16 %v3580, %v3578
    %v3665 = vpack.c.b16 %v3581, %v3579
    %v3666 = vpack.c.b16 %v3584, %v3582
    %v3667 = vpack.c.b16 %v3585, %v3583
    %v3668 = vpack.c.b16 %v3588, %v3586
    %v3669 = vpack.c.b16 %v3589, %v3587
    %v3670 = vpack.c.b16 %v3592, %v3590
    %v3671 = vpack.c.b16 %v3593, %v3591
    %v3672 = vpack.c.b16 %v3596, %v3594
    %v3673 = vpack.c.b16 %v3597, %v3595
    %v3674 = vpack.c.b16 %v3600, %v3598
    %v3675 = vpack.c.b16 %v3601, %v3599
    %v3676 = vpack.c.b16 %v3604, %v3602
    %v3677 = vpack.c.b16 %v3605, %v3603
    %v3678 = vpack.c.b16 %v3608, %v3606
    %v3679 = vpack.c.b16 %v3609, %v3607
    %v3680 = vpack.c.b16 %v3612, %v3610
    %v3681 = vpack.c.b16 %v3613, %v3611
    %v3682 = vpack.c.b16 %v3616, %v3614
    %v3683 = vpack.c.b16 %v3617, %v3615
    %v3684 = vpack.c.b16 %v3620, %v3618
    %v3685 = vpack.c.b16 %v3621, %v3619
    %3750 = vmatprep.subr.bf16.mxu0 %v3637
    %3751 = vmatpush1.bf16.msra.mxu0 %v3636
    %3752 = vmatprep.subr.bf16.mxu0 %v3635
    %3753 = vmatpush1.bf16.msra.mxu0 %v3634
    %3754 = vmatprep.subr.bf16.mxu0 %v3633
    %3755 = vmatpush1.bf16.msra.mxu0 %v3632
    %3756 = vmatprep.subr.bf16.mxu0 %v3631
    %3757 = vmatpush1.bf16.msra.mxu0 %v3630
    %3758 = vmatprep.subr.bf16.mxu0 %v3629
    %3759 = vmatpush1.bf16.msra.mxu0 %v3628
    %3760 = vmatprep.subr.bf16.mxu0 %v3627
    %3761 = vmatpush1.bf16.msra.mxu0 %v3626
    %3762 = vmatprep.subr.bf16.mxu0 %v3625
    %3763 = vmatpush1.bf16.msra.mxu0 %v3624
    %3764 = vmatprep.subr.bf16.mxu0 %v3623
    %3765 = vmatpush1.bf16.msra.mxu0 %v3622
    %3766 = vmatprep.subr.bf16.mxu0 %v3653
    %3767 = vmatpush2.bf16.msra.mxu0 %v3652
    %3768 = vmatprep.subr.bf16.mxu0 %v3651
    %3769 = vmatpush2.bf16.msra.mxu0 %v3650
    %3770 = vmatprep.subr.bf16.mxu0 %v3649
    %3771 = vmatpush2.bf16.msra.mxu0 %v3648
    %3772 = vmatprep.subr.bf16.mxu0 %v3647
    %3773 = vmatpush2.bf16.msra.mxu0 %v3646
    %3774 = vmatprep.subr.bf16.mxu0 %v3645
    %3775 = vmatpush2.bf16.msra.mxu0 %v3644
    %3776 = vmatprep.subr.bf16.mxu0 %v3643
    %3777 = vmatpush2.bf16.msra.mxu0 %v3642
    %3778 = vmatprep.subr.bf16.mxu0 %v3641
    %3779 = vmatpush2.bf16.msra.mxu0 %v3640
    %3780 = vmatprep.subr.bf16.mxu0 %v3639
    %3781 = vmatpush2.bf16.msra.mxu0 %v3638
    %3782 = vmatprep.mubr.bf16.mxu0 %v3416
    %3783 = vmatmul.mubr.bf16.gmra.mxu0 %v3415
    %v3784 = vpop.f32.mrf.mxu0
    %v3785 = vadd.f32 %v3423, %v3784
    %v3786 = vpop.f32.mrf.mxu0
    %v3787 = vadd.f32 %v3427, %v3786
    %v3788 = vpop.f32.mrf.mxu0
    %v3789 = vpop.f32.mrf.mxu0
    %3790 = vdwg.mxu0
    %3791 = vmatprep.subr.bf16.mxu0 %v3669
    %3792 = vmatpush1.bf16.msra.mxu0 %v3668
    %3793 = vmatprep.subr.bf16.mxu0 %v3667
    %3794 = vmatpush1.bf16.msra.mxu0 %v3666
    %3795 = vmatprep.subr.bf16.mxu0 %v3665
    %3796 = vmatpush1.bf16.msra.mxu0 %v3664
    %3797 = vmatprep.subr.bf16.mxu0 %v3663
    %3798 = vmatpush1.bf16.msra.mxu0 %v3662
    %3799 = vmatprep.subr.bf16.mxu0 %v3661
    %3800 = vmatpush1.bf16.msra.mxu0 %v3660
    %3801 = vmatprep.subr.bf16.mxu0 %v3659
    %3802 = vmatpush1.bf16.msra.mxu0 %v3658
    %3803 = vmatprep.subr.bf16.mxu0 %v3657
    %3804 = vmatpush1.bf16.msra.mxu0 %v3656
    %3805 = vmatprep.subr.bf16.mxu0 %v3655
    %3806 = vmatpush1.bf16.msra.mxu0 %v3654
    %3807 = vmatprep.subr.bf16.mxu0 %v3685
    %3808 = vmatpush2.bf16.msra.mxu0 %v3684
    %3809 = vmatprep.subr.bf16.mxu0 %v3683
    %3810 = vmatpush2.bf16.msra.mxu0 %v3682
    %3811 = vmatprep.subr.bf16.mxu0 %v3681
    %3812 = vmatpush2.bf16.msra.mxu0 %v3680
    %3813 = vmatprep.subr.bf16.mxu0 %v3679
    %3814 = vmatpush2.bf16.msra.mxu0 %v3678
    %3815 = vmatprep.subr.bf16.mxu0 %v3677
    %3816 = vmatpush2.bf16.msra.mxu0 %v3676
    %3817 = vmatprep.subr.bf16.mxu0 %v3675
    %3818 = vmatpush2.bf16.msra.mxu0 %v3674
    %3819 = vmatprep.subr.bf16.mxu0 %v3673
    %3820 = vmatpush2.bf16.msra.mxu0 %v3672
    %3821 = vmatprep.subr.bf16.mxu0 %v3671
    %3822 = vmatpush2.bf16.msra.mxu0 %v3670
    %3823 = vmatprep.mubr.bf16.mxu0 %v3418
    %3824 = vmatmul.mubr.bf16.gmra.mxu0 %v3417
    %v3825 = vpop.f32.mrf.mxu0
    %v3826 = vadd.f32 %v3785, %v3825
    %v3827 = vpop.f32.mrf.mxu0
    %v3828 = vadd.f32 %v3787, %v3827
    %v3829 = vpop.f32.mrf.mxu0
    %v3830 = vpop.f32.mrf.mxu0
    %3831 = vdwg.mxu0
    %v3832 = vmax.f32 %v3826, 0.0
    %v3833 = vmax.f32 %v3828, 0.0
    %v3834 = vld [vmem:[#allocation10] sm:$0xff]
    %v3835 = vld [vmem:[#allocation10 + $0x8] sm:$0xff]
    %v3836 = vld [vmem:[#allocation10 + $0x10] sm:$0xff]
    %v3837 = vld [vmem:[#allocation10 + $0x18] sm:$0xff]
    %v3838 = vld [vmem:[#allocation10 + $0x20] sm:$0xff]
    %v3839 = vld [vmem:[#allocation10 + $0x28] sm:$0xff]
    %v3840 = vld [vmem:[#allocation10 + $0x30] sm:$0xff]
    %v3841 = vld [vmem:[#allocation10 + $0x38] sm:$0xff]
    %v3842 = vld [vmem:[#allocation10 + $0x40] sm:$0xff]
    %v3843 = vld [vmem:[#allocation10 + $0x48] sm:$0xff]
    %v3844 = vld [vmem:[#allocation10 + $0x50] sm:$0xff]
    %v3845 = vld [vmem:[#allocation10 + $0x58] sm:$0xff]
    %v3846 = vld [vmem:[#allocation10 + $0x60] sm:$0xff]
    %v3847 = vld [vmem:[#allocation10 + $0x68] sm:$0xff]
    %v3848 = vld [vmem:[#allocation10 + $0x70] sm:$0xff]
    %v3849 = vld [vmem:[#allocation10 + $0x78] sm:$0xff]
    %v3850 = vld [vmem:[#allocation10 + $0x80] sm:$0xff]
    %v3851 = vld [vmem:[#allocation10 + $0x88] sm:$0xff]
    %v3852 = vld [vmem:[#allocation10 + $0x90] sm:$0xff]
    %v3853 = vld [vmem:[#allocation10 + $0x98] sm:$0xff]
    %v3854 = vld [vmem:[#allocation10 + $0xa0] sm:$0xff]
    %v3855 = vld [vmem:[#allocation10 + $0xa8] sm:$0xff]
    %v3856 = vld [vmem:[#allocation10 + $0xb0] sm:$0xff]
    %v3857 = vld [vmem:[#allocation10 + $0xb8] sm:$0xff]
    %v3858 = vld [vmem:[#allocation10 + $0xc0] sm:$0xff]
    %v3859 = vld [vmem:[#allocation10 + $0xc8] sm:$0xff]
    %v3860 = vld [vmem:[#allocation10 + $0xd0] sm:$0xff]
    %v3861 = vld [vmem:[#allocation10 + $0xd8] sm:$0xff]
    %v3862 = vld [vmem:[#allocation10 + $0xe0] sm:$0xff]
    %v3863 = vld [vmem:[#allocation10 + $0xe8] sm:$0xff]
    %v3864 = vld [vmem:[#allocation10 + $0xf0] sm:$0xff]
    %v3865 = vld [vmem:[#allocation10 + $0xf8] sm:$0xff]
    %v3866 = vld [vmem:[%s10] sm:$0x3]
    %v3867 = vpack.c.bf16 %v3832, %v3832
    %v3868 = vpack.c.bf16 %v3833, %v3833
    %v3870 = vlaneseq
    %v3871 = vshrl.u32 %v3870, 7
    %v3872 = vsub.s32 0, %v3871
    %v3873 = vrot.slane %v3866, %v3872
    %v3874 = vlaneseq
    %v3875 = vshrl.u32 %v3874, 7
    %v3876 = vsub.s32 1, %v3875
    %v3877 = vrot.slane %v3866, %v3876
    %v3912 = vunpack.c.l.b16 %v3834
    %v3913 = vunpack.c.h.b16 %v3834
    %v3914 = vunpack.c.l.b16 %v3835
    %v3915 = vunpack.c.h.b16 %v3835
    %v3916 = vunpack.c.l.b16 %v3836
    %v3917 = vunpack.c.h.b16 %v3836
    %v3918 = vunpack.c.l.b16 %v3837
    %v3919 = vunpack.c.h.b16 %v3837
    %v3920 = vunpack.c.l.b16 %v3838
    %v3921 = vunpack.c.h.b16 %v3838
    %v3922 = vunpack.c.l.b16 %v3839
    %v3923 = vunpack.c.h.b16 %v3839
    %v3924 = vunpack.c.l.b16 %v3840
    %v3925 = vunpack.c.h.b16 %v3840
    %v3926 = vunpack.c.l.b16 %v3841
    %v3927 = vunpack.c.h.b16 %v3841
    %v3928 = vunpack.c.l.b16 %v3842
    %v3929 = vunpack.c.h.b16 %v3842
    %v3930 = vunpack.c.l.b16 %v3843
    %v3931 = vunpack.c.h.b16 %v3843
    %v3932 = vunpack.c.l.b16 %v3844
    %v3933 = vunpack.c.h.b16 %v3844
    %v3934 = vunpack.c.l.b16 %v3845
    %v3935 = vunpack.c.h.b16 %v3845
    %v3936 = vunpack.c.l.b16 %v3846
    %v3937 = vunpack.c.h.b16 %v3846
    %v3938 = vunpack.c.l.b16 %v3847
    %v3939 = vunpack.c.h.b16 %v3847
    %v3940 = vunpack.c.l.b16 %v3848
    %v3941 = vunpack.c.h.b16 %v3848
    %v3942 = vunpack.c.l.b16 %v3849
    %v3943 = vunpack.c.h.b16 %v3849
    %v3944 = vunpack.c.l.b16 %v3850
    %v3945 = vunpack.c.h.b16 %v3850
    %v3946 = vunpack.c.l.b16 %v3851
    %v3947 = vunpack.c.h.b16 %v3851
    %v3948 = vunpack.c.l.b16 %v3852
    %v3949 = vunpack.c.h.b16 %v3852
    %v3950 = vunpack.c.l.b16 %v3853
    %v3951 = vunpack.c.h.b16 %v3853
    %v3952 = vunpack.c.l.b16 %v3854
    %v3953 = vunpack.c.h.b16 %v3854
    %v3954 = vunpack.c.l.b16 %v3855
    %v3955 = vunpack.c.h.b16 %v3855
    %v3956 = vunpack.c.l.b16 %v3856
    %v3957 = vunpack.c.h.b16 %v3856
    %v3958 = vunpack.c.l.b16 %v3857
    %v3959 = vunpack.c.h.b16 %v3857
    %v3960 = vunpack.c.l.b16 %v3858
    %v3961 = vunpack.c.h.b16 %v3858
    %v3962 = vunpack.c.l.b16 %v3859
    %v3963 = vunpack.c.h.b16 %v3859
    %v3964 = vunpack.c.l.b16 %v3860
    %v3965 = vunpack.c.h.b16 %v3860
    %v3966 = vunpack.c.l.b16 %v3861
    %v3967 = vunpack.c.h.b16 %v3861
    %v3968 = vunpack.c.l.b16 %v3862
    %v3969 = vunpack.c.h.b16 %v3862
    %v3970 = vunpack.c.l.b16 %v3863
    %v3971 = vunpack.c.h.b16 %v3863
    %v3972 = vunpack.c.l.b16 %v3864
    %v3973 = vunpack.c.h.b16 %v3864
    %v3974 = vunpack.c.l.b16 %v3865
    %v3975 = vunpack.c.h.b16 %v3865
    %v3976 = vpack.c.b16 %v3914, %v3912
    %v3977 = vpack.c.b16 %v3915, %v3913
    %v3978 = vpack.c.b16 %v3918, %v3916
    %v3979 = vpack.c.b16 %v3919, %v3917
    %v3980 = vpack.c.b16 %v3922, %v3920
    %v3981 = vpack.c.b16 %v3923, %v3921
    %v3982 = vpack.c.b16 %v3926, %v3924
    %v3983 = vpack.c.b16 %v3927, %v3925
    %v3984 = vpack.c.b16 %v3930, %v3928
    %v3985 = vpack.c.b16 %v3931, %v3929
    %v3986 = vpack.c.b16 %v3934, %v3932
    %v3987 = vpack.c.b16 %v3935, %v3933
    %v3988 = vpack.c.b16 %v3938, %v3936
    %v3989 = vpack.c.b16 %v3939, %v3937
    %v3990 = vpack.c.b16 %v3942, %v3940
    %v3991 = vpack.c.b16 %v3943, %v3941
    %v3992 = vpack.c.b16 %v3946, %v3944
    %v3993 = vpack.c.b16 %v3947, %v3945
    %v3994 = vpack.c.b16 %v3950, %v3948
    %v3995 = vpack.c.b16 %v3951, %v3949
    %v3996 = vpack.c.b16 %v3954, %v3952
    %v3997 = vpack.c.b16 %v3955, %v3953
    %v3998 = vpack.c.b16 %v3958, %v3956
    %v3999 = vpack.c.b16 %v3959, %v3957
    %v4000 = vpack.c.b16 %v3962, %v3960
    %v4001 = vpack.c.b16 %v3963, %v3961
    %v4002 = vpack.c.b16 %v3966, %v3964
    %v4003 = vpack.c.b16 %v3967, %v3965
    %v4004 = vpack.c.b16 %v3970, %v3968
    %v4005 = vpack.c.b16 %v3971, %v3969
    %v4006 = vpack.c.b16 %v3974, %v3972
    %v4007 = vpack.c.b16 %v3975, %v3973
    %4040 = vmatprep.subr.bf16.mxu0 %v3991
    %4041 = vmatpush1.bf16.msra.mxu0 %v3990
    %4042 = vmatprep.subr.bf16.mxu0 %v3989
    %4043 = vmatpush1.bf16.msra.mxu0 %v3988
    %4044 = vmatprep.subr.bf16.mxu0 %v3987
    %4045 = vmatpush1.bf16.msra.mxu0 %v3986
    %4046 = vmatprep.subr.bf16.mxu0 %v3985
    %4047 = vmatpush1.bf16.msra.mxu0 %v3984
    %4048 = vmatprep.subr.bf16.mxu0 %v3983
    %4049 = vmatpush1.bf16.msra.mxu0 %v3982
    %4050 = vmatprep.subr.bf16.mxu0 %v3981
    %4051 = vmatpush1.bf16.msra.mxu0 %v3980
    %4052 = vmatprep.subr.bf16.mxu0 %v3979
    %4053 = vmatpush1.bf16.msra.mxu0 %v3978
    %4054 = vmatprep.subr.bf16.mxu0 %v3977
    %4055 = vmatpush1.bf16.msra.mxu0 %v3976
    %4056 = vmatprep.subr.bf16.mxu0 %v4007
    %4057 = vmatpush2.bf16.msra.mxu0 %v4006
    %4058 = vmatprep.subr.bf16.mxu0 %v4005
    %4059 = vmatpush2.bf16.msra.mxu0 %v4004
    %4060 = vmatprep.subr.bf16.mxu0 %v4003
    %4061 = vmatpush2.bf16.msra.mxu0 %v4002
    %4062 = vmatprep.subr.bf16.mxu0 %v4001
    %4063 = vmatpush2.bf16.msra.mxu0 %v4000
    %4064 = vmatprep.subr.bf16.mxu0 %v3999
    %4065 = vmatpush2.bf16.msra.mxu0 %v3998
    %4066 = vmatprep.subr.bf16.mxu0 %v3997
    %4067 = vmatpush2.bf16.msra.mxu0 %v3996
    %4068 = vmatprep.subr.bf16.mxu0 %v3995
    %4069 = vmatpush2.bf16.msra.mxu0 %v3994
    %4070 = vmatprep.subr.bf16.mxu0 %v3993
    %4071 = vmatpush2.bf16.msra.mxu0 %v3992
    %4072 = vmatprep.mubr.bf16.mxu0 %v3868
    %4073 = vmatmul.mubr.bf16.gmra.mxu0 %v3867
    %v4074 = vpop.f32.mrf.mxu0
    %v4075 = vadd.f32 %v3873, %v4074
    %v4076 = vpop.f32.mrf.mxu0
    %v4077 = vadd.f32 %v3877, %v4076
    %v4078 = vpop.f32.mrf.mxu0
    %v4079 = vpop.f32.mrf.mxu0
    %4080 = vdwg.mxu0
    %v4081 = vmax.f32 %v4075, 0.0
    %v4082 = vmax.f32 %v4077, 0.0
    %v4083 = vld [vmem:[#allocation11] sm:$0xf]
    %v4084 = vld [vmem:[#allocation11 + $0x4] sm:$0xf]
    %v4085 = vld [vmem:[#allocation11 + $0x8] sm:$0xf]
    %v4086 = vld [vmem:[#allocation11 + $0xc] sm:$0xf]
    %v4087 = vld [vmem:[#allocation11 + $0x10] sm:$0xf]
    %v4088 = vld [vmem:[#allocation11 + $0x14] sm:$0xf]
    %v4089 = vld [vmem:[#allocation11 + $0x18] sm:$0xf]
    %v4090 = vld [vmem:[#allocation11 + $0x1c] sm:$0xf]
    %v4091 = vld [vmem:[#allocation11 + $0x20] sm:$0xf]
    %v4092 = vld [vmem:[#allocation11 + $0x24] sm:$0xf]
    %v4093 = vld [vmem:[#allocation11 + $0x28] sm:$0xf]
    %v4094 = vld [vmem:[#allocation11 + $0x2c] sm:$0xf]
    %v4095 = vld [vmem:[#allocation11 + $0x30] sm:$0xf]
    %v4096 = vld [vmem:[#allocation11 + $0x34] sm:$0xf]
    %v4097 = vld [vmem:[#allocation11 + $0x38] sm:$0xf]
    %v4098 = vld [vmem:[#allocation11 + $0x3c] sm:$0xf]
    %v4099 = vld [vmem:[#allocation11 + $0x40] sm:$0xf]
    %v4100 = vld [vmem:[#allocation11 + $0x44] sm:$0xf]
    %v4101 = vld [vmem:[#allocation11 + $0x48] sm:$0xf]
    %v4102 = vld [vmem:[#allocation11 + $0x4c] sm:$0xf]
    %v4103 = vld [vmem:[#allocation11 + $0x50] sm:$0xf]
    %v4104 = vld [vmem:[#allocation11 + $0x54] sm:$0xf]
    %v4105 = vld [vmem:[#allocation11 + $0x58] sm:$0xf]
    %v4106 = vld [vmem:[#allocation11 + $0x5c] sm:$0xf]
    %v4107 = vld [vmem:[#allocation11 + $0x60] sm:$0xf]
    %v4108 = vld [vmem:[#allocation11 + $0x64] sm:$0xf]
    %v4109 = vld [vmem:[#allocation11 + $0x68] sm:$0xf]
    %v4110 = vld [vmem:[#allocation11 + $0x6c] sm:$0xf]
    %v4111 = vld [vmem:[#allocation11 + $0x70] sm:$0xf]
    %v4112 = vld [vmem:[#allocation11 + $0x74] sm:$0xf]
    %v4113 = vld [vmem:[#allocation11 + $0x78] sm:$0xf]
    %v4114 = vld [vmem:[#allocation11 + $0x7c] sm:$0xf]
    %v4115 = vld [vmem:[%s12] sm:$0x1]
    %v4116 = vpack.c.bf16 %v4081, %v4081
    %v4117 = vpack.c.bf16 %v4082, %v4082
    %v4119 = vlaneseq
    %v4120 = vshrl.u32 %v4119, 7
    %v4121 = vsub.s32 0, %v4120
    %v4122 = vrot.slane %v4115, %v4121
    %v4156 = vunpack.c.l.b16 %v4083
    %v4157 = vunpack.c.l.b16 %v4084
    %v4158 = vunpack.c.l.b16 %v4085
    %v4159 = vunpack.c.l.b16 %v4086
    %v4160 = vunpack.c.l.b16 %v4087
    %v4161 = vunpack.c.l.b16 %v4088
    %v4162 = vunpack.c.l.b16 %v4089
    %v4163 = vunpack.c.l.b16 %v4090
    %v4164 = vunpack.c.l.b16 %v4091
    %v4165 = vunpack.c.l.b16 %v4092
    %v4166 = vunpack.c.l.b16 %v4093
    %v4167 = vunpack.c.l.b16 %v4094
    %v4168 = vunpack.c.l.b16 %v4095
    %v4169 = vunpack.c.l.b16 %v4096
    %v4170 = vunpack.c.l.b16 %v4097
    %v4171 = vunpack.c.l.b16 %v4098
    %v4172 = vunpack.c.l.b16 %v4099
    %v4173 = vunpack.c.l.b16 %v4100
    %v4174 = vunpack.c.l.b16 %v4101
    %v4175 = vunpack.c.l.b16 %v4102
    %v4176 = vunpack.c.l.b16 %v4103
    %v4177 = vunpack.c.l.b16 %v4104
    %v4178 = vunpack.c.l.b16 %v4105
    %v4179 = vunpack.c.l.b16 %v4106
    %v4180 = vunpack.c.l.b16 %v4107
    %v4181 = vunpack.c.l.b16 %v4108
    %v4182 = vunpack.c.l.b16 %v4109
    %v4183 = vunpack.c.l.b16 %v4110
    %v4184 = vunpack.c.l.b16 %v4111
    %v4185 = vunpack.c.l.b16 %v4112
    %v4186 = vunpack.c.l.b16 %v4113
    %v4187 = vunpack.c.l.b16 %v4114
    %v4188 = vpack.c.b16 %v4157, %v4156
    %v4189 = vpack.c.b16 %v4159, %v4158
    %v4190 = vpack.c.b16 %v4161, %v4160
    %v4191 = vpack.c.b16 %v4163, %v4162
    %v4192 = vpack.c.b16 %v4165, %v4164
    %v4193 = vpack.c.b16 %v4167, %v4166
    %v4194 = vpack.c.b16 %v4169, %v4168
    %v4195 = vpack.c.b16 %v4171, %v4170
    %v4196 = vpack.c.b16 %v4173, %v4172
    %v4197 = vpack.c.b16 %v4175, %v4174
    %v4198 = vpack.c.b16 %v4177, %v4176
    %v4199 = vpack.c.b16 %v4179, %v4178
    %v4200 = vpack.c.b16 %v4181, %v4180
    %v4201 = vpack.c.b16 %v4183, %v4182
    %v4202 = vpack.c.b16 %v4185, %v4184
    %v4203 = vpack.c.b16 %v4187, %v4186
    %4220 = vmatprep.subr.bf16.mxu0 0
    %4221 = vmatpush1.bf16.msra.mxu0 %v4195
    %4222 = vmatprep.subr.bf16.mxu0 0
    %4223 = vmatpush1.bf16.msra.mxu0 %v4194
    %4224 = vmatprep.subr.bf16.mxu0 0
    %4225 = vmatpush1.bf16.msra.mxu0 %v4193
    %4226 = vmatprep.subr.bf16.mxu0 0
    %4227 = vmatpush1.bf16.msra.mxu0 %v4192
    %4228 = vmatprep.subr.bf16.mxu0 0
    %4229 = vmatpush1.bf16.msra.mxu0 %v4191
    %4230 = vmatprep.subr.bf16.mxu0 0
    %4231 = vmatpush1.bf16.msra.mxu0 %v4190
    %4232 = vmatprep.subr.bf16.mxu0 0
    %4233 = vmatpush1.bf16.msra.mxu0 %v4189
    %4234 = vmatprep.subr.bf16.mxu0 0
    %4235 = vmatpush1.bf16.msra.mxu0 %v4188
    %4236 = vmatprep.subr.bf16.mxu0 0
    %4237 = vmatpush2.bf16.msra.mxu0 %v4203
    %4238 = vmatprep.subr.bf16.mxu0 0
    %4239 = vmatpush2.bf16.msra.mxu0 %v4202
    %4240 = vmatprep.subr.bf16.mxu0 0
    %4241 = vmatpush2.bf16.msra.mxu0 %v4201
    %4242 = vmatprep.subr.bf16.mxu0 0
    %4243 = vmatpush2.bf16.msra.mxu0 %v4200
    %4244 = vmatprep.subr.bf16.mxu0 0
    %4245 = vmatpush2.bf16.msra.mxu0 %v4199
    %4246 = vmatprep.subr.bf16.mxu0 0
    %4247 = vmatpush2.bf16.msra.mxu0 %v4198
    %4248 = vmatprep.subr.bf16.mxu0 0
    %4249 = vmatpush2.bf16.msra.mxu0 %v4197
    %4250 = vmatprep.subr.bf16.mxu0 0
    %4251 = vmatpush2.bf16.msra.mxu0 %v4196
    %4252 = vmatprep.mubr.bf16.mxu0 %v4117
    %4253 = vmatmul.mubr.bf16.gmra.mxu0 %v4116
    %v4254 = vpop.f32.mrf.mxu0
    %v4255 = vadd.f32 %v4122, %v4254
    %v4256 = vpop.f32.mrf.mxu0
    %v4257 = vpop.f32.mrf.mxu0
    %v4258 = vpop.f32.mrf.mxu0
    %4259 = vdwg.mxu0
    %v4260 = vmax.f32 %v4255, 0.0
    %v4261 = vld [vmem:[#allocation13] sm:$0xf]
    %v4262 = vld [vmem:[#allocation13 + $0x4] sm:$0xf]
    %v4263 = vld [vmem:[#allocation13 + $0x8] sm:$0xf]
    %v4264 = vld [vmem:[#allocation13 + $0xc] sm:$0xf]
    %v4265 = vld [vmem:[#allocation13 + $0x10] sm:$0xf]
    %v4266 = vld [vmem:[#allocation13 + $0x14] sm:$0xf]
    %v4267 = vld [vmem:[#allocation13 + $0x18] sm:$0xf]
    %v4268 = vld [vmem:[#allocation13 + $0x1c] sm:$0xf]
    %v4269 = vld [vmem:[#allocation13 + $0x20] sm:$0xf]
    %v4270 = vld [vmem:[#allocation13 + $0x24] sm:$0xf]
    %v4271 = vld [vmem:[#allocation13 + $0x28] sm:$0xf]
    %v4272 = vld [vmem:[#allocation13 + $0x2c] sm:$0xf]
    %v4273 = vld [vmem:[#allocation13 + $0x30] sm:$0xf]
    %v4274 = vld [vmem:[#allocation13 + $0x34] sm:$0xf]
    %v4275 = vld [vmem:[#allocation13 + $0x38] sm:$0xf]
    %v4276 = vld [vmem:[#allocation13 + $0x3c] sm:$0xf]
    %v4277 = vld [vmem:[%s14] sm:$0x1]
    %v4278 = vpack.c.bf16 %v4260, %v4260
    %v4280 = vlaneseq
    %v4281 = vshrl.u32 %v4280, 7
    %v4282 = vsub.s32 0, %v4281
    %v4283 = vrot.slane %v4277, %v4282
    %v4301 = vunpack.c.l.b16 %v4261
    %v4302 = vunpack.c.l.b16 %v4262
    %v4303 = vunpack.c.l.b16 %v4263
    %v4304 = vunpack.c.l.b16 %v4264
    %v4305 = vunpack.c.l.b16 %v4265
    %v4306 = vunpack.c.l.b16 %v4266
    %v4307 = vunpack.c.l.b16 %v4267
    %v4308 = vunpack.c.l.b16 %v4268
    %v4309 = vunpack.c.l.b16 %v4269
    %v4310 = vunpack.c.l.b16 %v4270
    %v4311 = vunpack.c.l.b16 %v4271
    %v4312 = vunpack.c.l.b16 %v4272
    %v4313 = vunpack.c.l.b16 %v4273
    %v4314 = vunpack.c.l.b16 %v4274
    %v4315 = vunpack.c.l.b16 %v4275
    %v4316 = vunpack.c.l.b16 %v4276
    %v4317 = vpack.c.b16 %v4302, %v4301
    %v4318 = vpack.c.b16 %v4304, %v4303
    %v4319 = vpack.c.b16 %v4306, %v4305
    %v4320 = vpack.c.b16 %v4308, %v4307
    %v4321 = vpack.c.b16 %v4310, %v4309
    %v4322 = vpack.c.b16 %v4312, %v4311
    %v4323 = vpack.c.b16 %v4314, %v4313
    %v4324 = vpack.c.b16 %v4316, %v4315
    %4333 = vmatprep.subr.bf16.mxu0 0
    %4334 = vmatpush1.bf16.msra.mxu0 %v4324
    %4335 = vmatprep.subr.bf16.mxu0 0
    %4336 = vmatpush1.bf16.msra.mxu0 %v4323
    %4337 = vmatprep.subr.bf16.mxu0 0
    %4338 = vmatpush1.bf16.msra.mxu0 %v4322
    %4339 = vmatprep.subr.bf16.mxu0 0
    %4340 = vmatpush1.bf16.msra.mxu0 %v4321
    %4341 = vmatprep.subr.bf16.mxu0 0
    %4342 = vmatpush1.bf16.msra.mxu0 %v4320
    %4343 = vmatprep.subr.bf16.mxu0 0
    %4344 = vmatpush1.bf16.msra.mxu0 %v4319
    %4345 = vmatprep.subr.bf16.mxu0 0
    %4346 = vmatpush1.bf16.msra.mxu0 %v4318
    %4347 = vmatprep.subr.bf16.mxu0 0
    %4348 = vmatpush1.bf16.msra.mxu0 %v4317
    %4349 = vmatprep.subr.bf16.mxu0 0
    %4350 = vmatpush2.bf16.msra.mxu0 0
    %4351 = vmatprep.subr.bf16.mxu0 0
    %4352 = vmatpush2.bf16.msra.mxu0 0
    %4353 = vmatprep.subr.bf16.mxu0 0
    %4354 = vmatpush2.bf16.msra.mxu0 0
    %4355 = vmatprep.subr.bf16.mxu0 0
    %4356 = vmatpush2.bf16.msra.mxu0 0
    %4357 = vmatprep.subr.bf16.mxu0 0
    %4358 = vmatpush2.bf16.msra.mxu0 0
    %4359 = vmatprep.subr.bf16.mxu0 0
    %4360 = vmatpush2.bf16.msra.mxu0 0
    %4361 = vmatprep.subr.bf16.mxu0 0
    %4362 = vmatpush2.bf16.msra.mxu0 0
    %4363 = vmatprep.subr.bf16.mxu0 0
    %4364 = vmatpush2.bf16.msra.mxu0 0
    %4365 = vmatprep.mubr.bf16.mxu0 0
    %4366 = vmatmul.mubr.bf16.gmra.mxu0 %v4278
    %v4367 = vpop.f32.mrf.mxu0
    %v4368 = vadd.f32 %v4283, %v4367
    %v4369 = vpop.f32.mrf.mxu0
    %v4370 = vpop.f32.mrf.mxu0
    %v4371 = vpop.f32.mrf.mxu0
    %4372 = vdwg.mxu0
    %v4373 = vmax.f32 %v4368, 0.0
    %v4374 = vld [vmem:[#allocation14] sm:$0xf]
    %v4375 = vld [vmem:[#allocation14 + $0x4] sm:$0xf]
    %v4376 = vld [vmem:[#allocation14 + $0x8] sm:$0xf]
    %v4377 = vld [vmem:[#allocation14 + $0xc] sm:$0xf]
    %v4378 = vld [vmem:[#allocation14 + $0x10] sm:$0xf]
    %v4379 = vld [vmem:[#allocation14 + $0x14] sm:$0xf]
    %v4380 = vld [vmem:[#allocation14 + $0x18] sm:$0xf]
    %v4381 = vld [vmem:[#allocation14 + $0x1c] sm:$0xf]
    %v4382 = vld [vmem:[#allocation14 + $0x20] sm:$0xf]
    %v4383 = vld [vmem:[#allocation14 + $0x24] sm:$0xf]
    %v4384 = vld [vmem:[#allocation14 + $0x28] sm:$0xf]
    %v4385 = vld [vmem:[#allocation14 + $0x2c] sm:$0xf]
    %v4386 = vld [vmem:[#allocation14 + $0x30] sm:$0xf]
    %v4387 = vld [vmem:[#allocation14 + $0x34] sm:$0xf]
    %v4388 = vld [vmem:[#allocation14 + $0x38] sm:$0xf]
    %v4389 = vld [vmem:[#allocation14 + $0x3c] sm:$0xf]
    %v4390 = vld [vmem:[%s16] sm:$0x1]
    %v4391 = vpack.c.bf16 %v4373, %v4373
    %v4393 = vlaneseq
    %v4394 = vshrl.u32 %v4393, 7
    %v4395 = vsub.s32 0, %v4394
    %v4396 = vrot.slane %v4390, %v4395
    %v4414 = vunpack.c.l.b16 %v4374
    %v4415 = vunpack.c.l.b16 %v4375
    %v4416 = vunpack.c.l.b16 %v4376
    %v4417 = vunpack.c.l.b16 %v4377
    %v4418 = vunpack.c.l.b16 %v4378
    %v4419 = vunpack.c.l.b16 %v4379
    %v4420 = vunpack.c.l.b16 %v4380
    %v4421 = vunpack.c.l.b16 %v4381
    %v4422 = vunpack.c.l.b16 %v4382
    %v4423 = vunpack.c.l.b16 %v4383
    %v4424 = vunpack.c.l.b16 %v4384
    %v4425 = vunpack.c.l.b16 %v4385
    %v4426 = vunpack.c.l.b16 %v4386
    %v4427 = vunpack.c.l.b16 %v4387
    %v4428 = vunpack.c.l.b16 %v4388
    %v4429 = vunpack.c.l.b16 %v4389
    %v4430 = vpack.c.b16 %v4415, %v4414
    %v4431 = vpack.c.b16 %v4417, %v4416
    %v4432 = vpack.c.b16 %v4419, %v4418
    %v4433 = vpack.c.b16 %v4421, %v4420
    %v4434 = vpack.c.b16 %v4423, %v4422
    %v4435 = vpack.c.b16 %v4425, %v4424
    %v4436 = vpack.c.b16 %v4427, %v4426
    %v4437 = vpack.c.b16 %v4429, %v4428
    %4446 = vmatprep.subr.bf16.mxu0 0
    %4447 = vmatpush1.bf16.msra.mxu0 %v4437
    %4448 = vmatprep.subr.bf16.mxu0 0
    %4449 = vmatpush1.bf16.msra.mxu0 %v4436
    %4450 = vmatprep.subr.bf16.mxu0 0
    %4451 = vmatpush1.bf16.msra.mxu0 %v4435
    %4452 = vmatprep.subr.bf16.mxu0 0
    %4453 = vmatpush1.bf16.msra.mxu0 %v4434
    %4454 = vmatprep.subr.bf16.mxu0 0
    %4455 = vmatpush1.bf16.msra.mxu0 %v4433
    %4456 = vmatprep.subr.bf16.mxu0 0
    %4457 = vmatpush1.bf16.msra.mxu0 %v4432
    %4458 = vmatprep.subr.bf16.mxu0 0
    %4459 = vmatpush1.bf16.msra.mxu0 %v4431
    %4460 = vmatprep.subr.bf16.mxu0 0
    %4461 = vmatpush1.bf16.msra.mxu0 %v4430
    %4462 = vmatprep.subr.bf16.mxu0 0
    %4463 = vmatpush2.bf16.msra.mxu0 0
    %4464 = vmatprep.subr.bf16.mxu0 0
    %4465 = vmatpush2.bf16.msra.mxu0 0
    %4466 = vmatprep.subr.bf16.mxu0 0
    %4467 = vmatpush2.bf16.msra.mxu0 0
    %4468 = vmatprep.subr.bf16.mxu0 0
    %4469 = vmatpush2.bf16.msra.mxu0 0
    %4470 = vmatprep.subr.bf16.mxu0 0
    %4471 = vmatpush2.bf16.msra.mxu0 0
    %4472 = vmatprep.subr.bf16.mxu0 0
    %4473 = vmatpush2.bf16.msra.mxu0 0
    %4474 = vmatprep.subr.bf16.mxu0 0
    %4475 = vmatpush2.bf16.msra.mxu0 0
    %4476 = vmatprep.subr.bf16.mxu0 0
    %4477 = vmatpush2.bf16.msra.mxu0 0
    %4478 = vmatprep.mubr.bf16.mxu0 0
    %4479 = vmatmul.mubr.bf16.gmra.mxu0 %v4391
    %v4480 = vpop.f32.mrf.mxu0
    %v4481 = vadd.f32 %v4396, %v4480
    %v4482 = vpop.f32.mrf.mxu0
    %v4483 = vpop.f32.mrf.mxu0
    %v4484 = vpop.f32.mrf.mxu0
    %4485 = vdwg.mxu0
    %v4486 = vmax.f32 %v4481, 0.0
    %v4487 = vld [vmem:[#allocation16] sm:$0xf]
    %v4488 = vld [vmem:[#allocation16 + $0x4] sm:$0xf]
    %v4489 = vld [vmem:[#allocation16 + $0x8] sm:$0xf]
    %v4490 = vld [vmem:[#allocation16 + $0xc] sm:$0xf]
    %v4491 = vld [vmem:[#allocation16 + $0x10] sm:$0xf]
    %v4492 = vld [vmem:[#allocation16 + $0x14] sm:$0xf]
    %v4493 = vld [vmem:[#allocation16 + $0x18] sm:$0xf]
    %v4494 = vld [vmem:[#allocation16 + $0x1c] sm:$0xf]
    %v4495 = vld [vmem:[#allocation16 + $0x20] sm:$0xf]
    %v4496 = vld [vmem:[#allocation16 + $0x24] sm:$0xf]
    %v4497 = vld [vmem:[#allocation16 + $0x28] sm:$0xf]
    %v4498 = vld [vmem:[#allocation16 + $0x2c] sm:$0xf]
    %v4499 = vld [vmem:[#allocation16 + $0x30] sm:$0xf]
    %v4500 = vld [vmem:[#allocation16 + $0x34] sm:$0xf]
    %v4501 = vld [vmem:[#allocation16 + $0x38] sm:$0xf]
    %v4502 = vld [vmem:[#allocation16 + $0x3c] sm:$0xf]
    %v4503 = vld [vmem:[%s18] sm:$0x1]
    %v4504 = vpack.c.bf16 %v4486, %v4486
    %v4506 = vlaneseq
    %v4507 = vshrl.u32 %v4506, 7
    %v4508 = vsub.s32 0, %v4507
    %v4509 = vrot.slane %v4503, %v4508
    %v4527 = vunpack.c.l.b16 %v4487
    %v4528 = vunpack.c.l.b16 %v4488
    %v4529 = vunpack.c.l.b16 %v4489
    %v4530 = vunpack.c.l.b16 %v4490
    %v4531 = vunpack.c.l.b16 %v4491
    %v4532 = vunpack.c.l.b16 %v4492
    %v4533 = vunpack.c.l.b16 %v4493
    %v4534 = vunpack.c.l.b16 %v4494
    %v4535 = vunpack.c.l.b16 %v4495
    %v4536 = vunpack.c.l.b16 %v4496
    %v4537 = vunpack.c.l.b16 %v4497
    %v4538 = vunpack.c.l.b16 %v4498
    %v4539 = vunpack.c.l.b16 %v4499
    %v4540 = vunpack.c.l.b16 %v4500
    %v4541 = vunpack.c.l.b16 %v4501
    %v4542 = vunpack.c.l.b16 %v4502
    %v4543 = vpack.c.b16 %v4528, %v4527
    %v4544 = vpack.c.b16 %v4530, %v4529
    %v4545 = vpack.c.b16 %v4532, %v4531
    %v4546 = vpack.c.b16 %v4534, %v4533
    %v4547 = vpack.c.b16 %v4536, %v4535
    %v4548 = vpack.c.b16 %v4538, %v4537
    %v4549 = vpack.c.b16 %v4540, %v4539
    %v4550 = vpack.c.b16 %v4542, %v4541
    %4559 = vmatprep.subr.bf16.mxu0 0
    %4560 = vmatpush1.bf16.msra.mxu0 %v4550
    %4561 = vmatprep.subr.bf16.mxu0 0
    %4562 = vmatpush1.bf16.msra.mxu0 %v4549
    %4563 = vmatprep.subr.bf16.mxu0 0
    %4564 = vmatpush1.bf16.msra.mxu0 %v4548
    %4565 = vmatprep.subr.bf16.mxu0 0
    %4566 = vmatpush1.bf16.msra.mxu0 %v4547
    %4567 = vmatprep.subr.bf16.mxu0 0
    %4568 = vmatpush1.bf16.msra.mxu0 %v4546
    %4569 = vmatprep.subr.bf16.mxu0 0
    %4570 = vmatpush1.bf16.msra.mxu0 %v4545
    %4571 = vmatprep.subr.bf16.mxu0 0
    %4572 = vmatpush1.bf16.msra.mxu0 %v4544
    %4573 = vmatprep.subr.bf16.mxu0 0
    %4574 = vmatpush1.bf16.msra.mxu0 %v4543
    %4575 = vmatprep.subr.bf16.mxu0 0
    %4576 = vmatpush2.bf16.msra.mxu0 0
    %4577 = vmatprep.subr.bf16.mxu0 0
    %4578 = vmatpush2.bf16.msra.mxu0 0
    %4579 = vmatprep.subr.bf16.mxu0 0
    %4580 = vmatpush2.bf16.msra.mxu0 0
    %4581 = vmatprep.subr.bf16.mxu0 0
    %4582 = vmatpush2.bf16.msra.mxu0 0
    %4583 = vmatprep.subr.bf16.mxu0 0
    %4584 = vmatpush2.bf16.msra.mxu0 0
    %4585 = vmatprep.subr.bf16.mxu0 0
    %4586 = vmatpush2.bf16.msra.mxu0 0
    %4587 = vmatprep.subr.bf16.mxu0 0
    %4588 = vmatpush2.bf16.msra.mxu0 0
    %4589 = vmatprep.subr.bf16.mxu0 0
    %4590 = vmatpush2.bf16.msra.mxu0 0
    %4591 = vmatprep.mubr.bf16.mxu0 0
    %4592 = vmatmul.mubr.bf16.gmra.mxu0 %v4504
    %v4593 = vpop.f32.mrf.mxu0
    %v4594 = vadd.f32 %v4509, %v4593
    %v4595 = vpop.f32.mrf.mxu0
    %v4596 = vpop.f32.mrf.mxu0
    %v4597 = vpop.f32.mrf.mxu0
    %4598 = vdwg.mxu0
    %v4599 = vmax.f32 %v4594, 0.0
    %v4600 = vld [vmem:[#allocation17] sm:$0xff]
    %v4601 = vld [vmem:[#allocation17 + $0x8] sm:$0xff]
    %v4602 = vld [vmem:[#allocation17 + $0x10] sm:$0xff]
    %v4603 = vld [vmem:[#allocation17 + $0x18] sm:$0xff]
    %v4604 = vld [vmem:[#allocation17 + $0x20] sm:$0xff]
    %v4605 = vld [vmem:[#allocation17 + $0x28] sm:$0xff]
    %v4606 = vld [vmem:[#allocation17 + $0x30] sm:$0xff]
    %v4607 = vld [vmem:[#allocation17 + $0x38] sm:$0xff]
    %v4608 = vld [vmem:[#allocation17 + $0x40] sm:$0xff]
    %v4609 = vld [vmem:[#allocation17 + $0x48] sm:$0xff]
    %v4610 = vld [vmem:[#allocation17 + $0x50] sm:$0xff]
    %v4611 = vld [vmem:[#allocation17 + $0x58] sm:$0xff]
    %v4612 = vld [vmem:[#allocation17 + $0x60] sm:$0xff]
    %v4613 = vld [vmem:[#allocation17 + $0x68] sm:$0xff]
    %v4614 = vld [vmem:[#allocation17 + $0x70] sm:$0xff]
    %v4615 = vld [vmem:[#allocation17 + $0x78] sm:$0xff]
    %v4616 = vld [vmem:[%s20] sm:$0x3]
    %v4617 = vpack.c.bf16 %v4599, %v4599
    %v4619 = vlaneseq
    %v4620 = vshrl.u32 %v4619, 7
    %v4621 = vsub.s32 0, %v4620
    %v4622 = vrot.slane %v4616, %v4621
    %v4623 = vlaneseq
    %v4624 = vshrl.u32 %v4623, 7
    %v4625 = vsub.s32 1, %v4624
    %v4626 = vrot.slane %v4616, %v4625
    %v4645 = vunpack.c.l.b16 %v4600
    %v4646 = vunpack.c.h.b16 %v4600
    %v4647 = vunpack.c.l.b16 %v4601
    %v4648 = vunpack.c.h.b16 %v4601
    %v4649 = vunpack.c.l.b16 %v4602
    %v4650 = vunpack.c.h.b16 %v4602
    %v4651 = vunpack.c.l.b16 %v4603
    %v4652 = vunpack.c.h.b16 %v4603
    %v4653 = vunpack.c.l.b16 %v4604
    %v4654 = vunpack.c.h.b16 %v4604
    %v4655 = vunpack.c.l.b16 %v4605
    %v4656 = vunpack.c.h.b16 %v4605
    %v4657 = vunpack.c.l.b16 %v4606
    %v4658 = vunpack.c.h.b16 %v4606
    %v4659 = vunpack.c.l.b16 %v4607
    %v4660 = vunpack.c.h.b16 %v4607
    %v4661 = vunpack.c.l.b16 %v4608
    %v4662 = vunpack.c.h.b16 %v4608
    %v4663 = vunpack.c.l.b16 %v4609
    %v4664 = vunpack.c.h.b16 %v4609
    %v4665 = vunpack.c.l.b16 %v4610
    %v4666 = vunpack.c.h.b16 %v4610
    %v4667 = vunpack.c.l.b16 %v4611
    %v4668 = vunpack.c.h.b16 %v4611
    %v4669 = vunpack.c.l.b16 %v4612
    %v4670 = vunpack.c.h.b16 %v4612
    %v4671 = vunpack.c.l.b16 %v4613
    %v4672 = vunpack.c.h.b16 %v4613
    %v4673 = vunpack.c.l.b16 %v4614
    %v4674 = vunpack.c.h.b16 %v4614
    %v4675 = vunpack.c.l.b16 %v4615
    %v4676 = vunpack.c.h.b16 %v4615
    %v4677 = vpack.c.b16 %v4647, %v4645
    %v4678 = vpack.c.b16 %v4648, %v4646
    %v4679 = vpack.c.b16 %v4651, %v4649
    %v4680 = vpack.c.b16 %v4652, %v4650
    %v4681 = vpack.c.b16 %v4655, %v4653
    %v4682 = vpack.c.b16 %v4656, %v4654
    %v4683 = vpack.c.b16 %v4659, %v4657
    %v4684 = vpack.c.b16 %v4660, %v4658
    %v4685 = vpack.c.b16 %v4663, %v4661
    %v4686 = vpack.c.b16 %v4664, %v4662
    %v4687 = vpack.c.b16 %v4667, %v4665
    %v4688 = vpack.c.b16 %v4668, %v4666
    %v4689 = vpack.c.b16 %v4671, %v4669
    %v4690 = vpack.c.b16 %v4672, %v4670
    %v4691 = vpack.c.b16 %v4675, %v4673
    %v4692 = vpack.c.b16 %v4676, %v4674
    %4709 = vmatprep.subr.bf16.mxu0 %v4692
    %4710 = vmatpush1.bf16.msra.mxu0 %v4691
    %4711 = vmatprep.subr.bf16.mxu0 %v4690
    %4712 = vmatpush1.bf16.msra.mxu0 %v4689
    %4713 = vmatprep.subr.bf16.mxu0 %v4688
    %4714 = vmatpush1.bf16.msra.mxu0 %v4687
    %4715 = vmatprep.subr.bf16.mxu0 %v4686
    %4716 = vmatpush1.bf16.msra.mxu0 %v4685
    %4717 = vmatprep.subr.bf16.mxu0 %v4684
    %4718 = vmatpush1.bf16.msra.mxu0 %v4683
    %4719 = vmatprep.subr.bf16.mxu0 %v4682
    %4720 = vmatpush1.bf16.msra.mxu0 %v4681
    %4721 = vmatprep.subr.bf16.mxu0 %v4680
    %4722 = vmatpush1.bf16.msra.mxu0 %v4679
    %4723 = vmatprep.subr.bf16.mxu0 %v4678
    %4724 = vmatpush1.bf16.msra.mxu0 %v4677
    %4725 = vmatprep.subr.bf16.mxu0 0
    %4726 = vmatpush2.bf16.msra.mxu0 0
    %4727 = vmatprep.subr.bf16.mxu0 0
    %4728 = vmatpush2.bf16.msra.mxu0 0
    %4729 = vmatprep.subr.bf16.mxu0 0
    %4730 = vmatpush2.bf16.msra.mxu0 0
    %4731 = vmatprep.subr.bf16.mxu0 0
    %4732 = vmatpush2.bf16.msra.mxu0 0
    %4733 = vmatprep.subr.bf16.mxu0 0
    %4734 = vmatpush2.bf16.msra.mxu0 0
    %4735 = vmatprep.subr.bf16.mxu0 0
    %4736 = vmatpush2.bf16.msra.mxu0 0
    %4737 = vmatprep.subr.bf16.mxu0 0
    %4738 = vmatpush2.bf16.msra.mxu0 0
    %4739 = vmatprep.subr.bf16.mxu0 0
    %4740 = vmatpush2.bf16.msra.mxu0 0
    %4741 = vmatprep.mubr.bf16.mxu0 0
    %4742 = vmatmul.mubr.bf16.gmra.mxu0 %v4617
    %v4743 = vpop.f32.mrf.mxu0
    %v4744 = vadd.f32 %v4622, %v4743
    %v4745 = vpop.f32.mrf.mxu0
    %v4746 = vadd.f32 %v4626, %v4745
    %v4747 = vpop.f32.mrf.mxu0
    %v4748 = vpop.f32.mrf.mxu0
    %4749 = vdwg.mxu0
    %4750 = vst [vmem:[#allocation19] sm:$0xff] %v4744
    %4751 = vst [vmem:[#allocation19 + $0x8] sm:$0xff] %v4746
    // Predicated region
    $region126: #{deep_custom_nn_forward.1} parent=1 // pred_check
      _
    $region127: #{deep_custom_nn_forward.1} parent=1 // pred_check_branch
      %4753 = sbr.rel (0) target = $region129
    $region128: #{deep_custom_nn_forward.1} parent=1 // pred_region
      %s4755 = ssub.s32 256, 256
      %4756 = vsyncadd [#allocation4], %s4755
      %s4758 = sshll.u32 [#allocation19], 4
      %s4759 = int_to_ptr.vmem [resolvable:$true] %s4758
      %4761 = dma.vmem_to_hbm [thread:$0]  %s4759, 256, %s21, [#allocation4]
    $region129: #{deep_custom_nn_forward.1} parent=1 // pred_fallthru
      _
    // Predicated region
    $region130: #{deep_custom_nn_forward.1} parent=1 // pred_check
      _
    $region131: #{deep_custom_nn_forward.1} parent=1 // pred_check_branch
      %4763 = sbr.rel (0) target = $region133
    $region132: #{deep_custom_nn_forward.1} parent=1 // pred_region
      %4764 = dma.done [#allocation4], 256
    $region133: #{deep_custom_nn_forward.1} parent=1 // pred_fallthru
      _
    %4765 = vsyncpa [#allocation3], 1
    %4766 = vsyncpa [#allocation6], 1
    %4767 = vsyncpa [#allocation9], 1
    %4768 = vsyncpa [#allocation12], 1
    %4769 = vsyncpa [#allocation15], 1
    %4770 = vsyncpa [#allocation18], 1
    %4771 = vsyncpa [#allocation4], 1

</llo_original>
